<compile_context>
chip_gen: v5e
topology: v5e:2x2
jax: 0.10.0
libtpu: 0.0.40
codegen_flags: <defaults>
</compile_context>

<pallas_src>
import functools
import math

import jax
import jax.numpy as jnp
from jax.experimental import pallas as pl
from jax.experimental.pallas import tpu as pltpu


# ----------------------------------------------------------------------------
# The fused per-batch kernel
# ----------------------------------------------------------------------------
def _fused_attention_kernel(x_ref, txt_ref,
                            w1_ref, b1_ref, g1_ref, bt1_ref,
                            w2_ref, b2_ref, g2_ref, bt2_ref,
                            wrkqv_ref, brkqv_ref, winc_ref, binc_ref,
                            o_ref,
                            *, H, W, ds, visual, ng1, ng2, eps,
                            scale_vid, use_coord):
    f32, bf16 = jnp.float32, jnp.bfloat16
    HW = H * W

    def conv3x3_gn_relu(x_hwc, wcat_ref, b_ref, g_ref, bt_ref, ng):
        """(H, W, Cin) bf16 -> (HW, Cout) f32 : Conv2d(3x3,pad=1)+GroupNorm+ReLU."""
        Cin = x_hwc.shape[-1]
        Cout = wcat_ref.shape[-1]
        # In-kernel zero halo (no jnp.pad HBM pass in the wrapper).
        zc = jnp.zeros((H, 1, Cin), bf16)
        xp = jnp.concatenate([zc, x_hwc, zc], axis=1)              # (H, W+2, Cin)
        zr = jnp.zeros((1, W + 2, Cin), bf16)
        xp = jnp.concatenate([zr, xp, zr], axis=0)                 # (H+2, W+2, Cin)
        # im2col slab in VMEM -> one MXU issue with K = 9*Cin.
        taps = [xp[kh:kh + H, kw:kw + W, :].reshape(HW, Cin)
                for kh in range(3) for kw in range(3)]
        col = jnp.concatenate(taps, axis=-1)                       # (HW, 9*Cin)
        acc = jnp.dot(col, wcat_ref[...],
                      preferred_element_type=f32) + b_ref[...]     # (HW, Cout) f32

        # GroupNorm statistics in f32; no (Cout,Cout) mask matmuls.
        gs = Cout // ng
        inv = 1.0 / float(gs * HW)

        def group_stat(stat):                                      # stat: (1, Cout)
            if gs == 1:                       # degenerate (num_groups == Cout) path
                return stat * inv
            g = jnp.sum(stat.reshape(ng, gs), axis=1, keepdims=True) * inv
            return jnp.broadcast_to(g, (ng, gs)).reshape(1, Cout)

        mean = group_stat(jnp.sum(acc, axis=0, keepdims=True))
        d = acc - mean
        var = group_stat(jnp.sum(d * d, axis=0, keepdims=True))
        y = d * jax.lax.rsqrt(var + eps) * g_ref[...] + bt_ref[...]
        return jnp.maximum(y, 0.0)

    # ---- reduce_video_feat: two fused conv+GN+ReLU, intermediate in VMEM ----
    y1 = conv3x3_gn_relu(x_ref[0], w1_ref, b1_ref, g1_ref, bt1_ref, ng1)
    C1 = y1.shape[-1]
    y2 = conv3x3_gn_relu(y1.astype(bf16).reshape(H, W, C1),
                         w2_ref, b2_ref, g2_ref, bt2_ref, ng2)     # (HW, C2) f32

    # ---- coordinate features generated in-kernel (no extra HBM input) -------
    if use_coord:
        hi = jax.lax.broadcasted_iota(jnp.int32, (H, W, 2), 0).astype(f32)
        wi = jax.lax.broadcasted_iota(jnp.int32, (H, W, 2), 1).astype(f32)
        sel = jax.lax.broadcasted_iota(jnp.int32, (H, W, 2), 2)
        xv = 2.0 * wi / float(max(W - 1, 1)) - 1.0                 # linspace(-1,1,W)[w]
        yv = 2.0 * hi / float(max(H - 1, 1)) - 1.0                 # linspace(-1,1,H)[h]
        coord = jnp.where(sel == 0, xv, yv).reshape(HW, 2)         # channels: x, y
        feat = jnp.concatenate([y2, coord], axis=-1)
    else:
        feat = y2
    feat = feat.astype(bf16)                                       # (HW, visual)

    # ---- fused per-pixel linears: [video_reduce | K | Q | V] -----------------
    proj = jnp.dot(feat, wrkqv_ref[...],
                   preferred_element_type=f32) + brkqv_ref[...]    # (HW, ds+3*visual)
    vsr = proj[:, :ds]                     # 1/sqrt(ds) already folded into weights
    k_l = proj[:, ds:ds + visual]
    q_l = proj[:, ds + visual:ds + 2 * visual]
    v_l = proj[:, ds + 2 * visual:]

    txt_t = txt_ref[0]                                             # (L, ds) bf16

    # ---- text cross-attention: softmax(vsr @ txt / sqrt(ds)) @ txt^T ---------
    s1 = jax.lax.dot_general(vsr.astype(bf16), txt_t,
                             (((1,), (1,)), ((), ())),
                             preferred_element_type=f32)           # (HW, L)
    # exp kept in f32 (v5e-safe); sums/normalization in f32.
    p1 = jnp.exp(s1 - jnp.max(s1, axis=-1, keepdims=True))
    p1 = p1 * pl.reciprocal(jnp.sum(p1, axis=-1, keepdims=True), approx=False)
    w_txt = jnp.dot(p1.astype(bf16), txt_t,
                    preferred_element_type=f32)                    # (HW, ds)

    # ---- txt_rep = txt_increase(MaxPool1d_L(txt)); scales folded into K ------
    pooled = jnp.max(txt_t.astype(f32), axis=0, keepdims=True)     # (1, ds)
    trep = jnp.dot(pooled.astype(bf16), winc_ref[...],
                   preferred_element_type=f32) + binc_ref[...]     # (1, visual)
    trep2 = trep * trep * scale_vid        # (K*t)(Q*t)^T/sqrt(v) == (K*t^2/sqrt(v)) Q^T

    # ---- video self-attention -----------------------------------------------
    key = (k_l * trep2).astype(bf16)
    qry = q_l.astype(bf16)
    s2 = jax.lax.dot_general(key, qry, (((1,), (1,)), ((), ())),
                             preferred_element_type=f32)           # (HW, HW)
    # TODO(synk): for production HW (>~2k pixels) tile this with an online-softmax
    # (flash-style) loop so the (HW,HW) f32 scores never exceed v7x's 64 MiB VMEM.
    p2 = jnp.exp(s2 - jnp.max(s2, axis=-1, keepdims=True))
    p2 = p2 * pl.reciprocal(jnp.sum(p2, axis=-1, keepdims=True), approx=False)
    w_vid = jnp.dot(p2.astype(bf16), v_l.astype(bf16),
                    preferred_element_type=f32)                    # (HW, visual)

    # Single full-block store of the concatenated [weighted_video | weighted_txt].
    # TODO(synk): emit channel-major (C, HW) here to also remove the wrapper
    # transpose once Mosaic's 2-D transpose of the (HW, 66) slab is verified.
    o_ref[0] = jnp.concatenate([w_vid, w_txt], axis=-1).astype(o_ref.dtype)


# ----------------------------------------------------------------------------
# Parameters
# ----------------------------------------------------------------------------
def init_params(key, video_feat_dim, spatial_feat_dim, reduced_video_feat_dim,
                dim_semantic, use_coord_feat=True):
    visual = reduced_video_feat_dim + (2 if use_coord_feat else 0)
    c_in1 = video_feat_dim + spatial_feat_dim
    c1 = video_feat_dim // 2
    c2 = reduced_video_feat_dim
    ks = jax.random.split(key, 16)

    def w(k, shape, scale=0.05):
        return jax.random.normal(k, shape, jnp.float32) * scale

    w_reduce, b_reduce = w(ks[4], (visual, dim_semantic)), w(ks[5], (dim_semantic,))
    wk, bk = w(ks[6], (visual, visual)), w(ks[7], (visual,))
    wq, bq = w(ks[8], (visual, visual)), w(ks[9], (visual,))
    wv, bv = w(ks[10], (visual, visual)), w(ks[11], (visual,))

    # Fold the text-attention scale 1/sqrt(ds) into video_reduce (its output is
    # only ever used inside softmax(vsr @ txt / sqrt(ds))), removing the
    # post-matmul score scaling from the kernel.
    s_txt = 1.0 / math.sqrt(dim_semantic)
    w_reduce = w_reduce * s_txt
    b_reduce = b_reduce * s_txt

    params = {
        # conv weights: (3,3,Cin,Cout) -> tap-major im2col layout (9*Cin, Cout), bf16
        "w1": w(ks[0], (3, 3, c_in1, c1)).reshape(9 * c_in1, c1).astype(jnp.bfloat16),
        "b1": w(ks[1], (c1,)).reshape(1, c1),
        "gn1_g": jnp.ones((1, c1), jnp.float32),
        "gn1_b": jnp.zeros((1, c1), jnp.float32),
        "w2": w(ks[2], (3, 3, c1, c2)).reshape(9 * c1, c2).astype(jnp.bfloat16),
        "b2": w(ks[3], (c2,)).reshape(1, c2),
        "gn2_g": jnp.ones((1, c2), jnp.float32),
        "gn2_b": jnp.zeros((1, c2), jnp.float32),
        # fused per-pixel linears: output lanes = [reduce/sqrt(ds) | K | Q | V]
        "w_rkqv": jnp.concatenate([w_reduce, wk, wq, wv], axis=1).astype(jnp.bfloat16),
        "b_rkqv": jnp.concatenate([b_reduce, bk, bq, bv]).reshape(1, -1).astype(jnp.float32),
        "w_inc": w(ks[12], (dim_semantic, visual)).astype(jnp.bfloat16),
        "b_inc": w(ks[13], (visual,)).reshape(1, visual),
    }
    return params, visual


# ----------------------------------------------------------------------------
# Forward (XLA glue is only the NCHW<->NHWC layout permutes + txt transpose)
# ----------------------------------------------------------------------------
def attention_fusion_forward(params, spatial_feat, video_feat, txt,
                             dim_semantic, visual_feat_dim, use_coord_feat=True):
    # spatial_feat: [B, Cs, H, W], video_feat: [B, Cv, H, W], txt: [B, ds, L=20]
    x = jnp.concatenate([video_feat, spatial_feat], axis=1)            # NCHW concat
    x = jnp.transpose(x, (0, 2, 3, 1)).astype(jnp.bfloat16)            # -> NHWC bf16
    B, H, W, Cin = x.shape
    HW = H * W
    L = txt.shape[-1]
    assert L == 20, "MaxPool1d(kernel_size=20) requires txt length 20"
    txt_t = jnp.transpose(txt, (0, 2, 1)).astype(jnp.bfloat16)         # [B, L, ds]

    ds = dim_semantic
    visual = visual_feat_dim
    C1 = params["b1"].shape[-1]
    C2 = params["b2"].shape[-1]
    M = ds + 3 * visual

    kern = functools.partial(
        _fused_attention_kernel, H=H, W=W, ds=ds, visual=visual,
        ng1=32, ng2=32, eps=1e-5,
        scale_vid=1.0 / math.sqrt(visual), use_coord=use_coord_feat)

    out = pl.pallas_call(
        kern,
        out_shape=jax.ShapeDtypeStruct((B, HW, visual + ds), jnp.float32),
        grid=(B,),
        in_specs=[
            pl.BlockSpec((1, H, W, Cin), lambda i: (i, 0, 0, 0)),      # x (NHWC)
            pl.BlockSpec((1, L, ds), lambda i: (i, 0, 0)),             # txt^T
            pl.BlockSpec((9 * Cin, C1), lambda i: (0, 0)),             # conv1 w
            pl.BlockSpec((1, C1), lambda i: (0, 0)),                   # conv1 b
            pl.BlockSpec((1, C1), lambda i: (0, 0)),                   # gn1 gamma
            pl.BlockSpec((1, C1), lambda i: (0, 0)),                   # gn1 beta
            pl.BlockSpec((9 * C1, C2), lambda i: (0, 0)),              # conv2 w
            pl.BlockSpec((1, C2), lambda i: (0, 0)),                   # conv2 b
            pl.BlockSpec((1, C2), lambda i: (0, 0)),                   # gn2 gamma
            pl.BlockSpec((1, C2), lambda i: (0, 0)),                   # gn2 beta
            pl.BlockSpec((visual, M), lambda i: (0, 0)),               # [reduce|K|Q|V] w
            pl.BlockSpec((1, M), lambda i: (0, 0)),                    # [reduce|K|Q|V] b
            pl.BlockSpec((ds, visual), lambda i: (0, 0)),              # txt_increase w
            pl.BlockSpec((1, visual), lambda i: (0, 0)),               # txt_increase b
        ],
        out_specs=pl.BlockSpec((1, HW, visual + ds), lambda i: (i, 0, 0)),
        compiler_params=pltpu.CompilerParams(dimension_semantics=("parallel",)),
    )(x, txt_t,
      params["w1"], params["b1"], params["gn1_g"], params["gn1_b"],
      params["w2"], params["b2"], params["gn2_g"], params["gn2_b"],
      params["w_rkqv"], params["b_rkqv"], params["w_inc"], params["b_inc"])

    out = out.reshape(B, H, W, visual + ds)
    return jnp.transpose(out, (0, 3, 1, 2))                            # [B, visual+ds, H, W]


# ----------------------------------------------------------------------------
if __name__ == "__main__":
    # Small shapes consistent with the module (GroupNorm(32, .) needs channels % 32 == 0)
    B, H, W = 2, 8, 8
    video_feat_dim = 64          # -> video_feat_dim // 2 = 32
    spatial_feat_dim = 8
    reduced_video_feat_dim = 32
    dim_semantic = 32
    L = 20                       # MaxPool1d(20).squeeze(-1) requires L == 20

    key = jax.random.PRNGKey(0)
    k_sf, k_vf, k_tx, k_par = jax.random.split(key, 4)
    spatial_feat = jax.random.normal(k_sf, (B, spatial_feat_dim, H, W), jnp.float32)
    video_feat = jax.random.normal(k_vf, (B, video_feat_dim, H, W), jnp.float32)
    txt = jax.random.normal(k_tx, (B, dim_semantic, L), jnp.float32)

    params, visual_feat_dim = init_params(
        k_par, video_feat_dim, spatial_feat_dim, reduced_video_feat_dim,
        dim_semantic, use_coord_feat=True)

    out = attention_fusion_forward(params, spatial_feat, video_feat, txt,
                                   dim_semantic, visual_feat_dim,
                                   use_coord_feat=True)
    out = jax.block_until_ready(out)
    assert out.shape == (B, visual_feat_dim + dim_semantic, H, W), out.shape
    assert jnp.all(jnp.isfinite(out))
    print("KERNEL_OK")
</pallas_src>

<mosaic_0001>
module attributes {stable_mosaic.version = 11 : i64} {
  func.func @_fused_attention_kernel(%arg0: i32, %arg1: memref<1x8x8x72xbf16, #tpu.memory_space<vmem>>, %arg2: memref<1x20x32xbf16, #tpu.memory_space<vmem>>, %arg3: memref<648x32xbf16, #tpu.memory_space<vmem>>, %arg4: memref<1x32xf32, #tpu.memory_space<vmem>>, %arg5: memref<1x32xf32, #tpu.memory_space<vmem>>, %arg6: memref<1x32xf32, #tpu.memory_space<vmem>>, %arg7: memref<288x32xbf16, #tpu.memory_space<vmem>>, %arg8: memref<1x32xf32, #tpu.memory_space<vmem>>, %arg9: memref<1x32xf32, #tpu.memory_space<vmem>>, %arg10: memref<1x32xf32, #tpu.memory_space<vmem>>, %arg11: memref<34x134xbf16, #tpu.memory_space<vmem>>, %arg12: memref<1x134xf32, #tpu.memory_space<vmem>>, %arg13: memref<32x34xbf16, #tpu.memory_space<vmem>>, %arg14: memref<1x34xf32, #tpu.memory_space<vmem>>, %arg15: memref<1x64x66xf32, #tpu.memory_space<vmem>>) attributes {dimension_semantics = [#tpu.dimension_semantics<parallel>], iteration_bounds = array<i64: 2>, scalar_prefetch = 0 : i64, scratch_operands = 0 : i64, tpu.core_type = #tpu.core_type<tc>, window_params = [{transform_indices = @transform_0, window_bounds = array<i64: 1, 8, 8, 72>}, {transform_indices = @transform_1, window_bounds = array<i64: 1, 20, 32>}, {pipeline_mode = #tpu.pipeline_mode<synchronous>, transform_indices = @transform_2, window_bounds = array<i64: 648, 32>}, {pipeline_mode = #tpu.pipeline_mode<synchronous>, transform_indices = @transform_3, window_bounds = array<i64: 1, 32>}, {pipeline_mode = #tpu.pipeline_mode<synchronous>, transform_indices = @transform_4, window_bounds = array<i64: 1, 32>}, {pipeline_mode = #tpu.pipeline_mode<synchronous>, transform_indices = @transform_5, window_bounds = array<i64: 1, 32>}, {pipeline_mode = #tpu.pipeline_mode<synchronous>, transform_indices = @transform_6, window_bounds = array<i64: 288, 32>}, {pipeline_mode = #tpu.pipeline_mode<synchronous>, transform_indices = @transform_7, window_bounds = array<i64: 1, 32>}, {pipeline_mode = #tpu.pipeline_mode<synchronous>, transform_indices = @transform_8, window_bounds = array<i64: 1, 32>}, {pipeline_mode = #tpu.pipeline_mode<synchronous>, transform_indices = @transform_9, window_bounds = array<i64: 1, 32>}, {pipeline_mode = #tpu.pipeline_mode<synchronous>, transform_indices = @transform_10, window_bounds = array<i64: 34, 134>}, {pipeline_mode = #tpu.pipeline_mode<synchronous>, transform_indices = @transform_11, window_bounds = array<i64: 1, 134>}, {pipeline_mode = #tpu.pipeline_mode<synchronous>, transform_indices = @transform_12, window_bounds = array<i64: 32, 34>}, {pipeline_mode = #tpu.pipeline_mode<synchronous>, transform_indices = @transform_13, window_bounds = array<i64: 1, 34>}, {transform_indices = @transform_14, window_bounds = array<i64: 1, 64, 66>}]} {
    %c0 = arith.constant 0 : index
    %c0_0 = arith.constant 0 : index
    %c0_1 = arith.constant 0 : index
    %c0_2 = arith.constant 0 : index
    %0 = vector.load %arg1[%c0, %c0_0, %c0_1, %c0_2] : memref<1x8x8x72xbf16, #tpu.memory_space<vmem>>, vector<1x8x8x72xbf16>
    %1 = vector.shape_cast %0 : vector<1x8x8x72xbf16> to vector<8x8x72xbf16>
    %cst = arith.constant 0.000000e+00 : bf16
    %2 = vector.broadcast %cst : bf16 to vector<8x1x72xbf16>
    %3 = tpu.concatenate %2, %1, %2 in 1 : vector<8x1x72xbf16>, vector<8x8x72xbf16>, vector<8x1x72xbf16> -> vector<8x10x72xbf16>
    %cst_3 = arith.constant 0.000000e+00 : bf16
    %4 = vector.broadcast %cst_3 : bf16 to vector<1x10x72xbf16>
    %5 = tpu.concatenate %4, %3, %4 in 0 : vector<1x10x72xbf16>, vector<8x10x72xbf16>, vector<1x10x72xbf16> -> vector<10x10x72xbf16>
    %6 = vector.extract_strided_slice %5 {offsets = [0, 0, 0], sizes = [8, 8, 72], strides = [1, 1, 1]} : vector<10x10x72xbf16> to vector<8x8x72xbf16>
    %7 = vector.shape_cast %6 : vector<8x8x72xbf16> to vector<64x72xbf16>
    %8 = vector.extract_strided_slice %5 {offsets = [0, 1, 0], sizes = [8, 8, 72], strides = [1, 1, 1]} : vector<10x10x72xbf16> to vector<8x8x72xbf16>
    %9 = vector.shape_cast %8 : vector<8x8x72xbf16> to vector<64x72xbf16>
    %10 = vector.extract_strided_slice %5 {offsets = [0, 2, 0], sizes = [8, 8, 72], strides = [1, 1, 1]} : vector<10x10x72xbf16> to vector<8x8x72xbf16>
    %11 = vector.shape_cast %10 : vector<8x8x72xbf16> to vector<64x72xbf16>
    %12 = vector.extract_strided_slice %5 {offsets = [1, 0, 0], sizes = [8, 8, 72], strides = [1, 1, 1]} : vector<10x10x72xbf16> to vector<8x8x72xbf16>
    %13 = vector.shape_cast %12 : vector<8x8x72xbf16> to vector<64x72xbf16>
    %14 = vector.extract_strided_slice %5 {offsets = [1, 1, 0], sizes = [8, 8, 72], strides = [1, 1, 1]} : vector<10x10x72xbf16> to vector<8x8x72xbf16>
    %15 = vector.shape_cast %14 : vector<8x8x72xbf16> to vector<64x72xbf16>
    %16 = vector.extract_strided_slice %5 {offsets = [1, 2, 0], sizes = [8, 8, 72], strides = [1, 1, 1]} : vector<10x10x72xbf16> to vector<8x8x72xbf16>
    %17 = vector.shape_cast %16 : vector<8x8x72xbf16> to vector<64x72xbf16>
    %18 = vector.extract_strided_slice %5 {offsets = [2, 0, 0], sizes = [8, 8, 72], strides = [1, 1, 1]} : vector<10x10x72xbf16> to vector<8x8x72xbf16>
    %19 = vector.shape_cast %18 : vector<8x8x72xbf16> to vector<64x72xbf16>
    %20 = vector.extract_strided_slice %5 {offsets = [2, 1, 0], sizes = [8, 8, 72], strides = [1, 1, 1]} : vector<10x10x72xbf16> to vector<8x8x72xbf16>
    %21 = vector.shape_cast %20 : vector<8x8x72xbf16> to vector<64x72xbf16>
    %22 = vector.extract_strided_slice %5 {offsets = [2, 2, 0], sizes = [8, 8, 72], strides = [1, 1, 1]} : vector<10x10x72xbf16> to vector<8x8x72xbf16>
    %23 = vector.shape_cast %22 : vector<8x8x72xbf16> to vector<64x72xbf16>
    %24 = tpu.concatenate %7, %9, %11, %13, %15, %17, %19, %21, %23 in 1 : vector<64x72xbf16>, vector<64x72xbf16>, vector<64x72xbf16>, vector<64x72xbf16>, vector<64x72xbf16>, vector<64x72xbf16>, vector<64x72xbf16>, vector<64x72xbf16>, vector<64x72xbf16> -> vector<64x648xbf16>
    %c0_4 = arith.constant 0 : index
    %c0_5 = arith.constant 0 : index
    %25 = vector.load %arg3[%c0_4, %c0_5] : memref<648x32xbf16, #tpu.memory_space<vmem>>, vector<648x32xbf16>
    %cst_6 = arith.constant dense<0.000000e+00> : vector<64x32xf32>
    %26 = tpu.matmul %24, %25, %cst_6 {dimension_numbers = #tpu.dot_dimension_numbers<[1], [0], [0], [1], [0, 0, 1, 1], [], []>} : vector<64x648xbf16>, vector<648x32xbf16>, vector<64x32xf32> -> vector<64x32xf32>
    %c0_7 = arith.constant 0 : index
    %c0_8 = arith.constant 0 : index
    %27 = vector.load %arg4[%c0_7, %c0_8] : memref<1x32xf32, #tpu.memory_space<vmem>>, vector<1x32xf32>
    %28 = vector.broadcast %27 : vector<1x32xf32> to vector<64x32xf32>
    %29 = arith.addf %26, %28 : vector<64x32xf32>
    %cst_9 = arith.constant dense<0.000000e+00> : vector<32xf32>
    %30 = vector.multi_reduction <add>, %29, %cst_9 [0] : vector<64x32xf32> to vector<32xf32>
    %31 = vector.shape_cast %30 : vector<32xf32> to vector<1x32xf32>
    %cst_10 = arith.constant 1.562500e-02 : f32
    %32 = vector.broadcast %cst_10 : f32 to vector<1x32xf32>
    %33 = arith.mulf %31, %32 : vector<1x32xf32>
    %34 = vector.broadcast %33 : vector<1x32xf32> to vector<64x32xf32>
    %35 = arith.subf %29, %34 : vector<64x32xf32>
    %36 = arith.mulf %35, %35 : vector<64x32xf32>
    %cst_11 = arith.constant dense<0.000000e+00> : vector<32xf32>
    %37 = vector.multi_reduction <add>, %36, %cst_11 [0] : vector<64x32xf32> to vector<32xf32>
    %38 = vector.shape_cast %37 : vector<32xf32> to vector<1x32xf32>
    %cst_12 = arith.constant 1.562500e-02 : f32
    %39 = vector.broadcast %cst_12 : f32 to vector<1x32xf32>
    %40 = arith.mulf %38, %39 : vector<1x32xf32>
    %cst_13 = arith.constant 9.99999974E-6 : f32
    %41 = vector.broadcast %cst_13 : f32 to vector<1x32xf32>
    %42 = arith.addf %40, %41 : vector<1x32xf32>
    %43 = math.rsqrt %42 : vector<1x32xf32>
    %44 = vector.broadcast %43 : vector<1x32xf32> to vector<64x32xf32>
    %45 = arith.mulf %35, %44 : vector<64x32xf32>
    %c0_14 = arith.constant 0 : index
    %c0_15 = arith.constant 0 : index
    %46 = vector.load %arg5[%c0_14, %c0_15] : memref<1x32xf32, #tpu.memory_space<vmem>>, vector<1x32xf32>
    %47 = vector.broadcast %46 : vector<1x32xf32> to vector<64x32xf32>
    %48 = arith.mulf %45, %47 : vector<64x32xf32>
    %c0_16 = arith.constant 0 : index
    %c0_17 = arith.constant 0 : index
    %49 = vector.load %arg6[%c0_16, %c0_17] : memref<1x32xf32, #tpu.memory_space<vmem>>, vector<1x32xf32>
    %50 = vector.broadcast %49 : vector<1x32xf32> to vector<64x32xf32>
    %51 = arith.addf %48, %50 : vector<64x32xf32>
    %cst_18 = arith.constant 0.000000e+00 : f32
    %52 = vector.broadcast %cst_18 : f32 to vector<64x32xf32>
    %53 = arith.maximumf %51, %52 : vector<64x32xf32>
    %54 = arith.truncf %53 : vector<64x32xf32> to vector<64x32xbf16>
    %55 = vector.shape_cast %54 : vector<64x32xbf16> to vector<8x8x32xbf16>
    %cst_19 = arith.constant 0.000000e+00 : bf16
    %56 = vector.broadcast %cst_19 : bf16 to vector<8x1x32xbf16>
    %57 = tpu.concatenate %56, %55, %56 in 1 : vector<8x1x32xbf16>, vector<8x8x32xbf16>, vector<8x1x32xbf16> -> vector<8x10x32xbf16>
    %cst_20 = arith.constant 0.000000e+00 : bf16
    %58 = vector.broadcast %cst_20 : bf16 to vector<1x10x32xbf16>
    %59 = tpu.concatenate %58, %57, %58 in 0 : vector<1x10x32xbf16>, vector<8x10x32xbf16>, vector<1x10x32xbf16> -> vector<10x10x32xbf16>
    %60 = vector.extract_strided_slice %59 {offsets = [0, 0, 0], sizes = [8, 8, 32], strides = [1, 1, 1]} : vector<10x10x32xbf16> to vector<8x8x32xbf16>
    %61 = vector.shape_cast %60 : vector<8x8x32xbf16> to vector<64x32xbf16>
    %62 = vector.extract_strided_slice %59 {offsets = [0, 1, 0], sizes = [8, 8, 32], strides = [1, 1, 1]} : vector<10x10x32xbf16> to vector<8x8x32xbf16>
    %63 = vector.shape_cast %62 : vector<8x8x32xbf16> to vector<64x32xbf16>
    %64 = vector.extract_strided_slice %59 {offsets = [0, 2, 0], sizes = [8, 8, 32], strides = [1, 1, 1]} : vector<10x10x32xbf16> to vector<8x8x32xbf16>
    %65 = vector.shape_cast %64 : vector<8x8x32xbf16> to vector<64x32xbf16>
    %66 = vector.extract_strided_slice %59 {offsets = [1, 0, 0], sizes = [8, 8, 32], strides = [1, 1, 1]} : vector<10x10x32xbf16> to vector<8x8x32xbf16>
    %67 = vector.shape_cast %66 : vector<8x8x32xbf16> to vector<64x32xbf16>
    %68 = vector.extract_strided_slice %59 {offsets = [1, 1, 0], sizes = [8, 8, 32], strides = [1, 1, 1]} : vector<10x10x32xbf16> to vector<8x8x32xbf16>
    %69 = vector.shape_cast %68 : vector<8x8x32xbf16> to vector<64x32xbf16>
    %70 = vector.extract_strided_slice %59 {offsets = [1, 2, 0], sizes = [8, 8, 32], strides = [1, 1, 1]} : vector<10x10x32xbf16> to vector<8x8x32xbf16>
    %71 = vector.shape_cast %70 : vector<8x8x32xbf16> to vector<64x32xbf16>
    %72 = vector.extract_strided_slice %59 {offsets = [2, 0, 0], sizes = [8, 8, 32], strides = [1, 1, 1]} : vector<10x10x32xbf16> to vector<8x8x32xbf16>
    %73 = vector.shape_cast %72 : vector<8x8x32xbf16> to vector<64x32xbf16>
    %74 = vector.extract_strided_slice %59 {offsets = [2, 1, 0], sizes = [8, 8, 32], strides = [1, 1, 1]} : vector<10x10x32xbf16> to vector<8x8x32xbf16>
    %75 = vector.shape_cast %74 : vector<8x8x32xbf16> to vector<64x32xbf16>
    %76 = vector.extract_strided_slice %59 {offsets = [2, 2, 0], sizes = [8, 8, 32], strides = [1, 1, 1]} : vector<10x10x32xbf16> to vector<8x8x32xbf16>
    %77 = vector.shape_cast %76 : vector<8x8x32xbf16> to vector<64x32xbf16>
    %78 = tpu.concatenate %61, %63, %65, %67, %69, %71, %73, %75, %77 in 1 : vector<64x32xbf16>, vector<64x32xbf16>, vector<64x32xbf16>, vector<64x32xbf16>, vector<64x32xbf16>, vector<64x32xbf16>, vector<64x32xbf16>, vector<64x32xbf16>, vector<64x32xbf16> -> vector<64x288xbf16>
    %c0_21 = arith.constant 0 : index
    %c0_22 = arith.constant 0 : index
    %79 = vector.load %arg7[%c0_21, %c0_22] : memref<288x32xbf16, #tpu.memory_space<vmem>>, vector<288x32xbf16>
    %cst_23 = arith.constant dense<0.000000e+00> : vector<64x32xf32>
    %80 = tpu.matmul %78, %79, %cst_23 {dimension_numbers = #tpu.dot_dimension_numbers<[1], [0], [0], [1], [0, 0, 1, 1], [], []>} : vector<64x288xbf16>, vector<288x32xbf16>, vector<64x32xf32> -> vector<64x32xf32>
    %c0_24 = arith.constant 0 : index
    %c0_25 = arith.constant 0 : index
    %81 = vector.load %arg8[%c0_24, %c0_25] : memref<1x32xf32, #tpu.memory_space<vmem>>, vector<1x32xf32>
    %82 = vector.broadcast %81 : vector<1x32xf32> to vector<64x32xf32>
    %83 = arith.addf %80, %82 : vector<64x32xf32>
    %cst_26 = arith.constant dense<0.000000e+00> : vector<32xf32>
    %84 = vector.multi_reduction <add>, %83, %cst_26 [0] : vector<64x32xf32> to vector<32xf32>
    %85 = vector.shape_cast %84 : vector<32xf32> to vector<1x32xf32>
    %cst_27 = arith.constant 1.562500e-02 : f32
    %86 = vector.broadcast %cst_27 : f32 to vector<1x32xf32>
    %87 = arith.mulf %85, %86 : vector<1x32xf32>
    %88 = vector.broadcast %87 : vector<1x32xf32> to vector<64x32xf32>
    %89 = arith.subf %83, %88 : vector<64x32xf32>
    %90 = arith.mulf %89, %89 : vector<64x32xf32>
    %cst_28 = arith.constant dense<0.000000e+00> : vector<32xf32>
    %91 = vector.multi_reduction <add>, %90, %cst_28 [0] : vector<64x32xf32> to vector<32xf32>
    %92 = vector.shape_cast %91 : vector<32xf32> to vector<1x32xf32>
    %cst_29 = arith.constant 1.562500e-02 : f32
    %93 = vector.broadcast %cst_29 : f32 to vector<1x32xf32>
    %94 = arith.mulf %92, %93 : vector<1x32xf32>
    %cst_30 = arith.constant 9.99999974E-6 : f32
    %95 = vector.broadcast %cst_30 : f32 to vector<1x32xf32>
    %96 = arith.addf %94, %95 : vector<1x32xf32>
    %97 = math.rsqrt %96 : vector<1x32xf32>
    %98 = vector.broadcast %97 : vector<1x32xf32> to vector<64x32xf32>
    %99 = arith.mulf %89, %98 : vector<64x32xf32>
    %c0_31 = arith.constant 0 : index
    %c0_32 = arith.constant 0 : index
    %100 = vector.load %arg9[%c0_31, %c0_32] : memref<1x32xf32, #tpu.memory_space<vmem>>, vector<1x32xf32>
    %101 = vector.broadcast %100 : vector<1x32xf32> to vector<64x32xf32>
    %102 = arith.mulf %99, %101 : vector<64x32xf32>
    %c0_33 = arith.constant 0 : index
    %c0_34 = arith.constant 0 : index
    %103 = vector.load %arg10[%c0_33, %c0_34] : memref<1x32xf32, #tpu.memory_space<vmem>>, vector<1x32xf32>
    %104 = vector.broadcast %103 : vector<1x32xf32> to vector<64x32xf32>
    %105 = arith.addf %102, %104 : vector<64x32xf32>
    %cst_35 = arith.constant 0.000000e+00 : f32
    %106 = vector.broadcast %cst_35 : f32 to vector<64x32xf32>
    %107 = arith.maximumf %105, %106 : vector<64x32xf32>
    %108 = tpu.iota {dimensions = array<i32: 0>} : vector<8x8x2xi32>
    %109 = arith.sitofp %108 : vector<8x8x2xi32> to vector<8x8x2xf32>
    %110 = tpu.iota {dimensions = array<i32: 1>} : vector<8x8x2xi32>
    %111 = arith.sitofp %110 : vector<8x8x2xi32> to vector<8x8x2xf32>
    %112 = tpu.iota {dimensions = array<i32: 2>} : vector<8x8x2xi32>
    %cst_36 = arith.constant 2.000000e+00 : f32
    %113 = vector.broadcast %cst_36 : f32 to vector<8x8x2xf32>
    %114 = arith.mulf %113, %111 : vector<8x8x2xf32>
    %cst_37 = arith.constant 7.000000e+00 : f32
    %115 = vector.broadcast %cst_37 : f32 to vector<8x8x2xf32>
    %116 = arith.divf %114, %115 : vector<8x8x2xf32>
    %cst_38 = arith.constant 1.000000e+00 : f32
    %117 = vector.broadcast %cst_38 : f32 to vector<8x8x2xf32>
    %118 = arith.subf %116, %117 : vector<8x8x2xf32>
    %cst_39 = arith.constant 2.000000e+00 : f32
    %119 = vector.broadcast %cst_39 : f32 to vector<8x8x2xf32>
    %120 = arith.mulf %119, %109 : vector<8x8x2xf32>
    %cst_40 = arith.constant 7.000000e+00 : f32
    %121 = vector.broadcast %cst_40 : f32 to vector<8x8x2xf32>
    %122 = arith.divf %120, %121 : vector<8x8x2xf32>
    %cst_41 = arith.constant 1.000000e+00 : f32
    %123 = vector.broadcast %cst_41 : f32 to vector<8x8x2xf32>
    %124 = arith.subf %122, %123 : vector<8x8x2xf32>
    %c0_i32 = arith.constant 0 : i32
    %125 = vector.broadcast %c0_i32 : i32 to vector<8x8x2xi32>
    %126 = arith.cmpi eq, %112, %125 : vector<8x8x2xi32>
    %127 = arith.select %126, %118, %124 : vector<8x8x2xi1>, vector<8x8x2xf32>
    %128 = vector.shape_cast %127 : vector<8x8x2xf32> to vector<64x2xf32>
    %129 = tpu.concatenate %107, %128 in 1 : vector<64x32xf32>, vector<64x2xf32> -> vector<64x34xf32>
    %130 = arith.truncf %129 : vector<64x34xf32> to vector<64x34xbf16>
    %c0_42 = arith.constant 0 : index
    %c0_43 = arith.constant 0 : index
    %131 = vector.load %arg11[%c0_42, %c0_43] : memref<34x134xbf16, #tpu.memory_space<vmem>>, vector<34x134xbf16>
    %cst_44 = arith.constant dense<0.000000e+00> : vector<64x134xf32>
    %132 = tpu.matmul %130, %131, %cst_44 {dimension_numbers = #tpu.dot_dimension_numbers<[1], [0], [0], [1], [0, 0, 1, 1], [], []>} : vector<64x34xbf16>, vector<34x134xbf16>, vector<64x134xf32> -> vector<64x134xf32>
    %c0_45 = arith.constant 0 : index
    %c0_46 = arith.constant 0 : index
    %133 = vector.load %arg12[%c0_45, %c0_46] : memref<1x134xf32, #tpu.memory_space<vmem>>, vector<1x134xf32>
    %134 = vector.broadcast %133 : vector<1x134xf32> to vector<64x134xf32>
    %135 = arith.addf %132, %134 : vector<64x134xf32>
    %136 = vector.extract_strided_slice %135 {offsets = [0, 0], sizes = [64, 32], strides = [1, 1]} : vector<64x134xf32> to vector<64x32xf32>
    %137 = vector.extract_strided_slice %135 {offsets = [0, 32], sizes = [64, 34], strides = [1, 1]} : vector<64x134xf32> to vector<64x34xf32>
    %138 = vector.extract_strided_slice %135 {offsets = [0, 66], sizes = [64, 34], strides = [1, 1]} : vector<64x134xf32> to vector<64x34xf32>
    %139 = vector.extract_strided_slice %135 {offsets = [0, 100], sizes = [64, 34], strides = [1, 1]} : vector<64x134xf32> to vector<64x34xf32>
    %c0_47 = arith.constant 0 : index
    %c0_48 = arith.constant 0 : index
    %c0_49 = arith.constant 0 : index
    %140 = vector.load %arg2[%c0_47, %c0_48, %c0_49] : memref<1x20x32xbf16, #tpu.memory_space<vmem>>, vector<1x20x32xbf16>
    %141 = vector.shape_cast %140 : vector<1x20x32xbf16> to vector<20x32xbf16>
    %142 = arith.truncf %136 : vector<64x32xf32> to vector<64x32xbf16>
    %cst_50 = arith.constant dense<0.000000e+00> : vector<64x20xf32>
    %143 = tpu.matmul %142, %141, %cst_50 {dimension_numbers = #tpu.dot_dimension_numbers<[1], [1], [0], [0], [0, 0, 1, 0], [], []>} : vector<64x32xbf16>, vector<20x32xbf16>, vector<64x20xf32> -> vector<64x20xf32>
    %cst_51 = arith.constant dense<0xFF800000> : vector<64xf32>
    %144 = vector.multi_reduction <maximumf>, %143, %cst_51 [1] : vector<64x20xf32> to vector<64xf32>
    %145 = vector.shape_cast %144 : vector<64xf32> to vector<64x1xf32>
    %146 = vector.broadcast %145 : vector<64x1xf32> to vector<64x20xf32>
    %147 = arith.subf %143, %146 : vector<64x20xf32>
    %148 = math.exp %147 : vector<64x20xf32>
    %cst_52 = arith.constant dense<0.000000e+00> : vector<64xf32>
    %149 = vector.multi_reduction <add>, %148, %cst_52 [1] : vector<64x20xf32> to vector<64xf32>
    %150 = vector.shape_cast %149 : vector<64xf32> to vector<64x1xf32>
    %151 = tpu.reciprocal %150 : vector<64x1xf32> -> vector<64x1xf32>
    %152 = vector.broadcast %151 : vector<64x1xf32> to vector<64x20xf32>
    %153 = arith.mulf %148, %152 : vector<64x20xf32>
    %154 = arith.truncf %153 : vector<64x20xf32> to vector<64x20xbf16>
    %cst_53 = arith.constant dense<0.000000e+00> : vector<64x32xf32>
    %155 = tpu.matmul %154, %141, %cst_53 {dimension_numbers = #tpu.dot_dimension_numbers<[1], [0], [0], [1], [0, 0, 1, 1], [], []>} : vector<64x20xbf16>, vector<20x32xbf16>, vector<64x32xf32> -> vector<64x32xf32>
    %156 = arith.extf %141 : vector<20x32xbf16> to vector<20x32xf32>
    %cst_54 = arith.constant dense<0xFF800000> : vector<32xf32>
    %157 = vector.multi_reduction <maximumf>, %156, %cst_54 [0] : vector<20x32xf32> to vector<32xf32>
    %158 = vector.shape_cast %157 : vector<32xf32> to vector<1x32xf32>
    %159 = arith.truncf %158 : vector<1x32xf32> to vector<1x32xbf16>
    %c0_55 = arith.constant 0 : index
    %c0_56 = arith.constant 0 : index
    %160 = vector.load %arg13[%c0_55, %c0_56] : memref<32x34xbf16, #tpu.memory_space<vmem>>, vector<32x34xbf16>
    %cst_57 = arith.constant dense<0.000000e+00> : vector<1x34xf32>
    %161 = tpu.matmul %159, %160, %cst_57 {dimension_numbers = #tpu.dot_dimension_numbers<[1], [0], [0], [1], [0, 0, 1, 1], [], []>} : vector<1x32xbf16>, vector<32x34xbf16>, vector<1x34xf32> -> vector<1x34xf32>
    %c0_58 = arith.constant 0 : index
    %c0_59 = arith.constant 0 : index
    %162 = vector.load %arg14[%c0_58, %c0_59] : memref<1x34xf32, #tpu.memory_space<vmem>>, vector<1x34xf32>
    %163 = arith.addf %161, %162 : vector<1x34xf32>
    %164 = arith.mulf %163, %163 : vector<1x34xf32>
    %cst_60 = arith.constant 0.171498582 : f32
    %165 = vector.broadcast %cst_60 : f32 to vector<1x34xf32>
    %166 = arith.mulf %164, %165 : vector<1x34xf32>
    %167 = vector.broadcast %166 : vector<1x34xf32> to vector<64x34xf32>
    %168 = arith.mulf %137, %167 : vector<64x34xf32>
    %169 = arith.truncf %168 : vector<64x34xf32> to vector<64x34xbf16>
    %170 = arith.truncf %138 : vector<64x34xf32> to vector<64x34xbf16>
    %cst_61 = arith.constant dense<0.000000e+00> : vector<64x64xf32>
    %171 = tpu.matmul %169, %170, %cst_61 {dimension_numbers = #tpu.dot_dimension_numbers<[1], [1], [0], [0], [0, 0, 1, 0], [], []>} : vector<64x34xbf16>, vector<64x34xbf16>, vector<64x64xf32> -> vector<64x64xf32>
    %cst_62 = arith.constant dense<0xFF800000> : vector<64xf32>
    %172 = vector.multi_reduction <maximumf>, %171, %cst_62 [1] : vector<64x64xf32> to vector<64xf32>
    %173 = vector.shape_cast %172 : vector<64xf32> to vector<64x1xf32>
    %174 = vector.broadcast %173 : vector<64x1xf32> to vector<64x64xf32>
    %175 = arith.subf %171, %174 : vector<64x64xf32>
    %176 = math.exp %175 : vector<64x64xf32>
    %cst_63 = arith.constant dense<0.000000e+00> : vector<64xf32>
    %177 = vector.multi_reduction <add>, %176, %cst_63 [1] : vector<64x64xf32> to vector<64xf32>
    %178 = vector.shape_cast %177 : vector<64xf32> to vector<64x1xf32>
    %179 = tpu.reciprocal %178 : vector<64x1xf32> -> vector<64x1xf32>
    %180 = vector.broadcast %179 : vector<64x1xf32> to vector<64x64xf32>
    %181 = arith.mulf %176, %180 : vector<64x64xf32>
    %182 = arith.truncf %181 : vector<64x64xf32> to vector<64x64xbf16>
    %183 = arith.truncf %139 : vector<64x34xf32> to vector<64x34xbf16>
    %cst_64 = arith.constant dense<0.000000e+00> : vector<64x34xf32>
    %184 = tpu.matmul %182, %183, %cst_64 {dimension_numbers = #tpu.dot_dimension_numbers<[1], [0], [0], [1], [0, 0, 1, 1], [], []>} : vector<64x64xbf16>, vector<64x34xbf16>, vector<64x34xf32> -> vector<64x34xf32>
    %185 = tpu.concatenate %184, %155 in 1 : vector<64x34xf32>, vector<64x32xf32> -> vector<64x66xf32>
    %c0_65 = arith.constant 0 : index
    %c0_66 = arith.constant 0 : index
    %c0_67 = arith.constant 0 : index
    %186 = vector.load %arg15[%c0_65, %c0_66, %c0_67] : memref<1x64x66xf32, #tpu.memory_space<vmem>>, vector<1x64x66xf32>
    %187 = vector.shape_cast %186 : vector<1x64x66xf32> to vector<64x66xf32>
    %188 = vector.shape_cast %185 : vector<64x66xf32> to vector<1x64x66xf32>
    tpu.vector_store %arg15[%c0_65, %c0_66, %c0_67], %188 {strides = array<i32>} : memref<1x64x66xf32, #tpu.memory_space<vmem>>, vector<1x64x66xf32>,
    return
  }
  func.func @transform_0(%arg0: i32) -> (i32, i32, i32, i32) {
    %c0_i32 = arith.constant 0 : i32
    %c0_i32_0 = arith.constant 0 : i32
    %c0_i32_1 = arith.constant 0 : i32
    %c0_i32_2 = arith.constant 0 : i32
    return %arg0, %c0_i32, %c0_i32_0, %c0_i32_1 : i32, i32, i32, i32
  }
  func.func @transform_1(%arg0: i32) -> (i32, i32, i32) {
    %c0_i32 = arith.constant 0 : i32
    %c0_i32_0 = arith.constant 0 : i32
    %c0_i32_1 = arith.constant 0 : i32
    return %arg0, %c0_i32, %c0_i32_0 : i32, i32, i32
  }
  func.func @transform_2(%arg0: i32) -> (i32, i32) {
    %c0_i32 = arith.constant 0 : i32
    %c0_i32_0 = arith.constant 0 : i32
    %c0_i32_1 = arith.constant 0 : i32
    return %c0_i32, %c0_i32_0 : i32, i32
  }
  func.func @transform_3(%arg0: i32) -> (i32, i32) {
    %c0_i32 = arith.constant 0 : i32
    %c0_i32_0 = arith.constant 0 : i32
    %c0_i32_1 = arith.constant 0 : i32
    return %c0_i32, %c0_i32_0 : i32, i32
  }
  func.func @transform_4(%arg0: i32) -> (i32, i32) {
    %c0_i32 = arith.constant 0 : i32
    %c0_i32_0 = arith.constant 0 : i32
    %c0_i32_1 = arith.constant 0 : i32
    return %c0_i32, %c0_i32_0 : i32, i32
  }
  func.func @transform_5(%arg0: i32) -> (i32, i32) {
    %c0_i32 = arith.constant 0 : i32
    %c0_i32_0 = arith.constant 0 : i32
    %c0_i32_1 = arith.constant 0 : i32
    return %c0_i32, %c0_i32_0 : i32, i32
  }
  func.func @transform_6(%arg0: i32) -> (i32, i32) {
    %c0_i32 = arith.constant 0 : i32
    %c0_i32_0 = arith.constant 0 : i32
    %c0_i32_1 = arith.constant 0 : i32
    return %c0_i32, %c0_i32_0 : i32, i32
  }
  func.func @transform_7(%arg0: i32) -> (i32, i32) {
    %c0_i32 = arith.constant 0 : i32
    %c0_i32_0 = arith.constant 0 : i32
    %c0_i32_1 = arith.constant 0 : i32
    return %c0_i32, %c0_i32_0 : i32, i32
  }
  func.func @transform_8(%arg0: i32) -> (i32, i32) {
    %c0_i32 = arith.constant 0 : i32
    %c0_i32_0 = arith.constant 0 : i32
    %c0_i32_1 = arith.constant 0 : i32
    return %c0_i32, %c0_i32_0 : i32, i32
  }
  func.func @transform_9(%arg0: i32) -> (i32, i32) {
    %c0_i32 = arith.constant 0 : i32
    %c0_i32_0 = arith.constant 0 : i32
    %c0_i32_1 = arith.constant 0 : i32
    return %c0_i32, %c0_i32_0 : i32, i32
  }
  func.func @transform_10(%arg0: i32) -> (i32, i32) {
    %c0_i32 = arith.constant 0 : i32
    %c0_i32_0 = arith.constant 0 : i32
    %c0_i32_1 = arith.constant 0 : i32
    return %c0_i32, %c0_i32_0 : i32, i32
  }
  func.func @transform_11(%arg0: i32) -> (i32, i32) {
    %c0_i32 = arith.constant 0 : i32
    %c0_i32_0 = arith.constant 0 : i32
    %c0_i32_1 = arith.constant 0 : i32
    return %c0_i32, %c0_i32_0 : i32, i32
  }
  func.func @transform_12(%arg0: i32) -> (i32, i32) {
    %c0_i32 = arith.constant 0 : i32
    %c0_i32_0 = arith.constant 0 : i32
    %c0_i32_1 = arith.constant 0 : i32
    return %c0_i32, %c0_i32_0 : i32, i32
  }
  func.func @transform_13(%arg0: i32) -> (i32, i32) {
    %c0_i32 = arith.constant 0 : i32
    %c0_i32_0 = arith.constant 0 : i32
    %c0_i32_1 = arith.constant 0 : i32
    return %c0_i32, %c0_i32_0 : i32, i32
  }
  func.func @transform_14(%arg0: i32) -> (i32, i32, i32) {
    %c0_i32 = arith.constant 0 : i32
    %c0_i32_0 = arith.constant 0 : i32
    %c0_i32_1 = arith.constant 0 : i32
    return %arg0, %c0_i32, %c0_i32_0 : i32, i32, i32
  }
}

</mosaic_0001>

<llo_original>
// kernel: tpu_custom_call.1
$region0: #{tpu_custom_call.1}
  #allocation0 [shape = 'u32[]', space=smem, size = 0x4, offset = 0x4, fixed_abs, tag = 'smem constant byte address 0x4 - core index']
  #allocation1 [shape = 'u32[72,128]{1,0:T(1,128)}', space=vmem, size = 0x9000, scoped, tag = 'internal scratch']
  %s0 = inlined_call_operand.vmem [shape: bf16[2,8,8,72], index: 0, kind: input, shape index: {}]
  %s1 = inlined_call_operand.vmem [shape: bf16[2,20,32], index: 1, kind: input, shape index: {}]
  %s2 = inlined_call_operand.vmem [shape: bf16[648,32], index: 2, kind: input, shape index: {}]
  %s3 = inlined_call_operand.vmem [shape: f32[1,32], index: 3, kind: input, shape index: {}]
  %s4 = inlined_call_operand.vmem [shape: f32[1,32], index: 4, kind: input, shape index: {}]
  %s5 = inlined_call_operand.vmem [shape: f32[1,32], index: 5, kind: input, shape index: {}]
  %s6 = inlined_call_operand.vmem [shape: bf16[288,32], index: 6, kind: input, shape index: {}]
  %s7 = inlined_call_operand.vmem [shape: f32[1,32], index: 7, kind: input, shape index: {}]
  %s8 = inlined_call_operand.vmem [shape: f32[1,32], index: 8, kind: input, shape index: {}]
  %s9 = inlined_call_operand.vmem [shape: f32[1,32], index: 9, kind: input, shape index: {}]
  %s10 = inlined_call_operand.vmem [shape: bf16[34,134], index: 10, kind: input, shape index: {}]
  %s11 = inlined_call_operand.vmem [shape: f32[1,134], index: 11, kind: input, shape index: {}]
  %s12 = inlined_call_operand.vmem [shape: bf16[32,34], index: 12, kind: input, shape index: {}]
  %s13 = inlined_call_operand.vmem [shape: f32[1,34], index: 13, kind: input, shape index: {}]
  %s14 = inlined_call_operand.hbm [shape: f32[2,64,66], index: 14, kind: output, shape index: {}]
  %s15 = sld [smem:[#allocation0]]
  $region89: #{tpu_custom_call.1} parent=0
    _
  %s17 = ssub.s32 1, %s15
  %s18 = scalar_select 0, %s17, %s15
  $region1: #{tpu_custom_call.1} parent=0
    #allocation2 [shape = 'u8[65536]{0}', space=vmem, size = 0x10000, scoped, tag = 'output window, operand 0']
    #allocation3 [shape = 's32[2]{0}', space=sflag, size = 0x8, scoped, tag = 'scoped memory for tpu_custom_call.1']
    %19 = vsyncpa [#allocation3], 0
    %s20 = scalar_lea.sflag [#allocation3], 1
    %21 = vsyncpa %s20, 0
    loop: start=0, step=1, limit=4
    $region2: #{tpu_custom_call.1} parent=1 // loop_pre_header
      _
    $region3: #{tpu_custom_call.1} parent=1 // loop_header
      %s23 = sphi 0, %s27
      %p24 = scmp.ge.s32.totalorder %s23, 4
      %s33 = sphi 0, %s35
      %s36 = sphi 0, %s33
      %s37 = sphi 0, %s36
      %s53 = sphi 0, %s37
      %s59 = sphi 0, %s61
      %s62 = sphi 0, %s59
      %s63 = sphi 0, %s62
      %s79 = sphi 0, %s63
      %s83 = sphi 0, %s83
      %s85 = sphi 0, %s83
      %s86 = sphi 0, %s85
      %s100 = sphi 0, %s86
      %s104 = sphi 0, %s104
      %s106 = sphi 0, %s104
      %s107 = sphi 0, %s106
      %s121 = sphi 0, %s107
      %s125 = sphi 0, %s125
      %s127 = sphi 0, %s125
      %s128 = sphi 0, %s127
      %s142 = sphi 0, %s128
      %s146 = sphi 0, %s146
      %s148 = sphi 0, %s146
      %s149 = sphi 0, %s148
      %s163 = sphi 0, %s149
      %s167 = sphi 0, %s167
      %s169 = sphi 0, %s167
      %s170 = sphi 0, %s169
      %s184 = sphi 0, %s170
      %s188 = sphi 0, %s188
      %s190 = sphi 0, %s188
      %s191 = sphi 0, %s190
      %s205 = sphi 0, %s191
      %s209 = sphi 0, %s209
      %s211 = sphi 0, %s209
      %s212 = sphi 0, %s211
      %s226 = sphi 0, %s212
      %s230 = sphi 0, %s230
      %s232 = sphi 0, %s230
      %s233 = sphi 0, %s232
      %s247 = sphi 0, %s233
      %s251 = sphi 0, %s251
      %s253 = sphi 0, %s251
      %s254 = sphi 0, %s253
      %s268 = sphi 0, %s254
      %s272 = sphi 0, %s272
      %s274 = sphi 0, %s272
      %s275 = sphi 0, %s274
      %s289 = sphi 0, %s275
      %s293 = sphi 0, %s293
      %s295 = sphi 0, %s293
      %s296 = sphi 0, %s295
      %s310 = sphi 0, %s296
      %s314 = sphi 0, %s314
      %s316 = sphi 0, %s314
      %s317 = sphi 0, %s316
      %s331 = sphi 0, %s317
      %s337 = sphi 0, %s339
      %s340 = sphi 0, %s337
      %s341 = sphi 0, %s340
      %s357 = sphi 0, %s341
    $region4: #{tpu_custom_call.1} parent=1 // loop_header_branch
      %26 = sbr.rel (%p24) target = $region8
    $region5: #{tpu_custom_call.1} parent=1 // loop_body
      %s28 = ssub.s32 %s23, 1
      %s29 = ssub.s32 %s23, 2
      %s30 = sadd.s32 %s23, 1
      %s31 = ssub.s32 %s23, %s30
      %p32 = scmp.eq.s32.totalorder %s31, 0
      %s34 = sadd.s32 %s33, 1
      %s35 = scalar_select %p32, %s33, %s34
      %p38 = pneg %p32
      %p39 = scmp.eq.s32.totalorder %s23, 1
      %p40 = por %p38, %p39
      %p41 = scmp.ne.s32.totalorder %s33, %s36
      %p42 = scmp.eq.s32.totalorder %s23, 0
      %p43 = por %p41, %p42
      %p44 = scmp.ne.s32.totalorder %s33, %s36
      %p45 = scmp.eq.s32.totalorder %s28, 1
      %p46 = por %p44, %p45
      %p47 = scmp.ne.s32.totalorder %s36, %s37
      %p48 = scmp.eq.s32.totalorder %s28, 0
      %p49 = por %p47, %p48
      %p50 = scmp.ne.s32.totalorder %s36, %s37
      %p51 = scmp.eq.s32.totalorder %s29, 1
      %p52 = por %p50, %p51
      %p54 = scmp.ne.s32.totalorder %s37, %s53
      %p55 = scmp.eq.s32.totalorder %s29, 0
      %p56 = por %p54, %p55
      %s57 = ssub.s32 %s23, %s30
      %p58 = scmp.eq.s32.totalorder %s57, 0
      %s60 = sadd.s32 %s59, 1
      %s61 = scalar_select %p58, %s59, %s60
      %p64 = pneg %p58
      %p65 = scmp.eq.s32.totalorder %s23, 1
      %p66 = por %p64, %p65
      %p67 = scmp.ne.s32.totalorder %s59, %s62
      %p68 = scmp.eq.s32.totalorder %s23, 0
      %p69 = por %p67, %p68
      %p70 = scmp.ne.s32.totalorder %s59, %s62
      %p71 = scmp.eq.s32.totalorder %s28, 1
      %p72 = por %p70, %p71
      %p73 = scmp.ne.s32.totalorder %s62, %s63
      %p74 = scmp.eq.s32.totalorder %s28, 0
      %p75 = por %p73, %p74
      %p76 = scmp.ne.s32.totalorder %s62, %s63
      %p77 = scmp.eq.s32.totalorder %s29, 1
      %p78 = por %p76, %p77
      %p80 = scmp.ne.s32.totalorder %s63, %s79
      %p81 = scmp.eq.s32.totalorder %s29, 0
      %p82 = por %p80, %p81
      %s84 = sadd.s32 %s83, 1
      %p87 = scmp.eq.s32.totalorder %s23, 1
      %p88 = scmp.ne.s32.totalorder %s83, %s85
      %p89 = scmp.eq.s32.totalorder %s23, 0
      %p90 = por %p88, %p89
      %p91 = scmp.ne.s32.totalorder %s83, %s85
      %p92 = scmp.eq.s32.totalorder %s28, 1
      %p93 = por %p91, %p92
      %p94 = scmp.ne.s32.totalorder %s85, %s86
      %p95 = scmp.eq.s32.totalorder %s28, 0
      %p96 = por %p94, %p95
      %p97 = scmp.ne.s32.totalorder %s85, %s86
      %p98 = scmp.eq.s32.totalorder %s29, 1
      %p99 = por %p97, %p98
      %p101 = scmp.ne.s32.totalorder %s86, %s100
      %p102 = scmp.eq.s32.totalorder %s29, 0
      %p103 = por %p101, %p102
      %s105 = sadd.s32 %s104, 1
      %p108 = scmp.eq.s32.totalorder %s23, 1
      %p109 = scmp.ne.s32.totalorder %s104, %s106
      %p110 = scmp.eq.s32.totalorder %s23, 0
      %p111 = por %p109, %p110
      %p112 = scmp.ne.s32.totalorder %s104, %s106
      %p113 = scmp.eq.s32.totalorder %s28, 1
      %p114 = por %p112, %p113
      %p115 = scmp.ne.s32.totalorder %s106, %s107
      %p116 = scmp.eq.s32.totalorder %s28, 0
      %p117 = por %p115, %p116
      %p118 = scmp.ne.s32.totalorder %s106, %s107
      %p119 = scmp.eq.s32.totalorder %s29, 1
      %p120 = por %p118, %p119
      %p122 = scmp.ne.s32.totalorder %s107, %s121
      %p123 = scmp.eq.s32.totalorder %s29, 0
      %p124 = por %p122, %p123
      %s126 = sadd.s32 %s125, 1
      %p129 = scmp.eq.s32.totalorder %s23, 1
      %p130 = scmp.ne.s32.totalorder %s125, %s127
      %p131 = scmp.eq.s32.totalorder %s23, 0
      %p132 = por %p130, %p131
      %p133 = scmp.ne.s32.totalorder %s125, %s127
      %p134 = scmp.eq.s32.totalorder %s28, 1
      %p135 = por %p133, %p134
      %p136 = scmp.ne.s32.totalorder %s127, %s128
      %p137 = scmp.eq.s32.totalorder %s28, 0
      %p138 = por %p136, %p137
      %p139 = scmp.ne.s32.totalorder %s127, %s128
      %p140 = scmp.eq.s32.totalorder %s29, 1
      %p141 = por %p139, %p140
      %p143 = scmp.ne.s32.totalorder %s128, %s142
      %p144 = scmp.eq.s32.totalorder %s29, 0
      %p145 = por %p143, %p144
      %s147 = sadd.s32 %s146, 1
      %p150 = scmp.eq.s32.totalorder %s23, 1
      %p151 = scmp.ne.s32.totalorder %s146, %s148
      %p152 = scmp.eq.s32.totalorder %s23, 0
      %p153 = por %p151, %p152
      %p154 = scmp.ne.s32.totalorder %s146, %s148
      %p155 = scmp.eq.s32.totalorder %s28, 1
      %p156 = por %p154, %p155
      %p157 = scmp.ne.s32.totalorder %s148, %s149
      %p158 = scmp.eq.s32.totalorder %s28, 0
      %p159 = por %p157, %p158
      %p160 = scmp.ne.s32.totalorder %s148, %s149
      %p161 = scmp.eq.s32.totalorder %s29, 1
      %p162 = por %p160, %p161
      %p164 = scmp.ne.s32.totalorder %s149, %s163
      %p165 = scmp.eq.s32.totalorder %s29, 0
      %p166 = por %p164, %p165
      %s168 = sadd.s32 %s167, 1
      %p171 = scmp.eq.s32.totalorder %s23, 1
      %p172 = scmp.ne.s32.totalorder %s167, %s169
      %p173 = scmp.eq.s32.totalorder %s23, 0
      %p174 = por %p172, %p173
      %p175 = scmp.ne.s32.totalorder %s167, %s169
      %p176 = scmp.eq.s32.totalorder %s28, 1
      %p177 = por %p175, %p176
      %p178 = scmp.ne.s32.totalorder %s169, %s170
      %p179 = scmp.eq.s32.totalorder %s28, 0
      %p180 = por %p178, %p179
      %p181 = scmp.ne.s32.totalorder %s169, %s170
      %p182 = scmp.eq.s32.totalorder %s29, 1
      %p183 = por %p181, %p182
      %p185 = scmp.ne.s32.totalorder %s170, %s184
      %p186 = scmp.eq.s32.totalorder %s29, 0
      %p187 = por %p185, %p186
      %s189 = sadd.s32 %s188, 1
      %p192 = scmp.eq.s32.totalorder %s23, 1
      %p193 = scmp.ne.s32.totalorder %s188, %s190
      %p194 = scmp.eq.s32.totalorder %s23, 0
      %p195 = por %p193, %p194
      %p196 = scmp.ne.s32.totalorder %s188, %s190
      %p197 = scmp.eq.s32.totalorder %s28, 1
      %p198 = por %p196, %p197
      %p199 = scmp.ne.s32.totalorder %s190, %s191
      %p200 = scmp.eq.s32.totalorder %s28, 0
      %p201 = por %p199, %p200
      %p202 = scmp.ne.s32.totalorder %s190, %s191
      %p203 = scmp.eq.s32.totalorder %s29, 1
      %p204 = por %p202, %p203
      %p206 = scmp.ne.s32.totalorder %s191, %s205
      %p207 = scmp.eq.s32.totalorder %s29, 0
      %p208 = por %p206, %p207
      %s210 = sadd.s32 %s209, 1
      %p213 = scmp.eq.s32.totalorder %s23, 1
      %p214 = scmp.ne.s32.totalorder %s209, %s211
      %p215 = scmp.eq.s32.totalorder %s23, 0
      %p216 = por %p214, %p215
      %p217 = scmp.ne.s32.totalorder %s209, %s211
      %p218 = scmp.eq.s32.totalorder %s28, 1
      %p219 = por %p217, %p218
      %p220 = scmp.ne.s32.totalorder %s211, %s212
      %p221 = scmp.eq.s32.totalorder %s28, 0
      %p222 = por %p220, %p221
      %p223 = scmp.ne.s32.totalorder %s211, %s212
      %p224 = scmp.eq.s32.totalorder %s29, 1
      %p225 = por %p223, %p224
      %p227 = scmp.ne.s32.totalorder %s212, %s226
      %p228 = scmp.eq.s32.totalorder %s29, 0
      %p229 = por %p227, %p228
      %s231 = sadd.s32 %s230, 1
      %p234 = scmp.eq.s32.totalorder %s23, 1
      %p235 = scmp.ne.s32.totalorder %s230, %s232
      %p236 = scmp.eq.s32.totalorder %s23, 0
      %p237 = por %p235, %p236
      %p238 = scmp.ne.s32.totalorder %s230, %s232
      %p239 = scmp.eq.s32.totalorder %s28, 1
      %p240 = por %p238, %p239
      %p241 = scmp.ne.s32.totalorder %s232, %s233
      %p242 = scmp.eq.s32.totalorder %s28, 0
      %p243 = por %p241, %p242
      %p244 = scmp.ne.s32.totalorder %s232, %s233
      %p245 = scmp.eq.s32.totalorder %s29, 1
      %p246 = por %p244, %p245
      %p248 = scmp.ne.s32.totalorder %s233, %s247
      %p249 = scmp.eq.s32.totalorder %s29, 0
      %p250 = por %p248, %p249
      %s252 = sadd.s32 %s251, 1
      %p255 = scmp.eq.s32.totalorder %s23, 1
      %p256 = scmp.ne.s32.totalorder %s251, %s253
      %p257 = scmp.eq.s32.totalorder %s23, 0
      %p258 = por %p256, %p257
      %p259 = scmp.ne.s32.totalorder %s251, %s253
      %p260 = scmp.eq.s32.totalorder %s28, 1
      %p261 = por %p259, %p260
      %p262 = scmp.ne.s32.totalorder %s253, %s254
      %p263 = scmp.eq.s32.totalorder %s28, 0
      %p264 = por %p262, %p263
      %p265 = scmp.ne.s32.totalorder %s253, %s254
      %p266 = scmp.eq.s32.totalorder %s29, 1
      %p267 = por %p265, %p266
      %p269 = scmp.ne.s32.totalorder %s254, %s268
      %p270 = scmp.eq.s32.totalorder %s29, 0
      %p271 = por %p269, %p270
      %s273 = sadd.s32 %s272, 1
      %p276 = scmp.eq.s32.totalorder %s23, 1
      %p277 = scmp.ne.s32.totalorder %s272, %s274
      %p278 = scmp.eq.s32.totalorder %s23, 0
      %p279 = por %p277, %p278
      %p280 = scmp.ne.s32.totalorder %s272, %s274
      %p281 = scmp.eq.s32.totalorder %s28, 1
      %p282 = por %p280, %p281
      %p283 = scmp.ne.s32.totalorder %s274, %s275
      %p284 = scmp.eq.s32.totalorder %s28, 0
      %p285 = por %p283, %p284
      %p286 = scmp.ne.s32.totalorder %s274, %s275
      %p287 = scmp.eq.s32.totalorder %s29, 1
      %p288 = por %p286, %p287
      %p290 = scmp.ne.s32.totalorder %s275, %s289
      %p291 = scmp.eq.s32.totalorder %s29, 0
      %p292 = por %p290, %p291
      %s294 = sadd.s32 %s293, 1
      %p297 = scmp.eq.s32.totalorder %s23, 1
      %p298 = scmp.ne.s32.totalorder %s293, %s295
      %p299 = scmp.eq.s32.totalorder %s23, 0
      %p300 = por %p298, %p299
      %p301 = scmp.ne.s32.totalorder %s293, %s295
      %p302 = scmp.eq.s32.totalorder %s28, 1
      %p303 = por %p301, %p302
      %p304 = scmp.ne.s32.totalorder %s295, %s296
      %p305 = scmp.eq.s32.totalorder %s28, 0
      %p306 = por %p304, %p305
      %p307 = scmp.ne.s32.totalorder %s295, %s296
      %p308 = scmp.eq.s32.totalorder %s29, 1
      %p309 = por %p307, %p308
      %p311 = scmp.ne.s32.totalorder %s296, %s310
      %p312 = scmp.eq.s32.totalorder %s29, 0
      %p313 = por %p311, %p312
      %s315 = sadd.s32 %s314, 1
      %p318 = scmp.eq.s32.totalorder %s23, 1
      %p319 = scmp.ne.s32.totalorder %s314, %s316
      %p320 = scmp.eq.s32.totalorder %s23, 0
      %p321 = por %p319, %p320
      %p322 = scmp.ne.s32.totalorder %s314, %s316
      %p323 = scmp.eq.s32.totalorder %s28, 1
      %p324 = por %p322, %p323
      %p325 = scmp.ne.s32.totalorder %s316, %s317
      %p326 = scmp.eq.s32.totalorder %s28, 0
      %p327 = por %p325, %p326
      %p328 = scmp.ne.s32.totalorder %s316, %s317
      %p329 = scmp.eq.s32.totalorder %s29, 1
      %p330 = por %p328, %p329
      %p332 = scmp.ne.s32.totalorder %s317, %s331
      %p333 = scmp.eq.s32.totalorder %s29, 0
      %p334 = por %p332, %p333
      %s335 = ssub.s32 %s23, %s30
      %p336 = scmp.eq.s32.totalorder %s335, 0
      %s338 = sadd.s32 %s337, 1
      %s339 = scalar_select %p336, %s337, %s338
      %p342 = pneg %p336
      %p343 = scmp.eq.s32.totalorder %s23, 1
      %p344 = por %p342, %p343
      %p345 = scmp.ne.s32.totalorder %s337, %s340
      %p346 = scmp.eq.s32.totalorder %s23, 0
      %p347 = por %p345, %p346
      %p348 = scmp.ne.s32.totalorder %s337, %s340
      %p349 = scmp.eq.s32.totalorder %s28, 1
      %p350 = por %p348, %p349
      %p351 = scmp.ne.s32.totalorder %s340, %s341
      %p352 = scmp.eq.s32.totalorder %s28, 0
      %p353 = por %p351, %p352
      %p354 = scmp.ne.s32.totalorder %s340, %s341
      %p355 = scmp.eq.s32.totalorder %s29, 1
      %p356 = por %p354, %p355
      %p358 = scmp.ne.s32.totalorder %s341, %s357
      %p359 = scmp.eq.s32.totalorder %s29, 0
      %p360 = por %p358, %p359
      %p361 = scmp.le.s32.totalorder 1, %s23
      %p362 = scmp.lt.s32.totalorder %s23, 3
      %p363 = pnand %p361, %p362
      %p364 = pneg %p363
      // Predicated region
      $region9: #{tpu_custom_call.1} parent=5 // pred_check
        _
      $region10: #{tpu_custom_call.1} parent=5 // pred_check_branch
        %366 = sbr.rel (%p363) target = $region12
      $region11: #{tpu_custom_call.1} parent=5 // pred_region
        %s367 = ssub.s32 %s23, 1
        // Predicated region
        $region13: #{tpu_custom_call.1} parent=11 // pred_check
          %p368 = pneg %p96
        $region14: #{tpu_custom_call.1} parent=11 // pred_check_branch
          %370 = sbr.rel (%p368) target = $region16
        $region15: #{tpu_custom_call.1} parent=11 // pred_region
          _
        $region16: #{tpu_custom_call.1} parent=11 // pred_fallthru
          _
        // Predicated region
        $region17: #{tpu_custom_call.1} parent=11 // pred_check
          %p371 = pneg %p117
        $region18: #{tpu_custom_call.1} parent=11 // pred_check_branch
          %373 = sbr.rel (%p371) target = $region20
        $region19: #{tpu_custom_call.1} parent=11 // pred_region
          _
        $region20: #{tpu_custom_call.1} parent=11 // pred_fallthru
          _
        // Predicated region
        $region21: #{tpu_custom_call.1} parent=11 // pred_check
          %p374 = pneg %p138
        $region22: #{tpu_custom_call.1} parent=11 // pred_check_branch
          %376 = sbr.rel (%p374) target = $region24
        $region23: #{tpu_custom_call.1} parent=11 // pred_region
          _
        $region24: #{tpu_custom_call.1} parent=11 // pred_fallthru
          _
        // Predicated region
        $region25: #{tpu_custom_call.1} parent=11 // pred_check
          %p377 = pneg %p159
        $region26: #{tpu_custom_call.1} parent=11 // pred_check_branch
          %379 = sbr.rel (%p377) target = $region28
        $region27: #{tpu_custom_call.1} parent=11 // pred_region
          _
        $region28: #{tpu_custom_call.1} parent=11 // pred_fallthru
          _
        // Predicated region
        $region29: #{tpu_custom_call.1} parent=11 // pred_check
          %p380 = pneg %p180
        $region30: #{tpu_custom_call.1} parent=11 // pred_check_branch
          %382 = sbr.rel (%p380) target = $region32
        $region31: #{tpu_custom_call.1} parent=11 // pred_region
          _
        $region32: #{tpu_custom_call.1} parent=11 // pred_fallthru
          _
        // Predicated region
        $region33: #{tpu_custom_call.1} parent=11 // pred_check
          %p383 = pneg %p201
        $region34: #{tpu_custom_call.1} parent=11 // pred_check_branch
          %385 = sbr.rel (%p383) target = $region36
        $region35: #{tpu_custom_call.1} parent=11 // pred_region
          _
        $region36: #{tpu_custom_call.1} parent=11 // pred_fallthru
          _
        // Predicated region
        $region37: #{tpu_custom_call.1} parent=11 // pred_check
          %p386 = pneg %p222
        $region38: #{tpu_custom_call.1} parent=11 // pred_check_branch
          %388 = sbr.rel (%p386) target = $region40
        $region39: #{tpu_custom_call.1} parent=11 // pred_region
          _
        $region40: #{tpu_custom_call.1} parent=11 // pred_fallthru
          _
        // Predicated region
        $region41: #{tpu_custom_call.1} parent=11 // pred_check
          %p389 = pneg %p243
        $region42: #{tpu_custom_call.1} parent=11 // pred_check_branch
          %391 = sbr.rel (%p389) target = $region44
        $region43: #{tpu_custom_call.1} parent=11 // pred_region
          _
        $region44: #{tpu_custom_call.1} parent=11 // pred_fallthru
          _
        // Predicated region
        $region45: #{tpu_custom_call.1} parent=11 // pred_check
          %p392 = pneg %p264
        $region46: #{tpu_custom_call.1} parent=11 // pred_check_branch
          %394 = sbr.rel (%p392) target = $region48
        $region47: #{tpu_custom_call.1} parent=11 // pred_region
          _
        $region48: #{tpu_custom_call.1} parent=11 // pred_fallthru
          _
        // Predicated region
        $region49: #{tpu_custom_call.1} parent=11 // pred_check
          %p395 = pneg %p285
        $region50: #{tpu_custom_call.1} parent=11 // pred_check_branch
          %397 = sbr.rel (%p395) target = $region52
        $region51: #{tpu_custom_call.1} parent=11 // pred_region
          _
        $region52: #{tpu_custom_call.1} parent=11 // pred_fallthru
          _
        // Predicated region
        $region53: #{tpu_custom_call.1} parent=11 // pred_check
          %p398 = pneg %p306
        $region54: #{tpu_custom_call.1} parent=11 // pred_check_branch
          %400 = sbr.rel (%p398) target = $region56
        $region55: #{tpu_custom_call.1} parent=11 // pred_region
          _
        $region56: #{tpu_custom_call.1} parent=11 // pred_fallthru
          _
        // Predicated region
        $region57: #{tpu_custom_call.1} parent=11 // pred_check
          %p401 = pneg %p327
        $region58: #{tpu_custom_call.1} parent=11 // pred_check_branch
          %403 = sbr.rel (%p401) target = $region60
        $region59: #{tpu_custom_call.1} parent=11 // pred_region
          _
        $region60: #{tpu_custom_call.1} parent=11 // pred_fallthru
          _
      $region12: #{tpu_custom_call.1} parent=5 // pred_fallthru
        _
      %p404 = scmp.lt.s32.totalorder %s23, 2
      // Predicated region
      $region61: #{tpu_custom_call.1} parent=5 // pred_check
        %p405 = pneg %p404
      $region62: #{tpu_custom_call.1} parent=5 // pred_check_branch
        %407 = sbr.rel (%p405) target = $region64
      $region63: #{tpu_custom_call.1} parent=5 // pred_region
        // Predicated region
        $region65: #{tpu_custom_call.1} parent=63 // pred_check
          %p408 = pneg %p43
        $region66: #{tpu_custom_call.1} parent=63 // pred_check_branch
          %410 = sbr.rel (%p408) target = $region68
        $region67: #{tpu_custom_call.1} parent=63 // pred_region
          %p411 = scmp.lt.s32.totalorder %s23, 1
          %s412 = scalar_select %p411, %s23, 1
          %s413 = smul.addr %s412, 8
          %s414 = smul.addr %s413, 4
          %s415 = scalar_lea.vmem %s0, %s414
        $region68: #{tpu_custom_call.1} parent=63 // pred_fallthru
          _
        // Predicated region
        $region69: #{tpu_custom_call.1} parent=63 // pred_check
          %p416 = pneg %p69
        $region70: #{tpu_custom_call.1} parent=63 // pred_check_branch
          %418 = sbr.rel (%p416) target = $region72
        $region71: #{tpu_custom_call.1} parent=63 // pred_region
          %p419 = scmp.lt.s32.totalorder %s23, 1
          %s420 = scalar_select %p419, %s23, 1
          %s421 = smul.addr %s420, 3
          %s422 = smul.addr %s421, 4
          %s423 = scalar_lea.vmem %s1, %s422
        $region72: #{tpu_custom_call.1} parent=63 // pred_fallthru
          _
      $region64: #{tpu_custom_call.1} parent=5 // pred_fallthru
        _
      %p424 = scmp.le.s32.totalorder 1, %s23
      %p425 = scmp.lt.s32.totalorder %s23, 3
      %p426 = pnand %p424, %p425
      %p427 = pneg %p426
      // Predicated region
      $region73: #{tpu_custom_call.1} parent=5 // pred_check
        _
      $region74: #{tpu_custom_call.1} parent=5 // pred_check_branch
        %429 = sbr.rel (%p426) target = $region76
      $region75: #{tpu_custom_call.1} parent=5 // pred_region
        %s430 = ssub.s32 %s23, 1
        %p431 = scmp.lt.s32.totalorder %s28, 1
        %s432 = scalar_select %p431, %s28, 1
        %s433 = smul.addr %s432, 8
        %s434 = smul.addr %s433, 4
        %s435 = scalar_lea.vmem %s0, %s434
        %p436 = pneg %p49
        %p437 = pneg %p46
        %p438 = scmp.lt.s32.totalorder %s28, 1
        %s439 = scalar_select %p438, %s28, 1
        %s440 = smul.addr %s439, 3
        %s441 = smul.addr %s440, 4
        %s442 = scalar_lea.vmem %s1, %s441
        %p443 = pneg %p75
        %p444 = pneg %p72
        %p445 = pneg %p96
        %p446 = pneg %p93
        %p447 = pneg %p117
        %p448 = pneg %p114
        %p449 = pneg %p138
        %p450 = pneg %p135
        %p451 = pneg %p159
        %p452 = pneg %p156
        %p453 = pneg %p180
        %p454 = pneg %p177
        %p455 = pneg %p201
        %p456 = pneg %p198
        %p457 = pneg %p222
        %p458 = pneg %p219
        %p459 = pneg %p243
        %p460 = pneg %p240
        %p461 = pneg %p264
        %p462 = pneg %p261
        %p463 = pneg %p285
        %p464 = pneg %p282
        %p465 = pneg %p306
        %p466 = pneg %p303
        %p467 = pneg %p327
        %p468 = pneg %p324
        %p469 = pneg %p353
        %p470 = pneg %p350
        %s471 = sand.u32 %s340, 1
        %s472 = scalar_lea.sflag [#allocation3], %s471
        %s473 = sand.u32 %s340, 1
        %s474 = smul.addr %s473, 64
        %s475 = scalar_lea.vmem [#allocation2], %s474
        %p476 = scmp.lt.s32.totalorder %s28, 1
        %s477 = scalar_select %p476, %s28, 1
        %s478 = smul.addr %s477, 8
        %s479 = smul.addr %s478, 4
        %s480 = scalar_lea.vmem %s0, %s479
        %p481 = scmp.lt.s32.totalorder %s28, 1
        %s482 = scalar_select %p481, %s28, 1
        %s483 = smul.addr %s482, 3
        %s484 = smul.addr %s483, 4
        %s485 = scalar_lea.vmem %s1, %s484
        %v487 = vld [vmem:[%s480] sm:$0xf]
        %v488 = vld [vmem:[%s480 + $0x4] sm:$0xf]
        %v489 = vld [vmem:[%s480 + $0x8] sm:$0xf]
        %v490 = vld [vmem:[%s480 + $0xc] sm:$0xf]
        %v491 = vld [vmem:[%s480 + $0x10] sm:$0xf]
        %v492 = vld [vmem:[%s480 + $0x14] sm:$0xf]
        %v493 = vld [vmem:[%s480 + $0x18] sm:$0xf]
        %v494 = vld [vmem:[%s480 + $0x1c] sm:$0xf]
        %v503 = vunpack.c.l.b16 %v487
        %v504 = vunpack.c.l.b16 %v488
        %v505 = vunpack.c.l.b16 %v489
        %v506 = vunpack.c.l.b16 %v490
        %v507 = vunpack.c.l.b16 %v491
        %v508 = vunpack.c.l.b16 %v492
        %v509 = vunpack.c.l.b16 %v493
        %v510 = vunpack.c.l.b16 %v494
        %v511 = vpack.c.b16 %v503, %v503
        %v512 = vpack.c.b16 %v504, %v504
        %v513 = vpack.c.b16 %v505, %v505
        %v514 = vpack.c.b16 %v506, %v506
        %v515 = vpack.c.b16 %v507, %v507
        %v516 = vpack.c.b16 %v508, %v508
        %v517 = vpack.c.b16 %v509, %v509
        %v518 = vpack.c.b16 %v510, %v510
        %v520 = vshrl.u32 %v511, 16
        %v522 = vrot.slane %v520, 7
        %v523 = vshll.u32 %v511, 16
        %v525 = vor.u32 %v522, %v523
        %v527 = vshrl.u32 %v512, 16
        %v529 = vrot.slane %v527, 7
        %v530 = vshll.u32 %v512, 16
        %v532 = vor.u32 %v529, %v530
        %v534 = vshrl.u32 %v513, 16
        %v536 = vrot.slane %v534, 7
        %v537 = vshll.u32 %v513, 16
        %v539 = vor.u32 %v536, %v537
        %v541 = vshrl.u32 %v514, 16
        %v543 = vrot.slane %v541, 7
        %v544 = vshll.u32 %v514, 16
        %v546 = vor.u32 %v543, %v544
        %v548 = vshrl.u32 %v515, 16
        %v550 = vrot.slane %v548, 7
        %v551 = vshll.u32 %v515, 16
        %v553 = vor.u32 %v550, %v551
        %v555 = vshrl.u32 %v516, 16
        %v557 = vrot.slane %v555, 7
        %v558 = vshll.u32 %v516, 16
        %v560 = vor.u32 %v557, %v558
        %v562 = vshrl.u32 %v517, 16
        %v564 = vrot.slane %v562, 7
        %v565 = vshll.u32 %v517, 16
        %v567 = vor.u32 %v564, %v565
        %v569 = vshrl.u32 %v518, 16
        %v571 = vrot.slane %v569, 7
        %v572 = vshll.u32 %v518, 16
        %v574 = vor.u32 %v571, %v572
        %vm583 = vcmask 1040384
        %vm584 = vsmask.f32 256
        %vm585 = vmand %vm583, %vm584
        %v586 = vsel %vm585, 0, %v525
        %v587 = vsel %vm585, 0, %v532
        %v588 = vsel %vm585, 0, %v539
        %v589 = vsel %vm585, 0, %v546
        %v590 = vsel %vm585, 0, %v553
        %v591 = vsel %vm585, 0, %v560
        %v592 = vsel %vm585, 0, %v567
        %v593 = vsel %vm585, 0, %v574
        %vm594 = vcmask 1044480
        %vm595 = vsmask.f32 4352
        %vm596 = vmand %vm594, %vm595
        %v597 = vsel %vm596, %v586, 0
        %v598 = vsel %vm596, %v587, 0
        %v599 = vsel %vm596, %v588, 0
        %v600 = vsel %vm596, %v589, 0
        %v601 = vsel %vm596, %v590, 0
        %v602 = vsel %vm596, %v591, 0
        %v603 = vsel %vm596, %v592, 0
        %v604 = vsel %vm596, %v593, 0
        %v613 = vunpack.c.l.b16 0
        %v614 = vunpack.c.h.b16 0
        %v615 = vunpack.c.l.b16 %v597
        %v616 = vunpack.c.h.b16 %v597
        %v617 = vunpack.c.l.b16 %v598
        %v618 = vunpack.c.h.b16 %v598
        %v619 = vunpack.c.l.b16 %v599
        %v620 = vunpack.c.h.b16 %v599
        %v621 = vunpack.c.l.b16 %v600
        %v622 = vunpack.c.h.b16 %v600
        %v623 = vunpack.c.l.b16 %v601
        %v624 = vunpack.c.h.b16 %v601
        %v625 = vunpack.c.l.b16 %v602
        %v626 = vunpack.c.h.b16 %v602
        %v627 = vunpack.c.l.b16 %v603
        %v628 = vunpack.c.h.b16 %v603
        %v629 = vpack.c.b16 %v613, %v613
        %v630 = vpack.c.b16 %v614, %v614
        %v631 = vpack.c.b16 %v615, %v615
        %v632 = vpack.c.b16 %v616, %v616
        %v633 = vpack.c.b16 %v617, %v617
        %v634 = vpack.c.b16 %v618, %v618
        %v635 = vpack.c.b16 %v619, %v619
        %v636 = vpack.c.b16 %v620, %v620
        %v637 = vpack.c.b16 %v621, %v621
        %v638 = vpack.c.b16 %v622, %v622
        %v639 = vpack.c.b16 %v623, %v623
        %v640 = vpack.c.b16 %v624, %v624
        %v641 = vpack.c.b16 %v625, %v625
        %v642 = vpack.c.b16 %v626, %v626
        %v643 = vpack.c.b16 %v627, %v627
        %v644 = vpack.c.b16 %v628, %v628
        %vm645 = vsmask.f32 3328
        %vm646 = vsmask.f32 7440
        %vm647 = vmor %vm645, %vm646
        %v649 = vshrl.u32 %v629, 16
        %v651 = vrot.slane %v649, 4
        %v652 = vshll.u32 %v629, 16
        %v654 = vrot.slane %v652, 5
        %v655 = vor.u32 %v651, %v654
        %v656 = vrot.slane %v655, 4
        %v658 = vshll.u32 %v630, 16
        %v660 = vrot.slane %v658, 5
        %v661 = vsel %vm647, %v656, %v660
        %v663 = vshrl.u32 %v631, 16
        %v665 = vrot.slane %v663, 4
        %v666 = vshll.u32 %v631, 16
        %v668 = vrot.slane %v666, 5
        %v669 = vor.u32 %v665, %v668
        %v670 = vrot.slane %v669, 4
        %v672 = vshll.u32 %v632, 16
        %v674 = vrot.slane %v672, 5
        %v675 = vsel %vm647, %v670, %v674
        %v677 = vshrl.u32 %v633, 16
        %v679 = vrot.slane %v677, 4
        %v680 = vshll.u32 %v633, 16
        %v682 = vrot.slane %v680, 5
        %v683 = vor.u32 %v679, %v682
        %v684 = vrot.slane %v683, 4
        %v686 = vshll.u32 %v634, 16
        %v688 = vrot.slane %v686, 5
        %v689 = vsel %vm647, %v684, %v688
        %v691 = vshrl.u32 %v635, 16
        %v693 = vrot.slane %v691, 4
        %v694 = vshll.u32 %v635, 16
        %v696 = vrot.slane %v694, 5
        %v697 = vor.u32 %v693, %v696
        %v698 = vrot.slane %v697, 4
        %v700 = vshll.u32 %v636, 16
        %v702 = vrot.slane %v700, 5
        %v703 = vsel %vm647, %v698, %v702
        %v705 = vshrl.u32 %v637, 16
        %v707 = vrot.slane %v705, 4
        %v708 = vshll.u32 %v637, 16
        %v710 = vrot.slane %v708, 5
        %v711 = vor.u32 %v707, %v710
        %v712 = vrot.slane %v711, 4
        %v714 = vshll.u32 %v638, 16
        %v716 = vrot.slane %v714, 5
        %v717 = vsel %vm647, %v712, %v716
        %v719 = vshrl.u32 %v639, 16
        %v721 = vrot.slane %v719, 4
        %v722 = vshll.u32 %v639, 16
        %v724 = vrot.slane %v722, 5
        %v725 = vor.u32 %v721, %v724
        %v726 = vrot.slane %v725, 4
        %v728 = vshll.u32 %v640, 16
        %v730 = vrot.slane %v728, 5
        %v731 = vsel %vm647, %v726, %v730
        %v733 = vshrl.u32 %v641, 16
        %v735 = vrot.slane %v733, 4
        %v736 = vshll.u32 %v641, 16
        %v738 = vrot.slane %v736, 5
        %v739 = vor.u32 %v735, %v738
        %v740 = vrot.slane %v739, 4
        %v742 = vshll.u32 %v642, 16
        %v744 = vrot.slane %v742, 5
        %v745 = vsel %vm647, %v740, %v744
        %v747 = vshrl.u32 %v643, 16
        %v749 = vrot.slane %v747, 4
        %v750 = vshll.u32 %v643, 16
        %v752 = vrot.slane %v750, 5
        %v753 = vor.u32 %v749, %v752
        %v754 = vrot.slane %v753, 4
        %v756 = vshll.u32 %v644, 16
        %v758 = vrot.slane %v756, 5
        %v759 = vsel %vm647, %v754, %v758
        %vm760 = vcmask 1042432
        %vm761 = vcmask 1046532
        %vm762 = vmor %vm760, %vm761
        %v763 = vrot.slane %v629, 5
        %v764 = vrot.slane %v763, 4
        %v765 = vrot.slane %v630, 5
        %v766 = vsel %vm762, %v764, %v765
        %v767 = vrot.slane %v631, 5
        %v768 = vrot.slane %v767, 4
        %v769 = vrot.slane %v632, 5
        %v770 = vsel %vm762, %v768, %v769
        %v771 = vrot.slane %v633, 5
        %v772 = vrot.slane %v771, 4
        %v773 = vrot.slane %v634, 5
        %v774 = vsel %vm762, %v772, %v773
        %v775 = vrot.slane %v635, 5
        %v776 = vrot.slane %v775, 4
        %v777 = vrot.slane %v636, 5
        %v778 = vsel %vm762, %v776, %v777
        %v779 = vrot.slane %v637, 5
        %v780 = vrot.slane %v779, 4
        %v781 = vrot.slane %v638, 5
        %v782 = vsel %vm762, %v780, %v781
        %v783 = vrot.slane %v639, 5
        %v784 = vrot.slane %v783, 4
        %v785 = vrot.slane %v640, 5
        %v786 = vsel %vm762, %v784, %v785
        %v787 = vrot.slane %v641, 5
        %v788 = vrot.slane %v787, 4
        %v789 = vrot.slane %v642, 5
        %v790 = vsel %vm762, %v788, %v789
        %v791 = vrot.slane %v643, 5
        %v792 = vrot.slane %v791, 4
        %v793 = vrot.slane %v644, 5
        %v794 = vsel %vm762, %v792, %v793
        %v796 = vunpack.c.l.b16 %v604
        %v797 = vunpack.c.h.b16 %v604
        %v798 = vpack.c.b16 %v796, %v796
        %v799 = vpack.c.b16 %v797, %v797
        %v801 = vshrl.u32 %v798, 16
        %v803 = vrot.slane %v801, 4
        %v804 = vshll.u32 %v798, 16
        %v806 = vrot.slane %v804, 5
        %v807 = vor.u32 %v803, %v806
        %v808 = vrot.slane %v807, 4
        %v810 = vshll.u32 %v799, 16
        %v812 = vrot.slane %v810, 5
        %v813 = vsel %vm647, %v808, %v812
        %v814 = vrot.slane %v798, 5
        %v815 = vrot.slane %v814, 4
        %v816 = vrot.slane %v799, 5
        %v817 = vsel %vm762, %v815, %v816
        %v818 = vpack.c.b16 %v615, %v613
        %v819 = vpack.c.b16 %v619, %v617
        %v820 = vpack.c.b16 %v623, %v621
        %v821 = vpack.c.b16 %v627, %v625
        %v822 = vunpack.c.l.b16 %v661
        %v823 = vunpack.c.l.b16 %v675
        %v824 = vunpack.c.l.b16 %v689
        %v825 = vunpack.c.l.b16 %v703
        %v826 = vunpack.c.l.b16 %v717
        %v827 = vunpack.c.l.b16 %v731
        %v828 = vunpack.c.l.b16 %v745
        %v829 = vunpack.c.l.b16 %v759
        %v830 = vpack.c.b16 %v823, %v822
        %v831 = vpack.c.b16 %v825, %v824
        %v832 = vpack.c.b16 %v827, %v826
        %v833 = vpack.c.b16 %v829, %v828
        %834 = vrot.lane.b32.xlu0 %v830, 72
        %v835 = vpop.permute.xlu0 %834
        %836 = vrot.lane.b32.xlu0 %v831, 72
        %v837 = vpop.permute.xlu0 %836
        %838 = vrot.lane.b32.xlu0 %v832, 72
        %v839 = vpop.permute.xlu0 %838
        %840 = vrot.lane.b32.xlu0 %v833, 72
        %v841 = vpop.permute.xlu0 %840
        %v842 = vunpack.c.l.b16 %v766
        %v843 = vunpack.c.l.b16 %v770
        %v844 = vunpack.c.l.b16 %v774
        %v845 = vunpack.c.l.b16 %v778
        %v846 = vunpack.c.l.b16 %v782
        %v847 = vunpack.c.l.b16 %v786
        %v848 = vunpack.c.l.b16 %v790
        %v849 = vunpack.c.l.b16 %v794
        %v850 = vpack.c.b16 %v843, %v842
        %v851 = vpack.c.b16 %v845, %v844
        %v852 = vpack.c.b16 %v847, %v846
        %v853 = vpack.c.b16 %v849, %v848
        %854 = vrot.lane.b32.xlu0 %v850, 16
        %v855 = vpop.permute.xlu0 %854
        %856 = vrot.lane.b32.xlu0 %v851, 16
        %v857 = vpop.permute.xlu0 %856
        %858 = vrot.lane.b32.xlu0 %v852, 16
        %v859 = vpop.permute.xlu0 %858
        %860 = vrot.lane.b32.xlu0 %v853, 16
        %v861 = vpop.permute.xlu0 %860
        %v862 = vpack.c.b16 %v617, %v615
        %v863 = vpack.c.b16 %v621, %v619
        %v864 = vpack.c.b16 %v625, %v623
        %v865 = vpack.c.b16 %v796, %v627
        %866 = vrot.lane.b32.xlu0 %v862, 88
        %v867 = vpop.permute.xlu0 %866
        %868 = vrot.lane.b32.xlu0 %v863, 88
        %v869 = vpop.permute.xlu0 %868
        %870 = vrot.lane.b32.xlu0 %v864, 88
        %v871 = vpop.permute.xlu0 %870
        %872 = vrot.lane.b32.xlu0 %v865, 88
        %v873 = vpop.permute.xlu0 %872
        %v874 = vunpack.c.l.b16 %v813
        %v875 = vpack.c.b16 %v824, %v823
        %v876 = vpack.c.b16 %v826, %v825
        %v877 = vpack.c.b16 %v828, %v827
        %v878 = vpack.c.b16 %v874, %v829
        %879 = vrot.lane.b32.xlu0 %v875, 32
        %v880 = vpop.permute.xlu0 %879
        %881 = vrot.lane.b32.xlu0 %v876, 32
        %v882 = vpop.permute.xlu0 %881
        %883 = vrot.lane.b32.xlu0 %v877, 32
        %v884 = vpop.permute.xlu0 %883
        %885 = vrot.lane.b32.xlu0 %v878, 32
        %v886 = vpop.permute.xlu0 %885
        %v887 = vunpack.c.l.b16 %v817
        %v888 = vpack.c.b16 %v844, %v843
        %v889 = vpack.c.b16 %v846, %v845
        %v890 = vpack.c.b16 %v848, %v847
        %v891 = vpack.c.b16 %v887, %v849
        %892 = vrot.lane.b32.xlu0 %v888, 104
        %v893 = vpop.permute.xlu0 %892
        %894 = vrot.lane.b32.xlu0 %v889, 104
        %v895 = vpop.permute.xlu0 %894
        %896 = vrot.lane.b32.xlu0 %v890, 104
        %v897 = vpop.permute.xlu0 %896
        %898 = vrot.lane.b32.xlu0 %v891, 104
        %v899 = vpop.permute.xlu0 %898
        %v900 = vpack.c.b16 %v613, %v796
        %901 = vrot.lane.b32.xlu0 %v819, 48
        %v902 = vpop.permute.xlu0 %901
        %903 = vrot.lane.b32.xlu0 %v820, 48
        %v904 = vpop.permute.xlu0 %903
        %905 = vrot.lane.b32.xlu0 %v821, 48
        %v906 = vpop.permute.xlu0 %905
        %907 = vrot.lane.b32.xlu0 %v900, 48
        %v908 = vpop.permute.xlu0 %907
        %v909 = vpack.c.b16 %v822, %v874
        %910 = vrot.lane.b32.xlu0 %v831, 120
        %v911 = vpop.permute.xlu0 %910
        %912 = vrot.lane.b32.xlu0 %v832, 120
        %v913 = vpop.permute.xlu0 %912
        %914 = vrot.lane.b32.xlu0 %v833, 120
        %v915 = vpop.permute.xlu0 %914
        %916 = vrot.lane.b32.xlu0 %v909, 120
        %v917 = vpop.permute.xlu0 %916
        %v918 = vpack.c.b16 %v842, %v887
        %919 = vrot.lane.b32.xlu0 %v851, 64
        %v920 = vpop.permute.xlu0 %919
        %921 = vrot.lane.b32.xlu0 %v852, 64
        %v922 = vpop.permute.xlu0 %921
        %923 = vrot.lane.b32.xlu0 %v853, 64
        %v924 = vpop.permute.xlu0 %923
        %925 = vrot.lane.b32.xlu0 %v918, 64
        %v926 = vpop.permute.xlu0 %925
        %vm927 = vcmask 588800
        %v930 = vsel %vm927, %v818, %v835
        %v934 = vsel %vm927, %v819, %v837
        %v938 = vsel %vm927, %v820, %v839
        %v942 = vsel %vm927, %v821, %v841
        %vm944 = vcmask 130048
        %v946 = vsel %vm944, %v835, %v855
        %v948 = vsel %vm944, %v837, %v857
        %v950 = vsel %vm944, %v839, %v859
        %v952 = vsel %vm944, %v841, %v861
        %vm953 = vcmask 719872
        %v955 = vsel %vm953, %v946, %v867
        %v958 = vsel %vm953, %v948, %v869
        %v961 = vsel %vm953, %v950, %v871
        %v964 = vsel %vm953, %v952, %v873
        %vm966 = vcmask 261120
        %v968 = vsel %vm966, %v867, %v880
        %v970 = vsel %vm966, %v869, %v882
        %v972 = vsel %vm966, %v871, %v884
        %v974 = vsel %vm966, %v873, %v886
        %vm975 = vcmask 850944
        %v977 = vsel %vm975, %v968, %v893
        %v980 = vsel %vm975, %v970, %v895
        %v983 = vsel %vm975, %v972, %v897
        %v986 = vsel %vm975, %v974, %v899
        %vm988 = vcmask 392192
        %v990 = vsel %vm988, %v893, %v902
        %v992 = vsel %vm988, %v895, %v904
        %v994 = vsel %vm988, %v897, %v906
        %v996 = vsel %vm988, %v899, %v908
        %vm997 = vcmask 982016
        %v999 = vsel %vm997, %v990, %v911
        %v1002 = vsel %vm997, %v992, %v913
        %v1005 = vsel %vm997, %v994, %v915
        %v1008 = vsel %vm997, %v996, %v917
        %vm1010 = vcmask 523264
        %v1012 = vsel %vm1010, %v911, %v920
        %v1015 = vsel %vm1010, %v913, %v922
        %v1018 = vsel %vm1010, %v915, %v924
        %v1021 = vsel %vm1010, %v917, %v926
        %v1023 = vld [vmem:[%s2] sm:$0xf]
        %v1024 = vld [vmem:[%s2 + $0x4] sm:$0xf]
        %v1025 = vld [vmem:[%s2 + $0x8] sm:$0xf]
        %v1026 = vld [vmem:[%s2 + $0xc] sm:$0xf]
        %v1027 = vld [vmem:[%s2 + $0x10] sm:$0xf]
        %v1028 = vld [vmem:[%s2 + $0x14] sm:$0xf]
        %v1029 = vld [vmem:[%s2 + $0x18] sm:$0xf]
        %v1030 = vld [vmem:[%s2 + $0x1c] sm:$0xf]
        %v1031 = vld [vmem:[%s2 + $0x20] sm:$0xf]
        %v1032 = vld [vmem:[%s2 + $0x24] sm:$0xf]
        %v1033 = vld [vmem:[%s2 + $0x28] sm:$0xf]
        %v1034 = vld [vmem:[%s2 + $0x2c] sm:$0xf]
        %v1035 = vld [vmem:[%s2 + $0x30] sm:$0xf]
        %v1036 = vld [vmem:[%s2 + $0x34] sm:$0xf]
        %v1037 = vld [vmem:[%s2 + $0x38] sm:$0xf]
        %v1038 = vld [vmem:[%s2 + $0x3c] sm:$0xf]
        %v1039 = vld [vmem:[%s2 + $0x40] sm:$0xf]
        %v1040 = vld [vmem:[%s2 + $0x44] sm:$0xf]
        %v1041 = vld [vmem:[%s2 + $0x48] sm:$0xf]
        %v1042 = vld [vmem:[%s2 + $0x4c] sm:$0xf]
        %v1043 = vld [vmem:[%s2 + $0x50] sm:$0xf]
        %v1044 = vld [vmem:[%s2 + $0x54] sm:$0xf]
        %v1045 = vld [vmem:[%s2 + $0x58] sm:$0xf]
        %v1046 = vld [vmem:[%s2 + $0x5c] sm:$0xf]
        %v1047 = vld [vmem:[%s2 + $0x60] sm:$0xf]
        %v1048 = vld [vmem:[%s2 + $0x64] sm:$0xf]
        %v1049 = vld [vmem:[%s2 + $0x68] sm:$0xf]
        %v1050 = vld [vmem:[%s2 + $0x6c] sm:$0xf]
        %v1051 = vld [vmem:[%s2 + $0x70] sm:$0xf]
        %v1052 = vld [vmem:[%s2 + $0x74] sm:$0xf]
        %v1053 = vld [vmem:[%s2 + $0x78] sm:$0xf]
        %v1054 = vld [vmem:[%s2 + $0x7c] sm:$0xf]
        %v1055 = vld [vmem:[%s2 + $0x80] sm:$0xf]
        %v1056 = vld [vmem:[%s2 + $0x84] sm:$0xf]
        %v1057 = vld [vmem:[%s2 + $0x88] sm:$0xf]
        %v1058 = vld [vmem:[%s2 + $0x8c] sm:$0xf]
        %v1059 = vld [vmem:[%s2 + $0x90] sm:$0xf]
        %v1060 = vld [vmem:[%s2 + $0x94] sm:$0xf]
        %v1061 = vld [vmem:[%s2 + $0x98] sm:$0xf]
        %v1062 = vld [vmem:[%s2 + $0x9c] sm:$0xf]
        %v1063 = vld [vmem:[%s2 + $0xa0] sm:$0xf]
        %v1064 = vld [vmem:[%s2 + $0xa4] sm:$0xf]
        %v1065 = vld [vmem:[%s2 + $0xa8] sm:$0xf]
        %v1066 = vld [vmem:[%s2 + $0xac] sm:$0xf]
        %v1067 = vld [vmem:[%s2 + $0xb0] sm:$0xf]
        %v1068 = vld [vmem:[%s2 + $0xb4] sm:$0xf]
        %v1069 = vld [vmem:[%s2 + $0xb8] sm:$0xf]
        %v1070 = vld [vmem:[%s2 + $0xbc] sm:$0xf]
        %v1071 = vld [vmem:[%s2 + $0xc0] sm:$0xf]
        %v1072 = vld [vmem:[%s2 + $0xc4] sm:$0xf]
        %v1073 = vld [vmem:[%s2 + $0xc8] sm:$0xf]
        %v1074 = vld [vmem:[%s2 + $0xcc] sm:$0xf]
        %v1075 = vld [vmem:[%s2 + $0xd0] sm:$0xf]
        %v1076 = vld [vmem:[%s2 + $0xd4] sm:$0xf]
        %v1077 = vld [vmem:[%s2 + $0xd8] sm:$0xf]
        %v1078 = vld [vmem:[%s2 + $0xdc] sm:$0xf]
        %v1079 = vld [vmem:[%s2 + $0xe0] sm:$0xf]
        %v1080 = vld [vmem:[%s2 + $0xe4] sm:$0xf]
        %v1081 = vld [vmem:[%s2 + $0xe8] sm:$0xf]
        %v1082 = vld [vmem:[%s2 + $0xec] sm:$0xf]
        %v1083 = vld [vmem:[%s2 + $0xf0] sm:$0xf]
        %v1084 = vld [vmem:[%s2 + $0xf4] sm:$0xf]
        %v1085 = vld [vmem:[%s2 + $0xf8] sm:$0xf]
        %v1086 = vld [vmem:[%s2 + $0xfc] sm:$0xf]
        %v1087 = vld [vmem:[%s2 + $0x100] sm:$0xf]
        %v1088 = vld [vmem:[%s2 + $0x104] sm:$0xf]
        %v1089 = vld [vmem:[%s2 + $0x108] sm:$0xf]
        %v1090 = vld [vmem:[%s2 + $0x10c] sm:$0xf]
        %v1091 = vld [vmem:[%s2 + $0x110] sm:$0xf]
        %v1092 = vld [vmem:[%s2 + $0x114] sm:$0xf]
        %v1093 = vld [vmem:[%s2 + $0x118] sm:$0xf]
        %v1094 = vld [vmem:[%s2 + $0x11c] sm:$0xf]
        %v1095 = vld [vmem:[%s2 + $0x120] sm:$0xf]
        %v1096 = vld [vmem:[%s2 + $0x124] sm:$0xf]
        %v1097 = vld [vmem:[%s2 + $0x128] sm:$0xf]
        %v1098 = vld [vmem:[%s2 + $0x12c] sm:$0xf]
        %v1099 = vld [vmem:[%s2 + $0x130] sm:$0xf]
        %v1100 = vld [vmem:[%s2 + $0x134] sm:$0xf]
        %v1101 = vld [vmem:[%s2 + $0x138] sm:$0xf]
        %v1102 = vld [vmem:[%s2 + $0x13c] sm:$0xf]
        %v1103 = vld [vmem:[%s2 + $0x140] sm:$0xf]
        %v1104 = vld [vmem:[%s3] sm:$0x1]
        %v1106 = vperm.slane %v1104, 0
        %v1189 = vunpack.c.l.b16 %v1023
        %v1190 = vunpack.c.l.b16 %v1024
        %v1191 = vunpack.c.l.b16 %v1025
        %v1192 = vunpack.c.l.b16 %v1026
        %v1193 = vunpack.c.l.b16 %v1027
        %v1194 = vunpack.c.l.b16 %v1028
        %v1195 = vunpack.c.l.b16 %v1029
        %v1196 = vunpack.c.l.b16 %v1030
        %v1197 = vunpack.c.l.b16 %v1031
        %v1198 = vunpack.c.l.b16 %v1032
        %v1199 = vunpack.c.l.b16 %v1033
        %v1200 = vunpack.c.l.b16 %v1034
        %v1201 = vunpack.c.l.b16 %v1035
        %v1202 = vunpack.c.l.b16 %v1036
        %v1203 = vunpack.c.l.b16 %v1037
        %v1204 = vunpack.c.l.b16 %v1038
        %v1205 = vunpack.c.l.b16 %v1039
        %v1206 = vunpack.c.l.b16 %v1040
        %v1207 = vunpack.c.l.b16 %v1041
        %v1208 = vunpack.c.l.b16 %v1042
        %v1209 = vunpack.c.l.b16 %v1043
        %v1210 = vunpack.c.l.b16 %v1044
        %v1211 = vunpack.c.l.b16 %v1045
        %v1212 = vunpack.c.l.b16 %v1046
        %v1213 = vunpack.c.l.b16 %v1047
        %v1214 = vunpack.c.l.b16 %v1048
        %v1215 = vunpack.c.l.b16 %v1049
        %v1216 = vunpack.c.l.b16 %v1050
        %v1217 = vunpack.c.l.b16 %v1051
        %v1218 = vunpack.c.l.b16 %v1052
        %v1219 = vunpack.c.l.b16 %v1053
        %v1220 = vunpack.c.l.b16 %v1054
        %v1221 = vunpack.c.l.b16 %v1055
        %v1222 = vunpack.c.l.b16 %v1056
        %v1223 = vunpack.c.l.b16 %v1057
        %v1224 = vunpack.c.l.b16 %v1058
        %v1225 = vunpack.c.l.b16 %v1059
        %v1226 = vunpack.c.l.b16 %v1060
        %v1227 = vunpack.c.l.b16 %v1061
        %v1228 = vunpack.c.l.b16 %v1062
        %v1229 = vunpack.c.l.b16 %v1063
        %v1230 = vunpack.c.l.b16 %v1064
        %v1231 = vunpack.c.l.b16 %v1065
        %v1232 = vunpack.c.l.b16 %v1066
        %v1233 = vunpack.c.l.b16 %v1067
        %v1234 = vunpack.c.l.b16 %v1068
        %v1235 = vunpack.c.l.b16 %v1069
        %v1236 = vunpack.c.l.b16 %v1070
        %v1237 = vunpack.c.l.b16 %v1071
        %v1238 = vunpack.c.l.b16 %v1072
        %v1239 = vunpack.c.l.b16 %v1073
        %v1240 = vunpack.c.l.b16 %v1074
        %v1241 = vunpack.c.l.b16 %v1075
        %v1242 = vunpack.c.l.b16 %v1076
        %v1243 = vunpack.c.l.b16 %v1077
        %v1244 = vunpack.c.l.b16 %v1078
        %v1245 = vunpack.c.l.b16 %v1079
        %v1246 = vunpack.c.l.b16 %v1080
        %v1247 = vunpack.c.l.b16 %v1081
        %v1248 = vunpack.c.l.b16 %v1082
        %v1249 = vunpack.c.l.b16 %v1083
        %v1250 = vunpack.c.l.b16 %v1084
        %v1251 = vunpack.c.l.b16 %v1085
        %v1252 = vunpack.c.l.b16 %v1086
        %v1253 = vunpack.c.l.b16 %v1087
        %v1254 = vunpack.c.l.b16 %v1088
        %v1255 = vunpack.c.l.b16 %v1089
        %v1256 = vunpack.c.l.b16 %v1090
        %v1257 = vunpack.c.l.b16 %v1091
        %v1258 = vunpack.c.l.b16 %v1092
        %v1259 = vunpack.c.l.b16 %v1093
        %v1260 = vunpack.c.l.b16 %v1094
        %v1261 = vunpack.c.l.b16 %v1095
        %v1262 = vunpack.c.l.b16 %v1096
        %v1263 = vunpack.c.l.b16 %v1097
        %v1264 = vunpack.c.l.b16 %v1098
        %v1265 = vunpack.c.l.b16 %v1099
        %v1266 = vunpack.c.l.b16 %v1100
        %v1267 = vunpack.c.l.b16 %v1101
        %v1268 = vunpack.c.l.b16 %v1102
        %v1269 = vunpack.c.l.b16 %v1103
        %v1270 = vpack.c.b16 %v1190, %v1189
        %v1271 = vpack.c.b16 %v1192, %v1191
        %v1272 = vpack.c.b16 %v1194, %v1193
        %v1273 = vpack.c.b16 %v1196, %v1195
        %v1274 = vpack.c.b16 %v1198, %v1197
        %v1275 = vpack.c.b16 %v1200, %v1199
        %v1276 = vpack.c.b16 %v1202, %v1201
        %v1277 = vpack.c.b16 %v1204, %v1203
        %v1278 = vpack.c.b16 %v1206, %v1205
        %v1279 = vpack.c.b16 %v1208, %v1207
        %v1280 = vpack.c.b16 %v1210, %v1209
        %v1281 = vpack.c.b16 %v1212, %v1211
        %v1282 = vpack.c.b16 %v1214, %v1213
        %v1283 = vpack.c.b16 %v1216, %v1215
        %v1284 = vpack.c.b16 %v1218, %v1217
        %v1285 = vpack.c.b16 %v1220, %v1219
        %v1286 = vpack.c.b16 %v1222, %v1221
        %v1287 = vpack.c.b16 %v1224, %v1223
        %v1288 = vpack.c.b16 %v1226, %v1225
        %v1289 = vpack.c.b16 %v1228, %v1227
        %v1290 = vpack.c.b16 %v1230, %v1229
        %v1291 = vpack.c.b16 %v1232, %v1231
        %v1292 = vpack.c.b16 %v1234, %v1233
        %v1293 = vpack.c.b16 %v1236, %v1235
        %v1294 = vpack.c.b16 %v1238, %v1237
        %v1295 = vpack.c.b16 %v1240, %v1239
        %v1296 = vpack.c.b16 %v1242, %v1241
        %v1297 = vpack.c.b16 %v1244, %v1243
        %v1298 = vpack.c.b16 %v1246, %v1245
        %v1299 = vpack.c.b16 %v1248, %v1247
        %v1300 = vpack.c.b16 %v1250, %v1249
        %v1301 = vpack.c.b16 %v1252, %v1251
        %v1302 = vpack.c.b16 %v1254, %v1253
        %v1303 = vpack.c.b16 %v1256, %v1255
        %v1304 = vpack.c.b16 %v1258, %v1257
        %v1305 = vpack.c.b16 %v1260, %v1259
        %v1306 = vpack.c.b16 %v1262, %v1261
        %v1307 = vpack.c.b16 %v1264, %v1263
        %v1308 = vpack.c.b16 %v1266, %v1265
        %v1309 = vpack.c.b16 %v1268, %v1267
        %v1310 = vpack.c.b16 %v1269, %v1269
        %vm1351 = vcmask 64512
        %v1352 = vsel %vm1351, %v920, 0
        %v1354 = vsel %vm1351, %v922, 0
        %v1356 = vsel %vm1351, %v924, 0
        %v1358 = vsel %vm1351, %v926, 0
        %vm1360 = vcmask 1043456
        %v1362 = vsel %vm1360, %v1310, 0
        %1364 = vmatpush.bf16.msra.mxu0 %v1277
        %1365 = vmatpush.bf16.msra.mxu0 %v1276
        %1366 = vmatpush.bf16.msra.mxu0 %v1275
        %1367 = vmatpush.bf16.msra.mxu0 %v1274
        %1368 = vmatpush.bf16.msra.mxu0 %v1273
        %1369 = vmatpush.bf16.msra.mxu0 %v1272
        %1370 = vmatpush.bf16.msra.mxu0 %v1271
        %1371 = vmatpush.bf16.msra.mxu0 %v1270
        %1372 = vmatmul.bf16.gmra.mxu0 %v930
        %v1373 = vpop.f32.mrf.mxu0
        %v1374 = vadd.f32 %v1106, %v1373
        %v1375 = vpop.f32.mrf.mxu0
        %v1376 = vadd.f32 %v1106, %v1375
        %1377 = vmatmul.bf16.gmra.mxu0 %v934
        %v1378 = vpop.f32.mrf.mxu0
        %v1379 = vadd.f32 %v1106, %v1378
        %v1380 = vpop.f32.mrf.mxu0
        %v1381 = vadd.f32 %v1106, %v1380
        %1382 = vmatmul.bf16.gmra.mxu0 %v938
        %v1383 = vpop.f32.mrf.mxu0
        %v1384 = vadd.f32 %v1106, %v1383
        %v1385 = vpop.f32.mrf.mxu0
        %v1386 = vadd.f32 %v1106, %v1385
        %1387 = vmatmul.bf16.gmra.mxu0 %v942
        %v1388 = vpop.f32.mrf.mxu0
        %v1389 = vadd.f32 %v1106, %v1388
        %v1390 = vpop.f32.mrf.mxu0
        %v1391 = vadd.f32 %v1106, %v1390
        %1392 = vdwg.mxu0
        %1393 = vmatpush.bf16.msra.mxu0 %v1285
        %1394 = vmatpush.bf16.msra.mxu0 %v1284
        %1395 = vmatpush.bf16.msra.mxu0 %v1283
        %1396 = vmatpush.bf16.msra.mxu0 %v1282
        %1397 = vmatpush.bf16.msra.mxu0 %v1281
        %1398 = vmatpush.bf16.msra.mxu0 %v1280
        %1399 = vmatpush.bf16.msra.mxu0 %v1279
        %1400 = vmatpush.bf16.msra.mxu0 %v1278
        %1401 = vmatmul.bf16.gmra.mxu0 %v955
        %v1402 = vpop.f32.mrf.mxu0
        %v1403 = vadd.f32 %v1374, %v1402
        %v1404 = vpop.f32.mrf.mxu0
        %v1405 = vadd.f32 %v1376, %v1404
        %1406 = vmatmul.bf16.gmra.mxu0 %v958
        %v1407 = vpop.f32.mrf.mxu0
        %v1408 = vadd.f32 %v1379, %v1407
        %v1409 = vpop.f32.mrf.mxu0
        %v1410 = vadd.f32 %v1381, %v1409
        %1411 = vmatmul.bf16.gmra.mxu0 %v961
        %v1412 = vpop.f32.mrf.mxu0
        %v1413 = vadd.f32 %v1384, %v1412
        %v1414 = vpop.f32.mrf.mxu0
        %v1415 = vadd.f32 %v1386, %v1414
        %1416 = vmatmul.bf16.gmra.mxu0 %v964
        %v1417 = vpop.f32.mrf.mxu0
        %v1418 = vadd.f32 %v1389, %v1417
        %v1419 = vpop.f32.mrf.mxu0
        %v1420 = vadd.f32 %v1391, %v1419
        %1421 = vdwg.mxu0
        %1422 = vmatpush.bf16.msra.mxu0 %v1293
        %1423 = vmatpush.bf16.msra.mxu0 %v1292
        %1424 = vmatpush.bf16.msra.mxu0 %v1291
        %1425 = vmatpush.bf16.msra.mxu0 %v1290
        %1426 = vmatpush.bf16.msra.mxu0 %v1289
        %1427 = vmatpush.bf16.msra.mxu0 %v1288
        %1428 = vmatpush.bf16.msra.mxu0 %v1287
        %1429 = vmatpush.bf16.msra.mxu0 %v1286
        %1430 = vmatmul.bf16.gmra.mxu0 %v977
        %v1431 = vpop.f32.mrf.mxu0
        %v1432 = vadd.f32 %v1403, %v1431
        %v1433 = vpop.f32.mrf.mxu0
        %v1434 = vadd.f32 %v1405, %v1433
        %1435 = vmatmul.bf16.gmra.mxu0 %v980
        %v1436 = vpop.f32.mrf.mxu0
        %v1437 = vadd.f32 %v1408, %v1436
        %v1438 = vpop.f32.mrf.mxu0
        %v1439 = vadd.f32 %v1410, %v1438
        %1440 = vmatmul.bf16.gmra.mxu0 %v983
        %v1441 = vpop.f32.mrf.mxu0
        %v1442 = vadd.f32 %v1413, %v1441
        %v1443 = vpop.f32.mrf.mxu0
        %v1444 = vadd.f32 %v1415, %v1443
        %1445 = vmatmul.bf16.gmra.mxu0 %v986
        %v1446 = vpop.f32.mrf.mxu0
        %v1447 = vadd.f32 %v1418, %v1446
        %v1448 = vpop.f32.mrf.mxu0
        %v1449 = vadd.f32 %v1420, %v1448
        %1450 = vdwg.mxu0
        %1451 = vmatpush.bf16.msra.mxu0 %v1301
        %1452 = vmatpush.bf16.msra.mxu0 %v1300
        %1453 = vmatpush.bf16.msra.mxu0 %v1299
        %1454 = vmatpush.bf16.msra.mxu0 %v1298
        %1455 = vmatpush.bf16.msra.mxu0 %v1297
        %1456 = vmatpush.bf16.msra.mxu0 %v1296
        %1457 = vmatpush.bf16.msra.mxu0 %v1295
        %1458 = vmatpush.bf16.msra.mxu0 %v1294
        %1459 = vmatmul.bf16.gmra.mxu0 %v999
        %v1460 = vpop.f32.mrf.mxu0
        %v1461 = vadd.f32 %v1432, %v1460
        %v1462 = vpop.f32.mrf.mxu0
        %v1463 = vadd.f32 %v1434, %v1462
        %1464 = vmatmul.bf16.gmra.mxu0 %v1002
        %v1465 = vpop.f32.mrf.mxu0
        %v1466 = vadd.f32 %v1437, %v1465
        %v1467 = vpop.f32.mrf.mxu0
        %v1468 = vadd.f32 %v1439, %v1467
        %1469 = vmatmul.bf16.gmra.mxu0 %v1005
        %v1470 = vpop.f32.mrf.mxu0
        %v1471 = vadd.f32 %v1442, %v1470
        %v1472 = vpop.f32.mrf.mxu0
        %v1473 = vadd.f32 %v1444, %v1472
        %1474 = vmatmul.bf16.gmra.mxu0 %v1008
        %v1475 = vpop.f32.mrf.mxu0
        %v1476 = vadd.f32 %v1447, %v1475
        %v1477 = vpop.f32.mrf.mxu0
        %v1478 = vadd.f32 %v1449, %v1477
        %1479 = vdwg.mxu0
        %1480 = vmatpush.bf16.msra.mxu0 %v1309
        %1481 = vmatpush.bf16.msra.mxu0 %v1308
        %1482 = vmatpush.bf16.msra.mxu0 %v1307
        %1483 = vmatpush.bf16.msra.mxu0 %v1306
        %1484 = vmatpush.bf16.msra.mxu0 %v1305
        %1485 = vmatpush.bf16.msra.mxu0 %v1304
        %1486 = vmatpush.bf16.msra.mxu0 %v1303
        %1487 = vmatpush.bf16.msra.mxu0 %v1302
        %1488 = vmatmul.bf16.gmra.mxu0 %v1012
        %v1489 = vpop.f32.mrf.mxu0
        %v1490 = vadd.f32 %v1461, %v1489
        %v1491 = vpop.f32.mrf.mxu0
        %v1492 = vadd.f32 %v1463, %v1491
        %1493 = vmatmul.bf16.gmra.mxu0 %v1015
        %v1494 = vpop.f32.mrf.mxu0
        %v1495 = vadd.f32 %v1466, %v1494
        %v1496 = vpop.f32.mrf.mxu0
        %v1497 = vadd.f32 %v1468, %v1496
        %1498 = vmatmul.bf16.gmra.mxu0 %v1018
        %v1499 = vpop.f32.mrf.mxu0
        %v1500 = vadd.f32 %v1471, %v1499
        %v1501 = vpop.f32.mrf.mxu0
        %v1502 = vadd.f32 %v1473, %v1501
        %1503 = vmatmul.bf16.gmra.mxu0 %v1021
        %v1504 = vpop.f32.mrf.mxu0
        %v1505 = vadd.f32 %v1476, %v1504
        %v1506 = vpop.f32.mrf.mxu0
        %v1507 = vadd.f32 %v1478, %v1506
        %1508 = vdwg.mxu0
        %1509 = vmatpush.bf16.msra.mxu0 0
        %1510 = vmatpush.bf16.msra.mxu0 0
        %1511 = vmatpush.bf16.msra.mxu0 0
        %1512 = vmatpush.bf16.msra.mxu0 0
        %1513 = vmatpush.bf16.msra.mxu0 0
        %1514 = vmatpush.bf16.msra.mxu0 0
        %1515 = vmatpush.bf16.msra.mxu0 0
        %1516 = vmatpush.bf16.msra.mxu0 %v1362
        %1517 = vmatmul.bf16.gmra.mxu0 %v1352
        %v1518 = vpop.f32.mrf.mxu0
        %v1519 = vadd.f32 %v1490, %v1518
        %v1520 = vpop.f32.mrf.mxu0
        %v1521 = vadd.f32 %v1492, %v1520
        %1522 = vmatmul.bf16.gmra.mxu0 %v1354
        %v1523 = vpop.f32.mrf.mxu0
        %v1524 = vadd.f32 %v1495, %v1523
        %v1525 = vpop.f32.mrf.mxu0
        %v1526 = vadd.f32 %v1497, %v1525
        %1527 = vmatmul.bf16.gmra.mxu0 %v1356
        %v1528 = vpop.f32.mrf.mxu0
        %v1529 = vadd.f32 %v1500, %v1528
        %v1530 = vpop.f32.mrf.mxu0
        %v1531 = vadd.f32 %v1502, %v1530
        %1532 = vmatmul.bf16.gmra.mxu0 %v1358
        %v1533 = vpop.f32.mrf.mxu0
        %v1534 = vadd.f32 %v1505, %v1533
        %v1535 = vpop.f32.mrf.mxu0
        %v1536 = vadd.f32 %v1507, %v1535
        %1537 = vdwg.mxu0
        %v1538 = vsel %vm966, %v1519, 0.0
        %v1539 = vsel %vm966, %v1521, 0.0
        %v1540 = vadd.f32 %v1538, %v1539
        %v1541 = vsel %vm966, %v1524, 0.0
        %v1542 = vadd.f32 %v1540, %v1541
        %v1543 = vsel %vm966, %v1526, 0.0
        %v1544 = vadd.f32 %v1542, %v1543
        %v1545 = vsel %vm966, %v1529, 0.0
        %v1546 = vadd.f32 %v1544, %v1545
        %v1547 = vsel %vm966, %v1531, 0.0
        %v1548 = vadd.f32 %v1546, %v1547
        %v1549 = vsel %vm966, %v1534, 0.0
        %v1550 = vadd.f32 %v1548, %v1549
        %v1551 = vsel %vm966, %v1536, 0.0
        %v1552 = vadd.f32 %v1550, %v1551
        %v1553 = vrot.slane %v1552, 4
        %v1554 = vadd.f32 %v1552, %v1553
        %v1555 = vrot.slane %v1554, 2
        %v1556 = vadd.f32 %v1554, %v1555
        %v1557 = vrot.slane %v1556, 1
        %v1558 = vadd.f32 %v1556, %v1557
        %v1559 = vmul.f32 %v1558, 0.015625
        %v1560 = vsub.f32 %v1519, %v1559
        %v1561 = vsub.f32 %v1521, %v1559
        %v1562 = vsub.f32 %v1524, %v1559
        %v1563 = vsub.f32 %v1526, %v1559
        %v1564 = vsub.f32 %v1529, %v1559
        %v1565 = vsub.f32 %v1531, %v1559
        %v1566 = vsub.f32 %v1534, %v1559
        %v1567 = vsub.f32 %v1536, %v1559
        %v1568 = vmul.f32 %v1560, %v1560
        %v1569 = vmul.f32 %v1561, %v1561
        %v1570 = vmul.f32 %v1562, %v1562
        %v1571 = vmul.f32 %v1563, %v1563
        %v1572 = vmul.f32 %v1564, %v1564
        %v1573 = vmul.f32 %v1565, %v1565
        %v1574 = vmul.f32 %v1566, %v1566
        %v1575 = vmul.f32 %v1567, %v1567
        %v1576 = vsel %vm966, %v1568, 0.0
        %v1577 = vsel %vm966, %v1569, 0.0
        %v1578 = vadd.f32 %v1576, %v1577
        %v1579 = vsel %vm966, %v1570, 0.0
        %v1580 = vadd.f32 %v1578, %v1579
        %v1581 = vsel %vm966, %v1571, 0.0
        %v1582 = vadd.f32 %v1580, %v1581
        %v1583 = vsel %vm966, %v1572, 0.0
        %v1584 = vadd.f32 %v1582, %v1583
        %v1585 = vsel %vm966, %v1573, 0.0
        %v1586 = vadd.f32 %v1584, %v1585
        %v1587 = vsel %vm966, %v1574, 0.0
        %v1588 = vadd.f32 %v1586, %v1587
        %v1589 = vsel %vm966, %v1575, 0.0
        %v1590 = vadd.f32 %v1588, %v1589
        %v1591 = vrot.slane %v1590, 4
        %v1592 = vadd.f32 %v1590, %v1591
        %v1593 = vrot.slane %v1592, 2
        %v1594 = vadd.f32 %v1592, %v1593
        %v1595 = vrot.slane %v1594, 1
        %v1596 = vadd.f32 %v1594, %v1595
        %v1597 = vmul.f32 %v1596, 0.015625
        %v1598 = vadd.f32 %v1597, 1e-05
        %v1599 = vrsqrt.pop %v1598
        %v1600 = vmul.f32 %v1599, %v1598
        %v1601 = vmul.f32 %v1600, %v1599
        %v1602 = vmul.f32 0.5, %v1601
        %v1603 = vsub.f32 1.5, %v1602
        %v1604 = vmul.f32 %v1599, %v1603
        %vm1605 = vweird.f32 %v1598
        %vm1606 = vweird.f32 %v1599
        %vm1607 = vmor %vm1605, %vm1606
        %v1608 = vsel %vm1607, %v1599, %v1604
        %v1609 = vmul.f32 %v1560, %v1608
        %v1610 = vmul.f32 %v1561, %v1608
        %v1611 = vmul.f32 %v1562, %v1608
        %v1612 = vmul.f32 %v1563, %v1608
        %v1613 = vmul.f32 %v1564, %v1608
        %v1614 = vmul.f32 %v1565, %v1608
        %v1615 = vmul.f32 %v1566, %v1608
        %v1616 = vmul.f32 %v1567, %v1608
        %v1617 = vld [vmem:[%s4] sm:$0x1]
        %v1619 = vperm.slane %v1617, 0
        %v1621 = vmul.f32 %v1609, %v1619
        %v1622 = vmul.f32 %v1610, %v1619
        %v1623 = vmul.f32 %v1611, %v1619
        %v1624 = vmul.f32 %v1612, %v1619
        %v1625 = vmul.f32 %v1613, %v1619
        %v1626 = vmul.f32 %v1614, %v1619
        %v1627 = vmul.f32 %v1615, %v1619
        %v1628 = vmul.f32 %v1616, %v1619
        %v1629 = vld [vmem:[%s5] sm:$0x1]
        %v1631 = vperm.slane %v1629, 0
        %v1633 = vadd.f32 %v1621, %v1631
        %v1634 = vadd.f32 %v1622, %v1631
        %v1635 = vadd.f32 %v1623, %v1631
        %v1636 = vadd.f32 %v1624, %v1631
        %v1637 = vadd.f32 %v1625, %v1631
        %v1638 = vadd.f32 %v1626, %v1631
        %v1639 = vadd.f32 %v1627, %v1631
        %v1640 = vadd.f32 %v1628, %v1631
        %v1641 = vmax.f32 %v1633, 0.0
        %v1642 = vmax.f32 %v1634, 0.0
        %v1643 = vmax.f32 %v1635, 0.0
        %v1644 = vmax.f32 %v1636, 0.0
        %v1645 = vmax.f32 %v1637, 0.0
        %v1646 = vmax.f32 %v1638, 0.0
        %v1647 = vmax.f32 %v1639, 0.0
        %v1648 = vmax.f32 %v1640, 0.0
        %v1649 = vpack.c.bf16 %v1641, %v1641
        %v1650 = vpack.c.bf16 %v1642, %v1642
        %v1651 = vpack.c.bf16 %v1643, %v1643
        %v1652 = vpack.c.bf16 %v1644, %v1644
        %v1653 = vpack.c.bf16 %v1645, %v1645
        %v1654 = vpack.c.bf16 %v1646, %v1646
        %v1655 = vpack.c.bf16 %v1647, %v1647
        %v1656 = vpack.c.bf16 %v1648, %v1648
        %v1665 = vunpack.c.l.b16 %v1649
        %v1666 = vunpack.c.l.b16 %v1650
        %v1667 = vunpack.c.l.b16 %v1651
        %v1668 = vunpack.c.l.b16 %v1652
        %v1669 = vunpack.c.l.b16 %v1653
        %v1670 = vunpack.c.l.b16 %v1654
        %v1671 = vunpack.c.l.b16 %v1655
        %v1672 = vunpack.c.l.b16 %v1656
        %v1673 = vpack.c.b16 %v1665, %v1665
        %v1674 = vpack.c.b16 %v1666, %v1666
        %v1675 = vpack.c.b16 %v1667, %v1667
        %v1676 = vpack.c.b16 %v1668, %v1668
        %v1677 = vpack.c.b16 %v1669, %v1669
        %v1678 = vpack.c.b16 %v1670, %v1670
        %v1679 = vpack.c.b16 %v1671, %v1671
        %v1680 = vpack.c.b16 %v1672, %v1672
        %v1682 = vshrl.u32 %v1673, 16
        %v1684 = vrot.slane %v1682, 7
        %v1685 = vshll.u32 %v1673, 16
        %v1687 = vor.u32 %v1684, %v1685
        %v1689 = vshrl.u32 %v1674, 16
        %v1691 = vrot.slane %v1689, 7
        %v1692 = vshll.u32 %v1674, 16
        %v1694 = vor.u32 %v1691, %v1692
        %v1696 = vshrl.u32 %v1675, 16
        %v1698 = vrot.slane %v1696, 7
        %v1699 = vshll.u32 %v1675, 16
        %v1701 = vor.u32 %v1698, %v1699
        %v1703 = vshrl.u32 %v1676, 16
        %v1705 = vrot.slane %v1703, 7
        %v1706 = vshll.u32 %v1676, 16
        %v1708 = vor.u32 %v1705, %v1706
        %v1710 = vshrl.u32 %v1677, 16
        %v1712 = vrot.slane %v1710, 7
        %v1713 = vshll.u32 %v1677, 16
        %v1715 = vor.u32 %v1712, %v1713
        %v1717 = vshrl.u32 %v1678, 16
        %v1719 = vrot.slane %v1717, 7
        %v1720 = vshll.u32 %v1678, 16
        %v1722 = vor.u32 %v1719, %v1720
        %v1724 = vshrl.u32 %v1679, 16
        %v1726 = vrot.slane %v1724, 7
        %v1727 = vshll.u32 %v1679, 16
        %v1729 = vor.u32 %v1726, %v1727
        %v1731 = vshrl.u32 %v1680, 16
        %v1733 = vrot.slane %v1731, 7
        %v1734 = vshll.u32 %v1680, 16
        %v1736 = vor.u32 %v1733, %v1734
        %v1745 = vsel %vm585, 0, %v1687
        %v1746 = vsel %vm585, 0, %v1694
        %v1747 = vsel %vm585, 0, %v1701
        %v1748 = vsel %vm585, 0, %v1708
        %v1749 = vsel %vm585, 0, %v1715
        %v1750 = vsel %vm585, 0, %v1722
        %v1751 = vsel %vm585, 0, %v1729
        %v1752 = vsel %vm585, 0, %v1736
        %v1753 = vsel %vm596, %v1745, 0
        %v1754 = vsel %vm596, %v1746, 0
        %v1755 = vsel %vm596, %v1747, 0
        %v1756 = vsel %vm596, %v1748, 0
        %v1757 = vsel %vm596, %v1749, 0
        %v1758 = vsel %vm596, %v1750, 0
        %v1759 = vsel %vm596, %v1751, 0
        %v1760 = vsel %vm596, %v1752, 0
        %v1768 = vunpack.c.l.b16 %v1753
        %v1769 = vunpack.c.h.b16 %v1753
        %v1770 = vunpack.c.l.b16 %v1754
        %v1771 = vunpack.c.h.b16 %v1754
        %v1772 = vunpack.c.l.b16 %v1755
        %v1773 = vunpack.c.h.b16 %v1755
        %v1774 = vunpack.c.l.b16 %v1756
        %v1775 = vunpack.c.h.b16 %v1756
        %v1776 = vunpack.c.l.b16 %v1757
        %v1777 = vunpack.c.h.b16 %v1757
        %v1778 = vunpack.c.l.b16 %v1758
        %v1779 = vunpack.c.h.b16 %v1758
        %v1780 = vunpack.c.l.b16 %v1759
        %v1781 = vunpack.c.h.b16 %v1759
        %v1782 = vpack.c.b16 %v1768, %v1768
        %v1783 = vpack.c.b16 %v1769, %v1769
        %v1784 = vpack.c.b16 %v1770, %v1770
        %v1785 = vpack.c.b16 %v1771, %v1771
        %v1786 = vpack.c.b16 %v1772, %v1772
        %v1787 = vpack.c.b16 %v1773, %v1773
        %v1788 = vpack.c.b16 %v1774, %v1774
        %v1789 = vpack.c.b16 %v1775, %v1775
        %v1790 = vpack.c.b16 %v1776, %v1776
        %v1791 = vpack.c.b16 %v1777, %v1777
        %v1792 = vpack.c.b16 %v1778, %v1778
        %v1793 = vpack.c.b16 %v1779, %v1779
        %v1794 = vpack.c.b16 %v1780, %v1780
        %v1795 = vpack.c.b16 %v1781, %v1781
        %v1797 = vshrl.u32 %v1782, 16
        %v1799 = vrot.slane %v1797, 4
        %v1800 = vshll.u32 %v1782, 16
        %v1802 = vrot.slane %v1800, 5
        %v1803 = vor.u32 %v1799, %v1802
        %v1804 = vrot.slane %v1803, 4
        %v1806 = vshll.u32 %v1783, 16
        %v1808 = vrot.slane %v1806, 5
        %v1809 = vsel %vm647, %v1804, %v1808
        %v1811 = vshrl.u32 %v1784, 16
        %v1813 = vrot.slane %v1811, 4
        %v1814 = vshll.u32 %v1784, 16
        %v1816 = vrot.slane %v1814, 5
        %v1817 = vor.u32 %v1813, %v1816
        %v1818 = vrot.slane %v1817, 4
        %v1820 = vshll.u32 %v1785, 16
        %v1822 = vrot.slane %v1820, 5
        %v1823 = vsel %vm647, %v1818, %v1822
        %v1825 = vshrl.u32 %v1786, 16
        %v1827 = vrot.slane %v1825, 4
        %v1828 = vshll.u32 %v1786, 16
        %v1830 = vrot.slane %v1828, 5
        %v1831 = vor.u32 %v1827, %v1830
        %v1832 = vrot.slane %v1831, 4
        %v1834 = vshll.u32 %v1787, 16
        %v1836 = vrot.slane %v1834, 5
        %v1837 = vsel %vm647, %v1832, %v1836
        %v1839 = vshrl.u32 %v1788, 16
        %v1841 = vrot.slane %v1839, 4
        %v1842 = vshll.u32 %v1788, 16
        %v1844 = vrot.slane %v1842, 5
        %v1845 = vor.u32 %v1841, %v1844
        %v1846 = vrot.slane %v1845, 4
        %v1848 = vshll.u32 %v1789, 16
        %v1850 = vrot.slane %v1848, 5
        %v1851 = vsel %vm647, %v1846, %v1850
        %v1853 = vshrl.u32 %v1790, 16
        %v1855 = vrot.slane %v1853, 4
        %v1856 = vshll.u32 %v1790, 16
        %v1858 = vrot.slane %v1856, 5
        %v1859 = vor.u32 %v1855, %v1858
        %v1860 = vrot.slane %v1859, 4
        %v1862 = vshll.u32 %v1791, 16
        %v1864 = vrot.slane %v1862, 5
        %v1865 = vsel %vm647, %v1860, %v1864
        %v1867 = vshrl.u32 %v1792, 16
        %v1869 = vrot.slane %v1867, 4
        %v1870 = vshll.u32 %v1792, 16
        %v1872 = vrot.slane %v1870, 5
        %v1873 = vor.u32 %v1869, %v1872
        %v1874 = vrot.slane %v1873, 4
        %v1876 = vshll.u32 %v1793, 16
        %v1878 = vrot.slane %v1876, 5
        %v1879 = vsel %vm647, %v1874, %v1878
        %v1881 = vshrl.u32 %v1794, 16
        %v1883 = vrot.slane %v1881, 4
        %v1884 = vshll.u32 %v1794, 16
        %v1886 = vrot.slane %v1884, 5
        %v1887 = vor.u32 %v1883, %v1886
        %v1888 = vrot.slane %v1887, 4
        %v1890 = vshll.u32 %v1795, 16
        %v1892 = vrot.slane %v1890, 5
        %v1893 = vsel %vm647, %v1888, %v1892
        %v1894 = vrot.slane %v1782, 5
        %v1895 = vrot.slane %v1894, 4
        %v1896 = vrot.slane %v1783, 5
        %v1897 = vsel %vm762, %v1895, %v1896
        %v1898 = vrot.slane %v1784, 5
        %v1899 = vrot.slane %v1898, 4
        %v1900 = vrot.slane %v1785, 5
        %v1901 = vsel %vm762, %v1899, %v1900
        %v1902 = vrot.slane %v1786, 5
        %v1903 = vrot.slane %v1902, 4
        %v1904 = vrot.slane %v1787, 5
        %v1905 = vsel %vm762, %v1903, %v1904
        %v1906 = vrot.slane %v1788, 5
        %v1907 = vrot.slane %v1906, 4
        %v1908 = vrot.slane %v1789, 5
        %v1909 = vsel %vm762, %v1907, %v1908
        %v1910 = vrot.slane %v1790, 5
        %v1911 = vrot.slane %v1910, 4
        %v1912 = vrot.slane %v1791, 5
        %v1913 = vsel %vm762, %v1911, %v1912
        %v1914 = vrot.slane %v1792, 5
        %v1915 = vrot.slane %v1914, 4
        %v1916 = vrot.slane %v1793, 5
        %v1917 = vsel %vm762, %v1915, %v1916
        %v1918 = vrot.slane %v1794, 5
        %v1919 = vrot.slane %v1918, 4
        %v1920 = vrot.slane %v1795, 5
        %v1921 = vsel %vm762, %v1919, %v1920
        %v1923 = vunpack.c.l.b16 %v1760
        %v1924 = vunpack.c.h.b16 %v1760
        %v1925 = vpack.c.b16 %v1923, %v1923
        %v1926 = vpack.c.b16 %v1924, %v1924
        %v1928 = vshrl.u32 %v1925, 16
        %v1930 = vrot.slane %v1928, 4
        %v1931 = vshll.u32 %v1925, 16
        %v1933 = vrot.slane %v1931, 5
        %v1934 = vor.u32 %v1930, %v1933
        %v1935 = vrot.slane %v1934, 4
        %v1937 = vshll.u32 %v1926, 16
        %v1939 = vrot.slane %v1937, 5
        %v1940 = vsel %vm647, %v1935, %v1939
        %v1941 = vrot.slane %v1925, 5
        %v1942 = vrot.slane %v1941, 4
        %v1943 = vrot.slane %v1926, 5
        %v1944 = vsel %vm762, %v1942, %v1943
        %v1945 = vpack.c.b16 %v1768, %v613
        %v1946 = vpack.c.b16 %v1772, %v1770
        %v1947 = vpack.c.b16 %v1776, %v1774
        %v1948 = vpack.c.b16 %v1780, %v1778
        %v1949 = vunpack.c.l.b16 %v1809
        %v1950 = vunpack.c.l.b16 %v1823
        %v1951 = vunpack.c.l.b16 %v1837
        %v1952 = vunpack.c.l.b16 %v1851
        %v1953 = vunpack.c.l.b16 %v1865
        %v1954 = vunpack.c.l.b16 %v1879
        %v1955 = vunpack.c.l.b16 %v1893
        %v1956 = vpack.c.b16 %v1949, %v822
        %v1957 = vpack.c.b16 %v1951, %v1950
        %v1958 = vpack.c.b16 %v1953, %v1952
        %v1959 = vpack.c.b16 %v1955, %v1954
        %1960 = vrot.lane.b32.xlu0 %v1956, 32
        %v1961 = vpop.permute.xlu0 %1960
        %1962 = vrot.lane.b32.xlu0 %v1957, 32
        %v1963 = vpop.permute.xlu0 %1962
        %1964 = vrot.lane.b32.xlu0 %v1958, 32
        %v1965 = vpop.permute.xlu0 %1964
        %1966 = vrot.lane.b32.xlu0 %v1959, 32
        %v1967 = vpop.permute.xlu0 %1966
        %v1968 = vunpack.c.l.b16 %v1897
        %v1969 = vunpack.c.l.b16 %v1901
        %v1970 = vunpack.c.l.b16 %v1905
        %v1971 = vunpack.c.l.b16 %v1909
        %v1972 = vunpack.c.l.b16 %v1913
        %v1973 = vunpack.c.l.b16 %v1917
        %v1974 = vunpack.c.l.b16 %v1921
        %v1975 = vpack.c.b16 %v1968, %v842
        %v1976 = vpack.c.b16 %v1970, %v1969
        %v1977 = vpack.c.b16 %v1972, %v1971
        %v1978 = vpack.c.b16 %v1974, %v1973
        %1979 = vrot.lane.b32.xlu0 %v1975, 64
        %v1980 = vpop.permute.xlu0 %1979
        %1981 = vrot.lane.b32.xlu0 %v1976, 64
        %v1982 = vpop.permute.xlu0 %1981
        %1983 = vrot.lane.b32.xlu0 %v1977, 64
        %v1984 = vpop.permute.xlu0 %1983
        %1985 = vrot.lane.b32.xlu0 %v1978, 64
        %v1986 = vpop.permute.xlu0 %1985
        %v1987 = vpack.c.b16 %v1770, %v1768
        %v1988 = vpack.c.b16 %v1774, %v1772
        %v1989 = vpack.c.b16 %v1778, %v1776
        %v1990 = vpack.c.b16 %v1923, %v1780
        %1991 = vrot.lane.b32.xlu0 %v1987, 96
        %v1992 = vpop.permute.xlu0 %1991
        %1993 = vrot.lane.b32.xlu0 %v1988, 96
        %v1994 = vpop.permute.xlu0 %1993
        %1995 = vrot.lane.b32.xlu0 %v1989, 96
        %v1996 = vpop.permute.xlu0 %1995
        %1997 = vrot.lane.b32.xlu0 %v1990, 96
        %v1998 = vpop.permute.xlu0 %1997
        %v1999 = vunpack.c.l.b16 %v1940
        %v2000 = vpack.c.b16 %v1950, %v1949
        %v2001 = vpack.c.b16 %v1952, %v1951
        %v2002 = vpack.c.b16 %v1954, %v1953
        %v2003 = vpack.c.b16 %v1999, %v1955
        %v2004 = vunpack.c.l.b16 %v1944
        %v2005 = vpack.c.b16 %v1969, %v1968
        %v2006 = vpack.c.b16 %v1971, %v1970
        %v2007 = vpack.c.b16 %v1973, %v1972
        %v2008 = vpack.c.b16 %v2004, %v1974
        %2009 = vrot.lane.b32.xlu0 %v2005, 32
        %v2010 = vpop.permute.xlu0 %2009
        %2011 = vrot.lane.b32.xlu0 %v2006, 32
        %v2012 = vpop.permute.xlu0 %2011
        %2013 = vrot.lane.b32.xlu0 %v2007, 32
        %v2014 = vpop.permute.xlu0 %2013
        %2015 = vrot.lane.b32.xlu0 %v2008, 32
        %v2016 = vpop.permute.xlu0 %2015
        %v2017 = vpack.c.b16 %v613, %v1923
        %2018 = vrot.lane.b32.xlu0 %v1946, 64
        %v2019 = vpop.permute.xlu0 %2018
        %2020 = vrot.lane.b32.xlu0 %v1947, 64
        %v2021 = vpop.permute.xlu0 %2020
        %2022 = vrot.lane.b32.xlu0 %v1948, 64
        %v2023 = vpop.permute.xlu0 %2022
        %2024 = vrot.lane.b32.xlu0 %v2017, 64
        %v2025 = vpop.permute.xlu0 %2024
        %v2026 = vpack.c.b16 %v822, %v1999
        %2027 = vrot.lane.b32.xlu0 %v1957, 96
        %v2028 = vpop.permute.xlu0 %2027
        %2029 = vrot.lane.b32.xlu0 %v1958, 96
        %v2030 = vpop.permute.xlu0 %2029
        %2031 = vrot.lane.b32.xlu0 %v1959, 96
        %v2032 = vpop.permute.xlu0 %2031
        %2033 = vrot.lane.b32.xlu0 %v2026, 96
        %v2034 = vpop.permute.xlu0 %2033
        %v2035 = vpack.c.b16 %v842, %v2004
        %v2038 = vsel %vm966, %v1945, %v1961
        %v2041 = vsel %vm966, %v1946, %v1963
        %v2044 = vsel %vm966, %v1947, %v1965
        %v2047 = vsel %vm966, %v1948, %v1967
        %v2049 = vsel %vm1010, %v2038, %v1980
        %v2051 = vsel %vm1010, %v2041, %v1982
        %v2053 = vsel %vm1010, %v2044, %v1984
        %v2055 = vsel %vm1010, %v2047, %v1986
        %vm2056 = vcmask 785408
        %v2058 = vsel %vm2056, %v2049, %v1992
        %v2061 = vsel %vm2056, %v2051, %v1994
        %v2064 = vsel %vm2056, %v2053, %v1996
        %v2067 = vsel %vm2056, %v2055, %v1998
        %v2071 = vsel %vm966, %v2000, %v2010
        %v2074 = vsel %vm966, %v2001, %v2012
        %v2077 = vsel %vm966, %v2002, %v2014
        %v2080 = vsel %vm966, %v2003, %v2016
        %v2082 = vsel %vm1010, %v2071, %v2019
        %v2084 = vsel %vm1010, %v2074, %v2021
        %v2086 = vsel %vm1010, %v2077, %v2023
        %v2088 = vsel %vm1010, %v2080, %v2025
        %v2090 = vsel %vm2056, %v2082, %v2028
        %v2093 = vsel %vm2056, %v2084, %v2030
        %v2096 = vsel %vm2056, %v2086, %v2032
        %v2099 = vsel %vm2056, %v2088, %v2034
        %v2101 = vld [vmem:[%s6] sm:$0xf]
        %v2102 = vld [vmem:[%s6 + $0x4] sm:$0xf]
        %v2103 = vld [vmem:[%s6 + $0x8] sm:$0xf]
        %v2104 = vld [vmem:[%s6 + $0xc] sm:$0xf]
        %v2105 = vld [vmem:[%s6 + $0x10] sm:$0xf]
        %v2106 = vld [vmem:[%s6 + $0x14] sm:$0xf]
        %v2107 = vld [vmem:[%s6 + $0x18] sm:$0xf]
        %v2108 = vld [vmem:[%s6 + $0x1c] sm:$0xf]
        %v2109 = vld [vmem:[%s6 + $0x20] sm:$0xf]
        %v2110 = vld [vmem:[%s6 + $0x24] sm:$0xf]
        %v2111 = vld [vmem:[%s6 + $0x28] sm:$0xf]
        %v2112 = vld [vmem:[%s6 + $0x2c] sm:$0xf]
        %v2113 = vld [vmem:[%s6 + $0x30] sm:$0xf]
        %v2114 = vld [vmem:[%s6 + $0x34] sm:$0xf]
        %v2115 = vld [vmem:[%s6 + $0x38] sm:$0xf]
        %v2116 = vld [vmem:[%s6 + $0x3c] sm:$0xf]
        %v2117 = vld [vmem:[%s6 + $0x40] sm:$0xf]
        %v2118 = vld [vmem:[%s6 + $0x44] sm:$0xf]
        %v2119 = vld [vmem:[%s6 + $0x48] sm:$0xf]
        %v2120 = vld [vmem:[%s6 + $0x4c] sm:$0xf]
        %v2121 = vld [vmem:[%s6 + $0x50] sm:$0xf]
        %v2122 = vld [vmem:[%s6 + $0x54] sm:$0xf]
        %v2123 = vld [vmem:[%s6 + $0x58] sm:$0xf]
        %v2124 = vld [vmem:[%s6 + $0x5c] sm:$0xf]
        %v2125 = vld [vmem:[%s6 + $0x60] sm:$0xf]
        %v2126 = vld [vmem:[%s6 + $0x64] sm:$0xf]
        %v2127 = vld [vmem:[%s6 + $0x68] sm:$0xf]
        %v2128 = vld [vmem:[%s6 + $0x6c] sm:$0xf]
        %v2129 = vld [vmem:[%s6 + $0x70] sm:$0xf]
        %v2130 = vld [vmem:[%s6 + $0x74] sm:$0xf]
        %v2131 = vld [vmem:[%s6 + $0x78] sm:$0xf]
        %v2132 = vld [vmem:[%s6 + $0x7c] sm:$0xf]
        %v2133 = vld [vmem:[%s6 + $0x80] sm:$0xf]
        %v2134 = vld [vmem:[%s6 + $0x84] sm:$0xf]
        %v2135 = vld [vmem:[%s6 + $0x88] sm:$0xf]
        %v2136 = vld [vmem:[%s6 + $0x8c] sm:$0xf]
        %v2137 = vld [vmem:[%s7] sm:$0x1]
        %v2139 = vperm.slane %v2137, 0
        %v2177 = vunpack.c.l.b16 %v2101
        %v2178 = vunpack.c.l.b16 %v2102
        %v2179 = vunpack.c.l.b16 %v2103
        %v2180 = vunpack.c.l.b16 %v2104
        %v2181 = vunpack.c.l.b16 %v2105
        %v2182 = vunpack.c.l.b16 %v2106
        %v2183 = vunpack.c.l.b16 %v2107
        %v2184 = vunpack.c.l.b16 %v2108
        %v2185 = vunpack.c.l.b16 %v2109
        %v2186 = vunpack.c.l.b16 %v2110
        %v2187 = vunpack.c.l.b16 %v2111
        %v2188 = vunpack.c.l.b16 %v2112
        %v2189 = vunpack.c.l.b16 %v2113
        %v2190 = vunpack.c.l.b16 %v2114
        %v2191 = vunpack.c.l.b16 %v2115
        %v2192 = vunpack.c.l.b16 %v2116
        %v2193 = vunpack.c.l.b16 %v2117
        %v2194 = vunpack.c.l.b16 %v2118
        %v2195 = vunpack.c.l.b16 %v2119
        %v2196 = vunpack.c.l.b16 %v2120
        %v2197 = vunpack.c.l.b16 %v2121
        %v2198 = vunpack.c.l.b16 %v2122
        %v2199 = vunpack.c.l.b16 %v2123
        %v2200 = vunpack.c.l.b16 %v2124
        %v2201 = vunpack.c.l.b16 %v2125
        %v2202 = vunpack.c.l.b16 %v2126
        %v2203 = vunpack.c.l.b16 %v2127
        %v2204 = vunpack.c.l.b16 %v2128
        %v2205 = vunpack.c.l.b16 %v2129
        %v2206 = vunpack.c.l.b16 %v2130
        %v2207 = vunpack.c.l.b16 %v2131
        %v2208 = vunpack.c.l.b16 %v2132
        %v2209 = vunpack.c.l.b16 %v2133
        %v2210 = vunpack.c.l.b16 %v2134
        %v2211 = vunpack.c.l.b16 %v2135
        %v2212 = vunpack.c.l.b16 %v2136
        %v2213 = vpack.c.b16 %v2178, %v2177
        %v2214 = vpack.c.b16 %v2180, %v2179
        %v2215 = vpack.c.b16 %v2182, %v2181
        %v2216 = vpack.c.b16 %v2184, %v2183
        %v2217 = vpack.c.b16 %v2186, %v2185
        %v2218 = vpack.c.b16 %v2188, %v2187
        %v2219 = vpack.c.b16 %v2190, %v2189
        %v2220 = vpack.c.b16 %v2192, %v2191
        %v2221 = vpack.c.b16 %v2194, %v2193
        %v2222 = vpack.c.b16 %v2196, %v2195
        %v2223 = vpack.c.b16 %v2198, %v2197
        %v2224 = vpack.c.b16 %v2200, %v2199
        %v2225 = vpack.c.b16 %v2202, %v2201
        %v2226 = vpack.c.b16 %v2204, %v2203
        %v2227 = vpack.c.b16 %v2206, %v2205
        %v2228 = vpack.c.b16 %v2208, %v2207
        %v2229 = vpack.c.b16 %v2210, %v2209
        %v2230 = vpack.c.b16 %v2212, %v2211
        %v2250 = vsel %vm966, %v1976, 0
        %v2253 = vsel %vm966, %v1977, 0
        %v2256 = vsel %vm966, %v1978, 0
        %v2259 = vsel %vm966, %v2035, 0
        %2261 = vmatpush.bf16.msra.mxu0 %v2220
        %2262 = vmatpush.bf16.msra.mxu0 %v2219
        %2263 = vmatpush.bf16.msra.mxu0 %v2218
        %2264 = vmatpush.bf16.msra.mxu0 %v2217
        %2265 = vmatpush.bf16.msra.mxu0 %v2216
        %2266 = vmatpush.bf16.msra.mxu0 %v2215
        %2267 = vmatpush.bf16.msra.mxu0 %v2214
        %2268 = vmatpush.bf16.msra.mxu0 %v2213
        %2269 = vmatmul.bf16.gmra.mxu0 %v2058
        %v2270 = vpop.f32.mrf.mxu0
        %v2271 = vadd.f32 %v2139, %v2270
        %v2272 = vpop.f32.mrf.mxu0
        %v2273 = vadd.f32 %v2139, %v2272
        %2274 = vmatmul.bf16.gmra.mxu0 %v2061
        %v2275 = vpop.f32.mrf.mxu0
        %v2276 = vadd.f32 %v2139, %v2275
        %v2277 = vpop.f32.mrf.mxu0
        %v2278 = vadd.f32 %v2139, %v2277
        %2279 = vmatmul.bf16.gmra.mxu0 %v2064
        %v2280 = vpop.f32.mrf.mxu0
        %v2281 = vadd.f32 %v2139, %v2280
        %v2282 = vpop.f32.mrf.mxu0
        %v2283 = vadd.f32 %v2139, %v2282
        %2284 = vmatmul.bf16.gmra.mxu0 %v2067
        %v2285 = vpop.f32.mrf.mxu0
        %v2286 = vadd.f32 %v2139, %v2285
        %v2287 = vpop.f32.mrf.mxu0
        %v2288 = vadd.f32 %v2139, %v2287
        %2289 = vdwg.mxu0
        %2290 = vmatpush.bf16.msra.mxu0 %v2228
        %2291 = vmatpush.bf16.msra.mxu0 %v2227
        %2292 = vmatpush.bf16.msra.mxu0 %v2226
        %2293 = vmatpush.bf16.msra.mxu0 %v2225
        %2294 = vmatpush.bf16.msra.mxu0 %v2224
        %2295 = vmatpush.bf16.msra.mxu0 %v2223
        %2296 = vmatpush.bf16.msra.mxu0 %v2222
        %2297 = vmatpush.bf16.msra.mxu0 %v2221
        %2298 = vmatmul.bf16.gmra.mxu0 %v2090
        %v2299 = vpop.f32.mrf.mxu0
        %v2300 = vadd.f32 %v2271, %v2299
        %v2301 = vpop.f32.mrf.mxu0
        %v2302 = vadd.f32 %v2273, %v2301
        %2303 = vmatmul.bf16.gmra.mxu0 %v2093
        %v2304 = vpop.f32.mrf.mxu0
        %v2305 = vadd.f32 %v2276, %v2304
        %v2306 = vpop.f32.mrf.mxu0
        %v2307 = vadd.f32 %v2278, %v2306
        %2308 = vmatmul.bf16.gmra.mxu0 %v2096
        %v2309 = vpop.f32.mrf.mxu0
        %v2310 = vadd.f32 %v2281, %v2309
        %v2311 = vpop.f32.mrf.mxu0
        %v2312 = vadd.f32 %v2283, %v2311
        %2313 = vmatmul.bf16.gmra.mxu0 %v2099
        %v2314 = vpop.f32.mrf.mxu0
        %v2315 = vadd.f32 %v2286, %v2314
        %v2316 = vpop.f32.mrf.mxu0
        %v2317 = vadd.f32 %v2288, %v2316
        %2318 = vdwg.mxu0
        %2319 = vmatpush.bf16.msra.mxu0 0
        %2320 = vmatpush.bf16.msra.mxu0 0
        %2321 = vmatpush.bf16.msra.mxu0 0
        %2322 = vmatpush.bf16.msra.mxu0 0
        %2323 = vmatpush.bf16.msra.mxu0 0
        %2324 = vmatpush.bf16.msra.mxu0 0
        %2325 = vmatpush.bf16.msra.mxu0 %v2230
        %2326 = vmatpush.bf16.msra.mxu0 %v2229
        %2327 = vmatmul.bf16.gmra.mxu0 %v2250
        %v2328 = vpop.f32.mrf.mxu0
        %v2329 = vadd.f32 %v2300, %v2328
        %v2330 = vpop.f32.mrf.mxu0
        %v2331 = vadd.f32 %v2302, %v2330
        %2332 = vmatmul.bf16.gmra.mxu0 %v2253
        %v2333 = vpop.f32.mrf.mxu0
        %v2334 = vadd.f32 %v2305, %v2333
        %v2335 = vpop.f32.mrf.mxu0
        %v2336 = vadd.f32 %v2307, %v2335
        %2337 = vmatmul.bf16.gmra.mxu0 %v2256
        %v2338 = vpop.f32.mrf.mxu0
        %v2339 = vadd.f32 %v2310, %v2338
        %v2340 = vpop.f32.mrf.mxu0
        %v2341 = vadd.f32 %v2312, %v2340
        %2342 = vmatmul.bf16.gmra.mxu0 %v2259
        %v2343 = vpop.f32.mrf.mxu0
        %v2344 = vadd.f32 %v2315, %v2343
        %v2345 = vpop.f32.mrf.mxu0
        %v2346 = vadd.f32 %v2317, %v2345
        %2347 = vdwg.mxu0
        %v2348 = vsel %vm966, %v2329, 0.0
        %v2349 = vsel %vm966, %v2331, 0.0
        %v2350 = vadd.f32 %v2348, %v2349
        %v2351 = vsel %vm966, %v2334, 0.0
        %v2352 = vadd.f32 %v2350, %v2351
        %v2353 = vsel %vm966, %v2336, 0.0
        %v2354 = vadd.f32 %v2352, %v2353
        %v2355 = vsel %vm966, %v2339, 0.0
        %v2356 = vadd.f32 %v2354, %v2355
        %v2357 = vsel %vm966, %v2341, 0.0
        %v2358 = vadd.f32 %v2356, %v2357
        %v2359 = vsel %vm966, %v2344, 0.0
        %v2360 = vadd.f32 %v2358, %v2359
        %v2361 = vsel %vm966, %v2346, 0.0
        %v2362 = vadd.f32 %v2360, %v2361
        %v2363 = vrot.slane %v2362, 4
        %v2364 = vadd.f32 %v2362, %v2363
        %v2365 = vrot.slane %v2364, 2
        %v2366 = vadd.f32 %v2364, %v2365
        %v2367 = vrot.slane %v2366, 1
        %v2368 = vadd.f32 %v2366, %v2367
        %v2369 = vmul.f32 %v2368, 0.015625
        %v2370 = vsub.f32 %v2329, %v2369
        %v2371 = vsub.f32 %v2331, %v2369
        %v2372 = vsub.f32 %v2334, %v2369
        %v2373 = vsub.f32 %v2336, %v2369
        %v2374 = vsub.f32 %v2339, %v2369
        %v2375 = vsub.f32 %v2341, %v2369
        %v2376 = vsub.f32 %v2344, %v2369
        %v2377 = vsub.f32 %v2346, %v2369
        %v2378 = vmul.f32 %v2370, %v2370
        %v2379 = vmul.f32 %v2371, %v2371
        %v2380 = vmul.f32 %v2372, %v2372
        %v2381 = vmul.f32 %v2373, %v2373
        %v2382 = vmul.f32 %v2374, %v2374
        %v2383 = vmul.f32 %v2375, %v2375
        %v2384 = vmul.f32 %v2376, %v2376
        %v2385 = vmul.f32 %v2377, %v2377
        %v2386 = vsel %vm966, %v2378, 0.0
        %v2387 = vsel %vm966, %v2379, 0.0
        %v2388 = vadd.f32 %v2386, %v2387
        %v2389 = vsel %vm966, %v2380, 0.0
        %v2390 = vadd.f32 %v2388, %v2389
        %v2391 = vsel %vm966, %v2381, 0.0
        %v2392 = vadd.f32 %v2390, %v2391
        %v2393 = vsel %vm966, %v2382, 0.0
        %v2394 = vadd.f32 %v2392, %v2393
        %v2395 = vsel %vm966, %v2383, 0.0
        %v2396 = vadd.f32 %v2394, %v2395
        %v2397 = vsel %vm966, %v2384, 0.0
        %v2398 = vadd.f32 %v2396, %v2397
        %v2399 = vsel %vm966, %v2385, 0.0
        %v2400 = vadd.f32 %v2398, %v2399
        %v2401 = vrot.slane %v2400, 4
        %v2402 = vadd.f32 %v2400, %v2401
        %v2403 = vrot.slane %v2402, 2
        %v2404 = vadd.f32 %v2402, %v2403
        %v2405 = vrot.slane %v2404, 1
        %v2406 = vadd.f32 %v2404, %v2405
        %v2407 = vmul.f32 %v2406, 0.015625
        %v2408 = vadd.f32 %v2407, 1e-05
        %v2409 = vrsqrt.pop %v2408
        %v2410 = vmul.f32 %v2409, %v2408
        %v2411 = vmul.f32 %v2410, %v2409
        %v2412 = vmul.f32 0.5, %v2411
        %v2413 = vsub.f32 1.5, %v2412
        %v2414 = vmul.f32 %v2409, %v2413
        %vm2415 = vweird.f32 %v2408
        %vm2416 = vweird.f32 %v2409
        %vm2417 = vmor %vm2415, %vm2416
        %v2418 = vsel %vm2417, %v2409, %v2414
        %v2419 = vmul.f32 %v2370, %v2418
        %v2420 = vmul.f32 %v2371, %v2418
        %v2421 = vmul.f32 %v2372, %v2418
        %v2422 = vmul.f32 %v2373, %v2418
        %v2423 = vmul.f32 %v2374, %v2418
        %v2424 = vmul.f32 %v2375, %v2418
        %v2425 = vmul.f32 %v2376, %v2418
        %v2426 = vmul.f32 %v2377, %v2418
        %v2427 = vld [vmem:[%s8] sm:$0x1]
        %v2429 = vperm.slane %v2427, 0
        %v2431 = vmul.f32 %v2419, %v2429
        %v2432 = vmul.f32 %v2420, %v2429
        %v2433 = vmul.f32 %v2421, %v2429
        %v2434 = vmul.f32 %v2422, %v2429
        %v2435 = vmul.f32 %v2423, %v2429
        %v2436 = vmul.f32 %v2424, %v2429
        %v2437 = vmul.f32 %v2425, %v2429
        %v2438 = vmul.f32 %v2426, %v2429
        %v2439 = vld [vmem:[%s9] sm:$0x1]
        %v2441 = vperm.slane %v2439, 0
        %v2443 = vadd.f32 %v2431, %v2441
        %v2444 = vadd.f32 %v2432, %v2441
        %v2445 = vadd.f32 %v2433, %v2441
        %v2446 = vadd.f32 %v2434, %v2441
        %v2447 = vadd.f32 %v2435, %v2441
        %v2448 = vadd.f32 %v2436, %v2441
        %v2449 = vadd.f32 %v2437, %v2441
        %v2450 = vadd.f32 %v2438, %v2441
        %v2451 = vmax.f32 %v2443, 0.0
        %v2452 = vmax.f32 %v2444, 0.0
        %v2453 = vmax.f32 %v2445, 0.0
        %v2454 = vmax.f32 %v2446, 0.0
        %v2455 = vmax.f32 %v2447, 0.0
        %v2456 = vmax.f32 %v2448, 0.0
        %v2457 = vmax.f32 %v2449, 0.0
        %v2458 = vmax.f32 %v2450, 0.0
        %v2459 = vcvt.s32.f32 0
        %v2460 = vcvt.s32.f32 1
        %v2461 = vcvt.s32.f32 2
        %v2462 = vcvt.s32.f32 3
        %v2463 = vcvt.s32.f32 4
        %v2464 = vcvt.s32.f32 5
        %v2465 = vcvt.s32.f32 6
        %v2466 = vcvt.s32.f32 7
        %v2467 = vlaneseq
        %v2468 = vshrl.u32 %v2467, 7
        %v2469 = vcvt.s32.f32 %v2468
        %v2470 = vlaneseq
        %v2471 = vand.u32 %v2470, 127
        %v2472 = vmul.f32 %v2469, 2.0
        %v2473 = vrcp.pop 7.0
        %v2474 = vmul.f32 7.0, %v2473
        %v2475 = vsub.f32 1.0, %v2474
        %v2476 = vmul.f32 %v2473, %v2475
        %v2477 = vadd.f32 %v2473, %v2476
        %vm2478 = vweird.f32 %v2473
        %v2479 = vsel %vm2478, %v2473, %v2477
        %v2480 = vmul.f32 %v2472, %v2479
        %v2481 = vsub.f32 %v2480, 1.0
        %v2482 = vmul.f32 %v2459, 2.0
        %v2483 = vmul.f32 %v2460, 2.0
        %v2484 = vmul.f32 %v2461, 2.0
        %v2485 = vmul.f32 %v2462, 2.0
        %v2486 = vmul.f32 %v2463, 2.0
        %v2487 = vmul.f32 %v2464, 2.0
        %v2488 = vmul.f32 %v2465, 2.0
        %v2489 = vmul.f32 %v2466, 2.0
        %v2490 = vmul.f32 %v2482, %v2479
        %v2491 = vmul.f32 %v2483, %v2479
        %v2492 = vmul.f32 %v2484, %v2479
        %v2493 = vmul.f32 %v2485, %v2479
        %v2494 = vmul.f32 %v2486, %v2479
        %v2495 = vmul.f32 %v2487, %v2479
        %v2496 = vmul.f32 %v2488, %v2479
        %v2497 = vmul.f32 %v2489, %v2479
        %v2498 = vsub.f32 %v2490, 1.0
        %v2499 = vsub.f32 %v2491, 1.0
        %v2500 = vsub.f32 %v2492, 1.0
        %v2501 = vsub.f32 %v2493, 1.0
        %v2502 = vsub.f32 %v2494, 1.0
        %v2503 = vsub.f32 %v2495, 1.0
        %v2504 = vsub.f32 %v2496, 1.0
        %v2505 = vsub.f32 %v2497, 1.0
        %vm2506 = vcmp.eq.s32.totalorder %v2471, 0
        %v2507 = vsel %vm2506, %v2481, %v2498
        %v2508 = vsel %vm2506, %v2481, %v2499
        %v2509 = vsel %vm2506, %v2481, %v2500
        %v2510 = vsel %vm2506, %v2481, %v2501
        %v2511 = vsel %vm2506, %v2481, %v2502
        %v2512 = vsel %vm2506, %v2481, %v2503
        %v2513 = vsel %vm2506, %v2481, %v2504
        %v2514 = vsel %vm2506, %v2481, %v2505
        %2523 = vrot.lane.b32.xlu0 %v2507, 32
        %v2524 = vpop.permute.xlu0 %2523
        %2525 = vrot.lane.b32.xlu0 %v2508, 32
        %v2526 = vpop.permute.xlu0 %2525
        %2527 = vrot.lane.b32.xlu0 %v2509, 32
        %v2528 = vpop.permute.xlu0 %2527
        %2529 = vrot.lane.b32.xlu0 %v2510, 32
        %v2530 = vpop.permute.xlu0 %2529
        %2531 = vrot.lane.b32.xlu0 %v2511, 32
        %v2532 = vpop.permute.xlu0 %2531
        %2533 = vrot.lane.b32.xlu0 %v2512, 32
        %v2534 = vpop.permute.xlu0 %2533
        %2535 = vrot.lane.b32.xlu0 %v2513, 32
        %v2536 = vpop.permute.xlu0 %2535
        %2537 = vrot.lane.b32.xlu0 %v2514, 32
        %v2538 = vpop.permute.xlu0 %2537
        %v2547 = vsel %vm966, %v2451, %v2524
        %v2548 = vsel %vm966, %v2452, %v2526
        %v2549 = vsel %vm966, %v2453, %v2528
        %v2550 = vsel %vm966, %v2454, %v2530
        %v2551 = vsel %vm966, %v2455, %v2532
        %v2552 = vsel %vm966, %v2456, %v2534
        %v2553 = vsel %vm966, %v2457, %v2536
        %v2554 = vsel %vm966, %v2458, %v2538
        %v2555 = vpack.c.bf16 %v2548, %v2547
        %v2556 = vpack.c.bf16 %v2550, %v2549
        %v2557 = vpack.c.bf16 %v2552, %v2551
        %v2558 = vpack.c.bf16 %v2554, %v2553
        %v2559 = vld [vmem:[%s10] sm:$0xff]
        %v2560 = vld [vmem:[%s10 + $0x8] sm:$0xff]
        %v2561 = vld [vmem:[%s10 + $0x10] sm:$0xff]
        %v2562 = vld [vmem:[%s10 + $0x18] sm:$0xff]
        %v2563 = vld [vmem:[%s10 + $0x20] sm:$0x11]
        %v2564 = vld [vmem:[%s11] sm:$0x3]
        %v2566 = vperm.slane %v2564, 0
        %v2567 = vperm.slane %v2564, 1
        %v2575 = vunpack.c.l.b16 %v2559
        %v2576 = vunpack.c.h.b16 %v2559
        %v2577 = vunpack.c.l.b16 %v2560
        %v2578 = vunpack.c.h.b16 %v2560
        %v2579 = vunpack.c.l.b16 %v2561
        %v2580 = vunpack.c.h.b16 %v2561
        %v2581 = vunpack.c.l.b16 %v2562
        %v2582 = vunpack.c.h.b16 %v2562
        %v2583 = vunpack.c.l.b16 %v2563
        %v2584 = vunpack.c.h.b16 %v2563
        %v2585 = vpack.c.b16 %v2577, %v2575
        %v2586 = vpack.c.b16 %v2578, %v2576
        %v2587 = vpack.c.b16 %v2581, %v2579
        %v2588 = vpack.c.b16 %v2582, %v2580
        %v2589 = vpack.c.b16 %v2583, %v2583
        %v2590 = vpack.c.b16 %v2584, %v2584
        %vm2595 = vcmask 277504
        %v2597 = vsel %vm2595, %v2555, 0
        %v2600 = vsel %vm2595, %v2556, 0
        %v2603 = vsel %vm2595, %v2557, 0
        %v2606 = vsel %vm2595, %v2558, 0
        %vm2608 = vcmask 1040384
        %v2610 = vsel %vm2608, %v2589, 0
        %v2613 = vsel %vm2608, %v2590, 0
        %2615 = vmatpush.bf16.msra.mxu0 0
        %2616 = vmatpush.bf16.msra.mxu0 0
        %2617 = vmatpush.bf16.msra.mxu0 0
        %2618 = vmatpush.bf16.msra.mxu0 0
        %2619 = vmatpush.bf16.msra.mxu0 0
        %2620 = vmatpush.bf16.msra.mxu0 %v2610
        %2621 = vmatpush.bf16.msra.mxu0 %v2587
        %2622 = vmatpush.bf16.msra.mxu0 %v2585
        %2623 = vmatmul.bf16.gmra.mxu0 %v2597
        %v2624 = vpop.f32.mrf.mxu0
        %v2625 = vadd.f32 %v2566, %v2624
        %v2626 = vpop.f32.mrf.mxu0
        %v2627 = vadd.f32 %v2566, %v2626
        %2628 = vmatmul.bf16.gmra.mxu0 %v2600
        %v2629 = vpop.f32.mrf.mxu0
        %v2630 = vadd.f32 %v2566, %v2629
        %v2631 = vpop.f32.mrf.mxu0
        %v2632 = vadd.f32 %v2566, %v2631
        %2633 = vmatmul.bf16.gmra.mxu0 %v2603
        %v2634 = vpop.f32.mrf.mxu0
        %v2635 = vadd.f32 %v2566, %v2634
        %v2636 = vpop.f32.mrf.mxu0
        %v2637 = vadd.f32 %v2566, %v2636
        %2638 = vmatmul.bf16.gmra.mxu0 %v2606
        %v2639 = vpop.f32.mrf.mxu0
        %v2640 = vadd.f32 %v2566, %v2639
        %v2641 = vpop.f32.mrf.mxu0
        %v2642 = vadd.f32 %v2566, %v2641
        %2643 = vdwg.mxu0
        %2644 = vmatpush.bf16.msra.mxu0 0
        %2645 = vmatpush.bf16.msra.mxu0 0
        %2646 = vmatpush.bf16.msra.mxu0 0
        %2647 = vmatpush.bf16.msra.mxu0 0
        %2648 = vmatpush.bf16.msra.mxu0 0
        %2649 = vmatpush.bf16.msra.mxu0 %v2613
        %2650 = vmatpush.bf16.msra.mxu0 %v2588
        %2651 = vmatpush.bf16.msra.mxu0 %v2586
        %2652 = vmatmul.bf16.gmra.mxu0 %v2597
        %v2653 = vpop.f32.mrf.mxu0
        %v2654 = vadd.f32 %v2567, %v2653
        %v2655 = vpop.f32.mrf.mxu0
        %v2656 = vadd.f32 %v2567, %v2655
        %2657 = vmatmul.bf16.gmra.mxu0 %v2600
        %v2658 = vpop.f32.mrf.mxu0
        %v2659 = vadd.f32 %v2567, %v2658
        %v2660 = vpop.f32.mrf.mxu0
        %v2661 = vadd.f32 %v2567, %v2660
        %2662 = vmatmul.bf16.gmra.mxu0 %v2603
        %v2663 = vpop.f32.mrf.mxu0
        %v2664 = vadd.f32 %v2567, %v2663
        %v2665 = vpop.f32.mrf.mxu0
        %v2666 = vadd.f32 %v2567, %v2665
        %2667 = vmatmul.bf16.gmra.mxu0 %v2606
        %v2668 = vpop.f32.mrf.mxu0
        %v2669 = vadd.f32 %v2567, %v2668
        %v2670 = vpop.f32.mrf.mxu0
        %v2671 = vadd.f32 %v2567, %v2670
        %2672 = vdwg.mxu0
        %v2673 = vld [vmem:[%s485] sm:$0xf]
        %v2674 = vld [vmem:[%s485 + $0x4] sm:$0xf]
        %v2675 = vld [vmem:[%s485 + $0x8] sm:$0x3]
        %v2676 = vpack.c.bf16 %v2627, %v2625
        %v2677 = vpack.c.bf16 %v2632, %v2630
        %v2678 = vpack.c.bf16 %v2637, %v2635
        %v2679 = vpack.c.bf16 %v2642, %v2640
        %v2683 = vunpack.c.l.b16 %v2673
        %v2684 = vunpack.c.l.b16 %v2674
        %v2685 = vunpack.c.l.b16 %v2675
        %v2686 = vpack.c.b16 %v2684, %v2683
        %v2687 = vpack.c.b16 %v2685, %v2685
        %v2689 = vsel %vm966, %v2676, 0
        %v2692 = vsel %vm966, %v2677, 0
        %v2695 = vsel %vm966, %v2678, 0
        %v2698 = vsel %vm966, %v2679, 0
        %v2701 = vsel %vm966, %v2686, 0
        %v2704 = vsel %vm966, %v2687, 0
        %2706 = vmatpush.bf16.xpose.msra.mxu0 0
        %2707 = vmatpush.bf16.xpose.msra.mxu0 0
        %2708 = vmatpush.bf16.xpose.msra.mxu0 0
        %2709 = vmatpush.bf16.xpose.msra.mxu0 0
        %2710 = vmatpush.bf16.xpose.msra.mxu0 0
        %2711 = vmatpush.bf16.xpose.msra.mxu0 0
        %2712 = vmatpush.bf16.xpose.msra.mxu0 %v2704
        %2713 = vmatpush.bf16.xpose.msra.mxu0 %v2701
        %2714 = vmatmul.bf16.gmra.mxu0 %v2689
        %v2715 = vpop.f32.mrf.mxu0
        %v2716 = vadd.f32 0.0, %v2715
        %v2717 = vpop.f32.mrf.mxu0
        %v2718 = vadd.f32 0.0, %v2717
        %2719 = vmatmul.bf16.gmra.mxu0 %v2692
        %v2720 = vpop.f32.mrf.mxu0
        %v2721 = vadd.f32 0.0, %v2720
        %v2722 = vpop.f32.mrf.mxu0
        %v2723 = vadd.f32 0.0, %v2722
        %2724 = vmatmul.bf16.gmra.mxu0 %v2695
        %v2725 = vpop.f32.mrf.mxu0
        %v2726 = vadd.f32 0.0, %v2725
        %v2727 = vpop.f32.mrf.mxu0
        %v2728 = vadd.f32 0.0, %v2727
        %2729 = vmatmul.bf16.gmra.mxu0 %v2698
        %v2730 = vpop.f32.mrf.mxu0
        %v2731 = vadd.f32 0.0, %v2730
        %v2732 = vpop.f32.mrf.mxu0
        %v2733 = vadd.f32 0.0, %v2732
        %2734 = vdwg.mxu0
        %vm2735 = vcmask 162816
        %v2736 = vsel %vm2735, %v2716, -inf
        %2737 = vmax.xlane.f32.xlu0 %v2736
        %v2738 = vpop.xlane.xlu0 %2737
        %v2739 = vsel %vm2735, %v2718, -inf
        %2740 = vmax.xlane.f32.xlu0 %v2739
        %v2741 = vpop.xlane.xlu0 %2740
        %v2742 = vsel %vm2735, %v2721, -inf
        %2743 = vmax.xlane.f32.xlu0 %v2742
        %v2744 = vpop.xlane.xlu0 %2743
        %v2745 = vsel %vm2735, %v2723, -inf
        %2746 = vmax.xlane.f32.xlu0 %v2745
        %v2747 = vpop.xlane.xlu0 %2746
        %v2748 = vsel %vm2735, %v2726, -inf
        %2749 = vmax.xlane.f32.xlu0 %v2748
        %v2750 = vpop.xlane.xlu0 %2749
        %v2751 = vsel %vm2735, %v2728, -inf
        %2752 = vmax.xlane.f32.xlu0 %v2751
        %v2753 = vpop.xlane.xlu0 %2752
        %v2754 = vsel %vm2735, %v2731, -inf
        %2755 = vmax.xlane.f32.xlu0 %v2754
        %v2756 = vpop.xlane.xlu0 %2755
        %v2757 = vsel %vm2735, %v2733, -inf
        %2758 = vmax.xlane.f32.xlu0 %v2757
        %v2759 = vpop.xlane.xlu0 %2758
        %v2760 = vsub.f32 %v2716, %v2738
        %v2761 = vsub.f32 %v2718, %v2741
        %v2762 = vsub.f32 %v2721, %v2744
        %v2763 = vsub.f32 %v2723, %v2747
        %v2764 = vsub.f32 %v2726, %v2750
        %v2765 = vsub.f32 %v2728, %v2753
        %v2766 = vsub.f32 %v2731, %v2756
        %v2767 = vsub.f32 %v2733, %v2759
        %v2768 = vmul.f32 %v2760, 1.442695
        %v2769 = vpow.pop %v2768
        %v2770 = vmul.f32 %v2761, 1.442695
        %v2771 = vpow.pop %v2770
        %v2772 = vmul.f32 %v2762, 1.442695
        %v2773 = vpow.pop %v2772
        %v2774 = vmul.f32 %v2763, 1.442695
        %v2775 = vpow.pop %v2774
        %v2776 = vmul.f32 %v2764, 1.442695
        %v2777 = vpow.pop %v2776
        %v2778 = vmul.f32 %v2765, 1.442695
        %v2779 = vpow.pop %v2778
        %v2780 = vmul.f32 %v2766, 1.442695
        %v2781 = vpow.pop %v2780
        %v2782 = vmul.f32 %v2767, 1.442695
        %v2783 = vpow.pop %v2782
        %v2784 = vsel %vm2735, %v2769, 0.0
        %2785 = vadd.xlane.f32.xlu0 %v2784
        %v2786 = vpop.xlane.xlu0 %2785
        %v2787 = vsel %vm2735, %v2771, 0.0
        %2788 = vadd.xlane.f32.xlu0 %v2787
        %v2789 = vpop.xlane.xlu0 %2788
        %v2790 = vsel %vm2735, %v2773, 0.0
        %2791 = vadd.xlane.f32.xlu0 %v2790
        %v2792 = vpop.xlane.xlu0 %2791
        %v2793 = vsel %vm2735, %v2775, 0.0
        %2794 = vadd.xlane.f32.xlu0 %v2793
        %v2795 = vpop.xlane.xlu0 %2794
        %v2796 = vsel %vm2735, %v2777, 0.0
        %2797 = vadd.xlane.f32.xlu0 %v2796
        %v2798 = vpop.xlane.xlu0 %2797
        %v2799 = vsel %vm2735, %v2779, 0.0
        %2800 = vadd.xlane.f32.xlu0 %v2799
        %v2801 = vpop.xlane.xlu0 %2800
        %v2802 = vsel %vm2735, %v2781, 0.0
        %2803 = vadd.xlane.f32.xlu0 %v2802
        %v2804 = vpop.xlane.xlu0 %2803
        %v2805 = vsel %vm2735, %v2783, 0.0
        %2806 = vadd.xlane.f32.xlu0 %v2805
        %v2807 = vpop.xlane.xlu0 %2806
        %v2808 = vrcp.pop %v2786
        %v2809 = vmul.f32 %v2786, %v2808
        %v2810 = vsub.f32 1.0, %v2809
        %v2811 = vmul.f32 %v2808, %v2810
        %v2812 = vadd.f32 %v2808, %v2811
        %vm2813 = vweird.f32 %v2786
        %vm2814 = vweird.f32 %v2808
        %vm2815 = vmor %vm2813, %vm2814
        %v2816 = vsel %vm2815, %v2808, %v2812
        %v2817 = vand.u32 2147483647, %v2786
        %vm2818 = vcmp.eq.f32.partialorder %v2817, 8.507059e+37
        %v2819 = vand.u32 %v2786, 2147483648
        %v2820 = vor.u32 1.1754944e-38, %v2819
        %v2821 = vsel %vm2818, %v2820, %v2816
        %v2822 = vrcp.pop %v2789
        %v2823 = vmul.f32 %v2789, %v2822
        %v2824 = vsub.f32 1.0, %v2823
        %v2825 = vmul.f32 %v2822, %v2824
        %v2826 = vadd.f32 %v2822, %v2825
        %vm2827 = vweird.f32 %v2789
        %vm2828 = vweird.f32 %v2822
        %vm2829 = vmor %vm2827, %vm2828
        %v2830 = vsel %vm2829, %v2822, %v2826
        %v2831 = vand.u32 2147483647, %v2789
        %vm2832 = vcmp.eq.f32.partialorder %v2831, 8.507059e+37
        %v2833 = vand.u32 %v2789, 2147483648
        %v2834 = vor.u32 1.1754944e-38, %v2833
        %v2835 = vsel %vm2832, %v2834, %v2830
        %v2836 = vrcp.pop %v2792
        %v2837 = vmul.f32 %v2792, %v2836
        %v2838 = vsub.f32 1.0, %v2837
        %v2839 = vmul.f32 %v2836, %v2838
        %v2840 = vadd.f32 %v2836, %v2839
        %vm2841 = vweird.f32 %v2792
        %vm2842 = vweird.f32 %v2836
        %vm2843 = vmor %vm2841, %vm2842
        %v2844 = vsel %vm2843, %v2836, %v2840
        %v2845 = vand.u32 2147483647, %v2792
        %vm2846 = vcmp.eq.f32.partialorder %v2845, 8.507059e+37
        %v2847 = vand.u32 %v2792, 2147483648
        %v2848 = vor.u32 1.1754944e-38, %v2847
        %v2849 = vsel %vm2846, %v2848, %v2844
        %v2850 = vrcp.pop %v2795
        %v2851 = vmul.f32 %v2795, %v2850
        %v2852 = vsub.f32 1.0, %v2851
        %v2853 = vmul.f32 %v2850, %v2852
        %v2854 = vadd.f32 %v2850, %v2853
        %vm2855 = vweird.f32 %v2795
        %vm2856 = vweird.f32 %v2850
        %vm2857 = vmor %vm2855, %vm2856
        %v2858 = vsel %vm2857, %v2850, %v2854
        %v2859 = vand.u32 2147483647, %v2795
        %vm2860 = vcmp.eq.f32.partialorder %v2859, 8.507059e+37
        %v2861 = vand.u32 %v2795, 2147483648
        %v2862 = vor.u32 1.1754944e-38, %v2861
        %v2863 = vsel %vm2860, %v2862, %v2858
        %v2864 = vrcp.pop %v2798
        %v2865 = vmul.f32 %v2798, %v2864
        %v2866 = vsub.f32 1.0, %v2865
        %v2867 = vmul.f32 %v2864, %v2866
        %v2868 = vadd.f32 %v2864, %v2867
        %vm2869 = vweird.f32 %v2798
        %vm2870 = vweird.f32 %v2864
        %vm2871 = vmor %vm2869, %vm2870
        %v2872 = vsel %vm2871, %v2864, %v2868
        %v2873 = vand.u32 2147483647, %v2798
        %vm2874 = vcmp.eq.f32.partialorder %v2873, 8.507059e+37
        %v2875 = vand.u32 %v2798, 2147483648
        %v2876 = vor.u32 1.1754944e-38, %v2875
        %v2877 = vsel %vm2874, %v2876, %v2872
        %v2878 = vrcp.pop %v2801
        %v2879 = vmul.f32 %v2801, %v2878
        %v2880 = vsub.f32 1.0, %v2879
        %v2881 = vmul.f32 %v2878, %v2880
        %v2882 = vadd.f32 %v2878, %v2881
        %vm2883 = vweird.f32 %v2801
        %vm2884 = vweird.f32 %v2878
        %vm2885 = vmor %vm2883, %vm2884
        %v2886 = vsel %vm2885, %v2878, %v2882
        %v2887 = vand.u32 2147483647, %v2801
        %vm2888 = vcmp.eq.f32.partialorder %v2887, 8.507059e+37
        %v2889 = vand.u32 %v2801, 2147483648
        %v2890 = vor.u32 1.1754944e-38, %v2889
        %v2891 = vsel %vm2888, %v2890, %v2886
        %v2892 = vrcp.pop %v2804
        %v2893 = vmul.f32 %v2804, %v2892
        %v2894 = vsub.f32 1.0, %v2893
        %v2895 = vmul.f32 %v2892, %v2894
        %v2896 = vadd.f32 %v2892, %v2895
        %vm2897 = vweird.f32 %v2804
        %vm2898 = vweird.f32 %v2892
        %vm2899 = vmor %vm2897, %vm2898
        %v2900 = vsel %vm2899, %v2892, %v2896
        %v2901 = vand.u32 2147483647, %v2804
        %vm2902 = vcmp.eq.f32.partialorder %v2901, 8.507059e+37
        %v2903 = vand.u32 %v2804, 2147483648
        %v2904 = vor.u32 1.1754944e-38, %v2903
        %v2905 = vsel %vm2902, %v2904, %v2900
        %v2906 = vrcp.pop %v2807
        %v2907 = vmul.f32 %v2807, %v2906
        %v2908 = vsub.f32 1.0, %v2907
        %v2909 = vmul.f32 %v2906, %v2908
        %v2910 = vadd.f32 %v2906, %v2909
        %vm2911 = vweird.f32 %v2807
        %vm2912 = vweird.f32 %v2906
        %vm2913 = vmor %vm2911, %vm2912
        %v2914 = vsel %vm2913, %v2906, %v2910
        %v2915 = vand.u32 2147483647, %v2807
        %vm2916 = vcmp.eq.f32.partialorder %v2915, 8.507059e+37
        %v2917 = vand.u32 %v2807, 2147483648
        %v2918 = vor.u32 1.1754944e-38, %v2917
        %v2919 = vsel %vm2916, %v2918, %v2914
        %v2920 = vmul.f32 %v2769, %v2821
        %v2921 = vmul.f32 %v2771, %v2835
        %v2922 = vmul.f32 %v2773, %v2849
        %v2923 = vmul.f32 %v2775, %v2863
        %v2924 = vmul.f32 %v2777, %v2877
        %v2925 = vmul.f32 %v2779, %v2891
        %v2926 = vmul.f32 %v2781, %v2905
        %v2927 = vmul.f32 %v2783, %v2919
        %v2928 = vpack.c.bf16 %v2921, %v2920
        %v2929 = vpack.c.bf16 %v2923, %v2922
        %v2930 = vpack.c.bf16 %v2925, %v2924
        %v2931 = vpack.c.bf16 %v2927, %v2926
        %v2934 = vsel %vm2735, %v2928, 0
        %v2937 = vsel %vm2735, %v2929, 0
        %v2940 = vsel %vm2735, %v2930, 0
        %v2943 = vsel %vm2735, %v2931, 0
        %vm2945 = vcmask 1041408
        %v2946 = vsel %vm2945, %v2687, 0
        %2948 = vmatpush.bf16.msra.mxu0 0
        %2949 = vmatpush.bf16.msra.mxu0 0
        %2950 = vmatpush.bf16.msra.mxu0 0
        %2951 = vmatpush.bf16.msra.mxu0 0
        %2952 = vmatpush.bf16.msra.mxu0 0
        %2953 = vmatpush.bf16.msra.mxu0 0
        %2954 = vmatpush.bf16.msra.mxu0 %v2946
        %2955 = vmatpush.bf16.msra.mxu0 %v2686
        %2956 = vmatmul.bf16.gmra.mxu0 %v2934
        %v2957 = vpop.f32.mrf.mxu0
        %v2958 = vadd.f32 0.0, %v2957
        %v2959 = vpop.f32.mrf.mxu0
        %v2960 = vadd.f32 0.0, %v2959
        %2961 = vmatmul.bf16.gmra.mxu0 %v2937
        %v2962 = vpop.f32.mrf.mxu0
        %v2963 = vadd.f32 0.0, %v2962
        %v2964 = vpop.f32.mrf.mxu0
        %v2965 = vadd.f32 0.0, %v2964
        %2966 = vmatmul.bf16.gmra.mxu0 %v2940
        %v2967 = vpop.f32.mrf.mxu0
        %v2968 = vadd.f32 0.0, %v2967
        %v2969 = vpop.f32.mrf.mxu0
        %v2970 = vadd.f32 0.0, %v2969
        %2971 = vmatmul.bf16.gmra.mxu0 %v2943
        %v2972 = vpop.f32.mrf.mxu0
        %v2973 = vadd.f32 0.0, %v2972
        %v2974 = vpop.f32.mrf.mxu0
        %v2975 = vadd.f32 0.0, %v2974
        %2976 = vdwg.mxu0
        %v2977 = vunpack.c.l.bf16 %v2673
        %v2978 = vunpack.c.l.bf16 %v2674
        %v2979 = vunpack.c.l.bf16 %v2675
        %v2980 = vsel %vm966, %v2977, -inf
        %v2981 = vsel %vm966, %v2978, -inf
        %vm2982 = vcmask 257024
        %v2983 = vsel %vm2982, %v2979, -inf
        %v2984 = vmax.f32 %v2980, %v2981
        %v2985 = vmax.f32 %v2984, %v2983
        %v2986 = vrot.slane %v2985, 4
        %v2987 = vmax.f32 %v2985, %v2986
        %v2988 = vrot.slane %v2987, 2
        %v2989 = vmax.f32 %v2987, %v2988
        %v2990 = vrot.slane %v2989, 1
        %v2991 = vmax.f32 %v2989, %v2990
        %v2992 = vpack.c.bf16 %v2991, %v2991
        %v2993 = vld [vmem:[%s12] sm:$0xf]
        %v2994 = vld [vmem:[%s12 + $0x4] sm:$0xf]
        %v2995 = vld [vmem:[%s12 + $0x8] sm:$0xf]
        %v2996 = vld [vmem:[%s12 + $0xc] sm:$0xf]
        %v2997 = vld [vmem:[%s13] sm:$0x1]
        %v3002 = vunpack.c.l.b16 %v2993
        %v3003 = vunpack.c.l.b16 %v2994
        %v3004 = vunpack.c.l.b16 %v2995
        %v3005 = vunpack.c.l.b16 %v2996
        %v3006 = vpack.c.b16 %v3003, %v3002
        %v3007 = vpack.c.b16 %v3005, %v3004
        %v3011 = vsel %vm966, %v2992, 0
        %3013 = vmatpush.bf16.msra.mxu0 0
        %3014 = vmatpush.bf16.msra.mxu0 0
        %3015 = vmatpush.bf16.msra.mxu0 0
        %3016 = vmatpush.bf16.msra.mxu0 0
        %3017 = vmatpush.bf16.msra.mxu0 0
        %3018 = vmatpush.bf16.msra.mxu0 0
        %3019 = vmatpush.bf16.msra.mxu0 %v3007
        %3020 = vmatpush.bf16.msra.mxu0 %v3006
        %3021 = vmatmul.bf16.gmra.mxu0 %v3011
        %v3022 = vpop.f32.mrf.mxu0
        %v3023 = vadd.f32 %v2997, %v3022
        %v3024 = vpop.f32.mrf.mxu0
        %3025 = vdwg.mxu0
        %v3026 = vmul.f32 %v3023, %v3023
        %v3027 = vmul.f32 %v3026, 0.17149858
        %v3028 = vperm.slane %v3027, 0
        %3030 = vrot.lane.b32.xlu0 %v3028, 32
        %v3031 = vpop.permute.xlu0 %3030
        %v3033 = vmul.f32 %v2625, %v3031
        %v3034 = vmul.f32 %v2627, %v3031
        %v3035 = vmul.f32 %v2630, %v3031
        %v3036 = vmul.f32 %v2632, %v3031
        %v3037 = vmul.f32 %v2635, %v3031
        %v3038 = vmul.f32 %v2637, %v3031
        %v3039 = vmul.f32 %v2640, %v3031
        %v3040 = vmul.f32 %v2642, %v3031
        %v3041 = vpack.c.bf16 %v3034, %v3033
        %v3042 = vpack.c.bf16 %v3036, %v3035
        %v3043 = vpack.c.bf16 %v3038, %v3037
        %v3044 = vpack.c.bf16 %v3040, %v3039
        %3049 = vrot.lane.b32.xlu0 %v3041, 96
        %v3050 = vpop.permute.xlu0 %3049
        %3051 = vrot.lane.b32.xlu0 %v3042, 96
        %v3052 = vpop.permute.xlu0 %3051
        %3053 = vrot.lane.b32.xlu0 %v3043, 96
        %v3054 = vpop.permute.xlu0 %3053
        %3055 = vrot.lane.b32.xlu0 %v3044, 96
        %v3056 = vpop.permute.xlu0 %3055
        %3061 = vrot.lane.b32.xlu0 %v2676, 62
        %v3062 = vpop.permute.xlu0 %3061
        %3063 = vrot.lane.b32.xlu0 %v2677, 62
        %v3064 = vpop.permute.xlu0 %3063
        %3065 = vrot.lane.b32.xlu0 %v2678, 62
        %v3066 = vpop.permute.xlu0 %3065
        %3067 = vrot.lane.b32.xlu0 %v2679, 62
        %v3068 = vpop.permute.xlu0 %3067
        %v3070 = vsel %vm2595, %v3050, 0
        %v3073 = vsel %vm2595, %v3052, 0
        %v3076 = vsel %vm2595, %v3054, 0
        %v3079 = vsel %vm2595, %v3056, 0
        %v3082 = vsel %vm2595, %v3062, 0
        %v3085 = vsel %vm2595, %v3064, 0
        %v3088 = vsel %vm2595, %v3066, 0
        %v3091 = vsel %vm2595, %v3068, 0
        %3093 = vmatpush.bf16.xpose.msra.mxu0 0
        %3094 = vmatpush.bf16.xpose.msra.mxu0 0
        %3095 = vmatpush.bf16.xpose.msra.mxu0 0
        %3096 = vmatpush.bf16.xpose.msra.mxu0 0
        %3097 = vmatpush.bf16.xpose.msra.mxu0 %v3091
        %3098 = vmatpush.bf16.xpose.msra.mxu0 %v3088
        %3099 = vmatpush.bf16.xpose.msra.mxu0 %v3085
        %3100 = vmatpush.bf16.xpose.msra.mxu0 %v3082
        %3101 = vmatmul.bf16.gmra.mxu0 %v3070
        %v3102 = vpop.f32.mrf.mxu0
        %v3103 = vadd.f32 0.0, %v3102
        %v3104 = vpop.f32.mrf.mxu0
        %v3105 = vadd.f32 0.0, %v3104
        %3106 = vmatmul.bf16.gmra.mxu0 %v3073
        %v3107 = vpop.f32.mrf.mxu0
        %v3108 = vadd.f32 0.0, %v3107
        %v3109 = vpop.f32.mrf.mxu0
        %v3110 = vadd.f32 0.0, %v3109
        %3111 = vmatmul.bf16.gmra.mxu0 %v3076
        %v3112 = vpop.f32.mrf.mxu0
        %v3113 = vadd.f32 0.0, %v3112
        %v3114 = vpop.f32.mrf.mxu0
        %v3115 = vadd.f32 0.0, %v3114
        %3116 = vmatmul.bf16.gmra.mxu0 %v3079
        %v3117 = vpop.f32.mrf.mxu0
        %v3118 = vadd.f32 0.0, %v3117
        %v3119 = vpop.f32.mrf.mxu0
        %v3120 = vadd.f32 0.0, %v3119
        %3121 = vdwg.mxu0
        %v3122 = vsel %vm1010, %v3103, -inf
        %3123 = vmax.xlane.f32.xlu0 %v3122
        %v3124 = vpop.xlane.xlu0 %3123
        %v3125 = vsel %vm1010, %v3105, -inf
        %3126 = vmax.xlane.f32.xlu0 %v3125
        %v3127 = vpop.xlane.xlu0 %3126
        %v3128 = vsel %vm1010, %v3108, -inf
        %3129 = vmax.xlane.f32.xlu0 %v3128
        %v3130 = vpop.xlane.xlu0 %3129
        %v3131 = vsel %vm1010, %v3110, -inf
        %3132 = vmax.xlane.f32.xlu0 %v3131
        %v3133 = vpop.xlane.xlu0 %3132
        %v3134 = vsel %vm1010, %v3113, -inf
        %3135 = vmax.xlane.f32.xlu0 %v3134
        %v3136 = vpop.xlane.xlu0 %3135
        %v3137 = vsel %vm1010, %v3115, -inf
        %3138 = vmax.xlane.f32.xlu0 %v3137
        %v3139 = vpop.xlane.xlu0 %3138
        %v3140 = vsel %vm1010, %v3118, -inf
        %3141 = vmax.xlane.f32.xlu0 %v3140
        %v3142 = vpop.xlane.xlu0 %3141
        %v3143 = vsel %vm1010, %v3120, -inf
        %3144 = vmax.xlane.f32.xlu0 %v3143
        %v3145 = vpop.xlane.xlu0 %3144
        %v3146 = vsub.f32 %v3103, %v3124
        %v3147 = vsub.f32 %v3105, %v3127
        %v3148 = vsub.f32 %v3108, %v3130
        %v3149 = vsub.f32 %v3110, %v3133
        %v3150 = vsub.f32 %v3113, %v3136
        %v3151 = vsub.f32 %v3115, %v3139
        %v3152 = vsub.f32 %v3118, %v3142
        %v3153 = vsub.f32 %v3120, %v3145
        %v3154 = vmul.f32 %v3146, 1.442695
        %v3155 = vpow.pop %v3154
        %v3156 = vmul.f32 %v3147, 1.442695
        %v3157 = vpow.pop %v3156
        %v3158 = vmul.f32 %v3148, 1.442695
        %v3159 = vpow.pop %v3158
        %v3160 = vmul.f32 %v3149, 1.442695
        %v3161 = vpow.pop %v3160
        %v3162 = vmul.f32 %v3150, 1.442695
        %v3163 = vpow.pop %v3162
        %v3164 = vmul.f32 %v3151, 1.442695
        %v3165 = vpow.pop %v3164
        %v3166 = vmul.f32 %v3152, 1.442695
        %v3167 = vpow.pop %v3166
        %v3168 = vmul.f32 %v3153, 1.442695
        %v3169 = vpow.pop %v3168
        %v3170 = vsel %vm1010, %v3155, 0.0
        %3171 = vadd.xlane.f32.xlu0 %v3170
        %v3172 = vpop.xlane.xlu0 %3171
        %v3173 = vsel %vm1010, %v3157, 0.0
        %3174 = vadd.xlane.f32.xlu0 %v3173
        %v3175 = vpop.xlane.xlu0 %3174
        %v3176 = vsel %vm1010, %v3159, 0.0
        %3177 = vadd.xlane.f32.xlu0 %v3176
        %v3178 = vpop.xlane.xlu0 %3177
        %v3179 = vsel %vm1010, %v3161, 0.0
        %3180 = vadd.xlane.f32.xlu0 %v3179
        %v3181 = vpop.xlane.xlu0 %3180
        %v3182 = vsel %vm1010, %v3163, 0.0
        %3183 = vadd.xlane.f32.xlu0 %v3182
        %v3184 = vpop.xlane.xlu0 %3183
        %v3185 = vsel %vm1010, %v3165, 0.0
        %3186 = vadd.xlane.f32.xlu0 %v3185
        %v3187 = vpop.xlane.xlu0 %3186
        %v3188 = vsel %vm1010, %v3167, 0.0
        %3189 = vadd.xlane.f32.xlu0 %v3188
        %v3190 = vpop.xlane.xlu0 %3189
        %v3191 = vsel %vm1010, %v3169, 0.0
        %3192 = vadd.xlane.f32.xlu0 %v3191
        %v3193 = vpop.xlane.xlu0 %3192
        %v3194 = vrcp.pop %v3172
        %v3195 = vmul.f32 %v3172, %v3194
        %v3196 = vsub.f32 1.0, %v3195
        %v3197 = vmul.f32 %v3194, %v3196
        %v3198 = vadd.f32 %v3194, %v3197
        %vm3199 = vweird.f32 %v3172
        %vm3200 = vweird.f32 %v3194
        %vm3201 = vmor %vm3199, %vm3200
        %v3202 = vsel %vm3201, %v3194, %v3198
        %v3203 = vand.u32 2147483647, %v3172
        %vm3204 = vcmp.eq.f32.partialorder %v3203, 8.507059e+37
        %v3205 = vand.u32 %v3172, 2147483648
        %v3206 = vor.u32 1.1754944e-38, %v3205
        %v3207 = vsel %vm3204, %v3206, %v3202
        %v3208 = vrcp.pop %v3175
        %v3209 = vmul.f32 %v3175, %v3208
        %v3210 = vsub.f32 1.0, %v3209
        %v3211 = vmul.f32 %v3208, %v3210
        %v3212 = vadd.f32 %v3208, %v3211
        %vm3213 = vweird.f32 %v3175
        %vm3214 = vweird.f32 %v3208
        %vm3215 = vmor %vm3213, %vm3214
        %v3216 = vsel %vm3215, %v3208, %v3212
        %v3217 = vand.u32 2147483647, %v3175
        %vm3218 = vcmp.eq.f32.partialorder %v3217, 8.507059e+37
        %v3219 = vand.u32 %v3175, 2147483648
        %v3220 = vor.u32 1.1754944e-38, %v3219
        %v3221 = vsel %vm3218, %v3220, %v3216
        %v3222 = vrcp.pop %v3178
        %v3223 = vmul.f32 %v3178, %v3222
        %v3224 = vsub.f32 1.0, %v3223
        %v3225 = vmul.f32 %v3222, %v3224
        %v3226 = vadd.f32 %v3222, %v3225
        %vm3227 = vweird.f32 %v3178
        %vm3228 = vweird.f32 %v3222
        %vm3229 = vmor %vm3227, %vm3228
        %v3230 = vsel %vm3229, %v3222, %v3226
        %v3231 = vand.u32 2147483647, %v3178
        %vm3232 = vcmp.eq.f32.partialorder %v3231, 8.507059e+37
        %v3233 = vand.u32 %v3178, 2147483648
        %v3234 = vor.u32 1.1754944e-38, %v3233
        %v3235 = vsel %vm3232, %v3234, %v3230
        %v3236 = vrcp.pop %v3181
        %v3237 = vmul.f32 %v3181, %v3236
        %v3238 = vsub.f32 1.0, %v3237
        %v3239 = vmul.f32 %v3236, %v3238
        %v3240 = vadd.f32 %v3236, %v3239
        %vm3241 = vweird.f32 %v3181
        %vm3242 = vweird.f32 %v3236
        %vm3243 = vmor %vm3241, %vm3242
        %v3244 = vsel %vm3243, %v3236, %v3240
        %v3245 = vand.u32 2147483647, %v3181
        %vm3246 = vcmp.eq.f32.partialorder %v3245, 8.507059e+37
        %v3247 = vand.u32 %v3181, 2147483648
        %v3248 = vor.u32 1.1754944e-38, %v3247
        %v3249 = vsel %vm3246, %v3248, %v3244
        %v3250 = vrcp.pop %v3184
        %v3251 = vmul.f32 %v3184, %v3250
        %v3252 = vsub.f32 1.0, %v3251
        %v3253 = vmul.f32 %v3250, %v3252
        %v3254 = vadd.f32 %v3250, %v3253
        %vm3255 = vweird.f32 %v3184
        %vm3256 = vweird.f32 %v3250
        %vm3257 = vmor %vm3255, %vm3256
        %v3258 = vsel %vm3257, %v3250, %v3254
        %v3259 = vand.u32 2147483647, %v3184
        %vm3260 = vcmp.eq.f32.partialorder %v3259, 8.507059e+37
        %v3261 = vand.u32 %v3184, 2147483648
        %v3262 = vor.u32 1.1754944e-38, %v3261
        %v3263 = vsel %vm3260, %v3262, %v3258
        %v3264 = vrcp.pop %v3187
        %v3265 = vmul.f32 %v3187, %v3264
        %v3266 = vsub.f32 1.0, %v3265
        %v3267 = vmul.f32 %v3264, %v3266
        %v3268 = vadd.f32 %v3264, %v3267
        %vm3269 = vweird.f32 %v3187
        %vm3270 = vweird.f32 %v3264
        %vm3271 = vmor %vm3269, %vm3270
        %v3272 = vsel %vm3271, %v3264, %v3268
        %v3273 = vand.u32 2147483647, %v3187
        %vm3274 = vcmp.eq.f32.partialorder %v3273, 8.507059e+37
        %v3275 = vand.u32 %v3187, 2147483648
        %v3276 = vor.u32 1.1754944e-38, %v3275
        %v3277 = vsel %vm3274, %v3276, %v3272
        %v3278 = vrcp.pop %v3190
        %v3279 = vmul.f32 %v3190, %v3278
        %v3280 = vsub.f32 1.0, %v3279
        %v3281 = vmul.f32 %v3278, %v3280
        %v3282 = vadd.f32 %v3278, %v3281
        %vm3283 = vweird.f32 %v3190
        %vm3284 = vweird.f32 %v3278
        %vm3285 = vmor %vm3283, %vm3284
        %v3286 = vsel %vm3285, %v3278, %v3282
        %v3287 = vand.u32 2147483647, %v3190
        %vm3288 = vcmp.eq.f32.partialorder %v3287, 8.507059e+37
        %v3289 = vand.u32 %v3190, 2147483648
        %v3290 = vor.u32 1.1754944e-38, %v3289
        %v3291 = vsel %vm3288, %v3290, %v3286
        %v3292 = vrcp.pop %v3193
        %v3293 = vmul.f32 %v3193, %v3292
        %v3294 = vsub.f32 1.0, %v3293
        %v3295 = vmul.f32 %v3292, %v3294
        %v3296 = vadd.f32 %v3292, %v3295
        %vm3297 = vweird.f32 %v3193
        %vm3298 = vweird.f32 %v3292
        %vm3299 = vmor %vm3297, %vm3298
        %v3300 = vsel %vm3299, %v3292, %v3296
        %v3301 = vand.u32 2147483647, %v3193
        %vm3302 = vcmp.eq.f32.partialorder %v3301, 8.507059e+37
        %v3303 = vand.u32 %v3193, 2147483648
        %v3304 = vor.u32 1.1754944e-38, %v3303
        %v3305 = vsel %vm3302, %v3304, %v3300
        %v3306 = vmul.f32 %v3155, %v3207
        %v3307 = vmul.f32 %v3157, %v3221
        %v3308 = vmul.f32 %v3159, %v3235
        %v3309 = vmul.f32 %v3161, %v3249
        %v3310 = vmul.f32 %v3163, %v3263
        %v3311 = vmul.f32 %v3165, %v3277
        %v3312 = vmul.f32 %v3167, %v3291
        %v3313 = vmul.f32 %v3169, %v3305
        %v3314 = vpack.c.bf16 %v3307, %v3306
        %v3315 = vpack.c.bf16 %v3309, %v3308
        %v3316 = vpack.c.bf16 %v3311, %v3310
        %v3317 = vpack.c.bf16 %v3313, %v3312
        %v3318 = vpack.c.bf16 %v2656, %v2654
        %v3319 = vpack.c.bf16 %v2661, %v2659
        %v3320 = vpack.c.bf16 %v2666, %v2664
        %v3321 = vpack.c.bf16 %v2671, %v2669
        %3326 = vrot.lane.b32.xlu0 %v2676, 28
        %v3327 = vpop.permute.xlu0 %3326
        %3328 = vrot.lane.b32.xlu0 %v3318, 28
        %v3329 = vpop.permute.xlu0 %3328
        %3330 = vrot.lane.b32.xlu0 %v2677, 28
        %v3331 = vpop.permute.xlu0 %3330
        %3332 = vrot.lane.b32.xlu0 %v3319, 28
        %v3333 = vpop.permute.xlu0 %3332
        %3334 = vrot.lane.b32.xlu0 %v2678, 28
        %v3335 = vpop.permute.xlu0 %3334
        %3336 = vrot.lane.b32.xlu0 %v3320, 28
        %v3337 = vpop.permute.xlu0 %3336
        %3338 = vrot.lane.b32.xlu0 %v2679, 28
        %v3339 = vpop.permute.xlu0 %3338
        %3340 = vrot.lane.b32.xlu0 %v3321, 28
        %v3341 = vpop.permute.xlu0 %3340
        %vm3342 = vcmask 228352
        %v3343 = vsel %vm3342, %v3327, %v3329
        %v3344 = vsel %vm3342, %v3331, %v3333
        %v3345 = vsel %vm3342, %v3335, %v3337
        %v3346 = vsel %vm3342, %v3339, %v3341
        %v3352 = vsel %vm1010, %v3314, 0
        %v3355 = vsel %vm1010, %v3315, 0
        %v3358 = vsel %vm1010, %v3316, 0
        %v3361 = vsel %vm1010, %v3317, 0
        %3363 = vmatpush.bf16.msra.mxu0 0
        %3364 = vmatpush.bf16.msra.mxu0 0
        %3365 = vmatpush.bf16.msra.mxu0 0
        %3366 = vmatpush.bf16.msra.mxu0 0
        %3367 = vmatpush.bf16.msra.mxu0 %v3346
        %3368 = vmatpush.bf16.msra.mxu0 %v3345
        %3369 = vmatpush.bf16.msra.mxu0 %v3344
        %3370 = vmatpush.bf16.msra.mxu0 %v3343
        %3371 = vmatmul.bf16.gmra.mxu0 %v3352
        %v3372 = vpop.f32.mrf.mxu0
        %v3373 = vadd.f32 0.0, %v3372
        %v3374 = vpop.f32.mrf.mxu0
        %v3375 = vadd.f32 0.0, %v3374
        %3376 = vmatmul.bf16.gmra.mxu0 %v3355
        %v3377 = vpop.f32.mrf.mxu0
        %v3378 = vadd.f32 0.0, %v3377
        %v3379 = vpop.f32.mrf.mxu0
        %v3380 = vadd.f32 0.0, %v3379
        %3381 = vmatmul.bf16.gmra.mxu0 %v3358
        %v3382 = vpop.f32.mrf.mxu0
        %v3383 = vadd.f32 0.0, %v3382
        %v3384 = vpop.f32.mrf.mxu0
        %v3385 = vadd.f32 0.0, %v3384
        %3386 = vmatmul.bf16.gmra.mxu0 %v3361
        %v3387 = vpop.f32.mrf.mxu0
        %v3388 = vadd.f32 0.0, %v3387
        %v3389 = vpop.f32.mrf.mxu0
        %v3390 = vadd.f32 0.0, %v3389
        %3391 = vdwg.mxu0
        %3400 = vrot.lane.b32.xlu0 %v2958, 34
        %v3401 = vpop.permute.xlu0 %3400
        %3402 = vrot.lane.b32.xlu0 %v2960, 34
        %v3403 = vpop.permute.xlu0 %3402
        %3404 = vrot.lane.b32.xlu0 %v2963, 34
        %v3405 = vpop.permute.xlu0 %3404
        %3406 = vrot.lane.b32.xlu0 %v2965, 34
        %v3407 = vpop.permute.xlu0 %3406
        %3408 = vrot.lane.b32.xlu0 %v2968, 34
        %v3409 = vpop.permute.xlu0 %3408
        %3410 = vrot.lane.b32.xlu0 %v2970, 34
        %v3411 = vpop.permute.xlu0 %3410
        %3412 = vrot.lane.b32.xlu0 %v2973, 34
        %v3413 = vpop.permute.xlu0 %3412
        %3414 = vrot.lane.b32.xlu0 %v2975, 34
        %v3415 = vpop.permute.xlu0 %3414
        %v3424 = vsel %vm2595, %v3373, %v3401
        %v3425 = vsel %vm2595, %v3375, %v3403
        %v3426 = vsel %vm2595, %v3378, %v3405
        %v3427 = vsel %vm2595, %v3380, %v3407
        %v3428 = vsel %vm2595, %v3383, %v3409
        %v3429 = vsel %vm2595, %v3385, %v3411
        %v3430 = vsel %vm2595, %v3388, %v3413
        %v3431 = vsel %vm2595, %v3390, %v3415
        %vm3432 = vcmask 539648
        %3433 = vst.msk [vmem:[%s475] sm:$0xff] %vm3432, %v3424
        %3434 = vst.msk [vmem:[%s475 + $0x8] sm:$0xff] %vm3432, %v3425
        %3435 = vst.msk [vmem:[%s475 + $0x10] sm:$0xff] %vm3432, %v3426
        %3436 = vst.msk [vmem:[%s475 + $0x18] sm:$0xff] %vm3432, %v3427
        %3437 = vst.msk [vmem:[%s475 + $0x20] sm:$0xff] %vm3432, %v3428
        %3438 = vst.msk [vmem:[%s475 + $0x28] sm:$0xff] %vm3432, %v3429
        %3439 = vst.msk [vmem:[%s475 + $0x30] sm:$0xff] %vm3432, %v3430
        %3440 = vst.msk [vmem:[%s475 + $0x38] sm:$0xff] %vm3432, %v3431
        %s3441 = sand.u32 %s340, 1
        %s3442 = scalar_lea.sflag [#allocation3], %s3441
        %s3443 = sand.u32 %s340, 1
        %s3444 = smul.addr %s3443, 64
        %s3445 = scalar_lea.vmem [#allocation2], %s3444
        // Predicated region
        $region77: #{tpu_custom_call.1} parent=75 // pred_check
          %p3446 = pneg %p350
        $region78: #{tpu_custom_call.1} parent=75 // pred_check_branch
          %3448 = sbr.rel (%p3446) target = $region80
        $region79: #{tpu_custom_call.1} parent=75 // pred_region
          %3450 = vsyncadd %s3442, 0
          %s3451 = smul.addr %s28, 8
          %s3452 = smul.addr %s3451, 8
          %s3453 = scalar_lea.hbm %s14, %s3452
          %s3454 = sshll.u32 %s3445, 4
          %s3455 = int_to_ptr.vmem [resolvable:$true] %s3454
          %s3456 = sshll.u32 %s3453, 4
          %s3457 = int_to_ptr.hbm [resolvable:$true] %s3456
          %3462 = dma.vmem_to_hbm [thread:$0]  %s3455, 1024, %s3457, %s3442, 128, 128, 8
        $region80: #{tpu_custom_call.1} parent=75 // pred_fallthru
          _
      $region76: #{tpu_custom_call.1} parent=5 // pred_fallthru
        _
      %p3463 = scmp.le.s32.totalorder 2, %s23
      // Predicated region
      $region81: #{tpu_custom_call.1} parent=5 // pred_check
        %p3464 = pneg %p3463
      $region82: #{tpu_custom_call.1} parent=5 // pred_check_branch
        %3466 = sbr.rel (%p3464) target = $region84
      $region83: #{tpu_custom_call.1} parent=5 // pred_region
        %s3467 = ssub.s32 %s23, 2
        // Predicated region
        $region85: #{tpu_custom_call.1} parent=83 // pred_check
          %p3468 = pneg %p356
        $region86: #{tpu_custom_call.1} parent=83 // pred_check_branch
          %3470 = sbr.rel (%p3468) target = $region88
        $region87: #{tpu_custom_call.1} parent=83 // pred_region
          %s3471 = sand.u32 %s341, 1
          %s3472 = scalar_lea.sflag [#allocation3], %s3471
          %s3473 = sand.u32 %s341, 1
          %s3474 = smul.addr %s3473, 64
          %s3475 = scalar_lea.vmem [#allocation2], %s3474
          %3477 = dma.done %s3472, 1024
        $region88: #{tpu_custom_call.1} parent=83 // pred_fallthru
          _
      $region84: #{tpu_custom_call.1} parent=5 // pred_fallthru
        _
    $region6: #{tpu_custom_call.1} parent=1 // loop_footer
      %s27 = sadd.s32 1, %s23
    $region7: #{tpu_custom_call.1} parent=1 // loop_footer_branch
      %22 = sbr.rel target = $region3
    $region8: #{tpu_custom_call.1} parent=1 // loop_exit
      _
    %3478 = vsyncpa [#allocation3], 1
    %s3479 = scalar_lea.sflag [#allocation3], 1
    %3480 = vsyncpa %s3479, 1

</llo_original>
